<compile_context>
chip_gen: v7x
topology: tpu7x:2x2x1
jax: 0.10.0
libtpu: 0.0.40
codegen_flags: <defaults>
</compile_context>

<pallas_src>
import functools

import jax
import jax.numpy as jnp
from jax import lax
from jax.experimental import pallas as pl
from jax.experimental.pallas import tpu as pltpu


_SQRT_HALF = 0.7071067811865476
_LANE = 128
_VMEM_LIMIT_BYTES = 32 * 1024 * 1024     # explicit scoped-VMEM request (all gens)
_TILE_BUDGET_BYTES = 20 * 1024 * 1024    # per-step working-set budget for tile sizing


def _round_up(x, m):
    return ((x + m - 1) // m) * m


# ----------------------------------------------------------------------------
# Kernel: grid = (token tiles, hidden chunks)
#   per step:  h = GELU(x_tile @ w1_chunk + b1_chunk)
#              acc += h @ w2_chunk
#   last chunk: out = acc + b2
# ----------------------------------------------------------------------------
def _mlp_kernel(x_ref, w1_ref, b1_ref, w2_ref, b2_ref, o_ref, acc_ref,
                *, approx_gelu):
    k = pl.program_id(1)

    @pl.when(k == 0)
    def _():
        acc_ref[...] = jnp.zeros_like(acc_ref)

    # x_ref / w1_ref / w2_ref are bf16; accumulate in f32 on the MXU.
    h = jnp.dot(x_ref[...], w1_ref[...], preferred_element_type=jnp.float32)
    h = h + b1_ref[...].astype(jnp.float32)          # (1, TH) broadcasts to (TM, TH)

    if approx_gelu:
        # tanh-based GELU -> EUP slot, overlaps with MXU work.
        h = jax.nn.gelu(h, approximate=True)
    else:
        # exact erf GELU (matches torch.nn.GELU default bit-for-bit semantics)
        h = 0.5 * h * (1.0 + lax.erf(h * jnp.float32(_SQRT_HALF)))

    acc_ref[...] += jnp.dot(h.astype(w2_ref.dtype), w2_ref[...],
                            preferred_element_type=jnp.float32)

    @pl.when(k == pl.num_programs(1) - 1)
    def _():
        o_ref[...] = (acc_ref[...] + b2_ref[...].astype(jnp.float32)).astype(o_ref.dtype)


# ----------------------------------------------------------------------------
# Tile selection: hidden chunk TH (multiple of 128 dividing Hdp), then the
# largest token tile TM whose double-buffered working set fits the budget.
# ----------------------------------------------------------------------------
def _choose_tiles(Cp, Hdp, out_bytes):
    TH = Hdp
    for t in (1536, 1280, 1024, 896, 768, 640, 512, 384, 256, 128):
        if t <= Hdp and Hdp % t == 0:
            TH = t
            break
    for TM in (512, 256, 128, 64, 32, 16, 8):
        ws = (2 * TM * Cp * 2             # bf16 x tile, double-buffered
              + 2 * TM * Cp * out_bytes   # output tile, double-buffered
              + TM * Cp * 4               # f32 accumulator scratch
              + TM * TH * 4               # f32 hidden intermediate
              + 2 * Cp * TH * 2           # bf16 fc1 weight chunk, double-buffered
              + 2 * TH * Cp * 2           # bf16 fc2 weight chunk, double-buffered
              + 2 * (TH + Cp) * 4)        # biases, double-buffered
        if ws <= _TILE_BUDGET_BYTES:
            return TM, TH
    return 8, TH


# ----------------------------------------------------------------------------
# One-time weight preparation: pad to lane-dense shapes, cast weights to bf16.
# ----------------------------------------------------------------------------
def prepare_params(params, *, matmul_dtype=jnp.bfloat16):
    w1, b1 = params["fc1_w"], params["fc1_b"]     # (C, Hd), (1, Hd)
    w2, b2 = params["fc2_w"], params["fc2_b"]     # (Hd, C), (1, C)
    C, Hd = w1.shape
    Cp, Hdp = _round_up(C, _LANE), _round_up(Hd, _LANE)
    w1p = jnp.pad(w1.astype(matmul_dtype), ((0, Cp - C), (0, Hdp - Hd)))
    w2p = jnp.pad(w2.astype(matmul_dtype), ((0, Hdp - Hd), (0, Cp - C)))
    b1p = jnp.pad(b1.astype(jnp.float32), ((0, 0), (0, Hdp - Hd)))
    b2p = jnp.pad(b2.astype(jnp.float32), ((0, 0), (0, Cp - C)))
    return {"fc1_w": w1p, "fc1_b": b1p, "fc2_w": w2p, "fc2_b": b2p}


# ----------------------------------------------------------------------------
# Wrapper: Mlp.forward(x, size) -> (net(x), size)
# ----------------------------------------------------------------------------
def mlp_forward(x, size, prepared, *, gelu_approximate=True):
    """x: (B, N, C); `prepared` comes from prepare_params (padded, bf16 weights)."""
    B, N, C = x.shape
    w1, b1 = prepared["fc1_w"], prepared["fc1_b"]
    w2, b2 = prepared["fc2_w"], prepared["fc2_b"]
    Cp, Hdp = w1.shape

    M = B * N
    out_bytes = jnp.dtype(x.dtype).itemsize
    TM, TH = _choose_tiles(Cp, Hdp, out_bytes)
    Mp = _round_up(M, TM)

    # one cast + pad of the activation in the wrapper (bf16 DMA, lane-dense C)
    xf = x.reshape(M, C).astype(w1.dtype)
    xp = jnp.pad(xf, ((0, Mp - M), (0, Cp - C)))

    kernel = functools.partial(_mlp_kernel, approx_gelu=gelu_approximate)
    out = pl.pallas_call(
        kernel,
        out_shape=jax.ShapeDtypeStruct((Mp, Cp), x.dtype),
        grid=(Mp // TM, Hdp // TH),
        in_specs=[
            pl.BlockSpec((TM, Cp), lambda i, k: (i, 0)),   # token tile (pipelined)
            pl.BlockSpec((Cp, TH), lambda i, k: (0, k)),   # fc1 weight chunk
            pl.BlockSpec((1, TH), lambda i, k: (0, k)),    # fc1 bias chunk
            pl.BlockSpec((TH, Cp), lambda i, k: (k, 0)),   # fc2 weight chunk
            pl.BlockSpec((1, Cp), lambda i, k: (0, 0)),    # fc2 bias
        ],
        out_specs=pl.BlockSpec((TM, Cp), lambda i, k: (i, 0)),
        scratch_shapes=[pltpu.VMEM((TM, Cp), jnp.float32)],
        compiler_params=pltpu.CompilerParams(
            dimension_semantics=("parallel", "arbitrary"),
            vmem_limit_bytes=_VMEM_LIMIT_BYTES),
    )(xp, w1, b1, w2, b2)

    return out[:M, :C].reshape(B, N, C), size


# ----------------------------------------------------------------------------
# Parameters + pure-JAX reference (exact erf GELU, like torch.nn.GELU default)
# ----------------------------------------------------------------------------
def init_params(key, dim, hidden):
    k1, k2, k3, k4 = jax.random.split(key, 4)
    s = 0.02
    f32 = jnp.float32
    return {
        "fc1_w": jax.random.normal(k1, (dim, hidden), f32) * s,
        "fc1_b": jax.random.normal(k2, (1, hidden), f32) * s,
        "fc2_w": jax.random.normal(k3, (hidden, dim), f32) * s,
        "fc2_b": jax.random.normal(k4, (1, dim), f32) * s,
    }


def mlp_reference(x, params):
    h = x @ params["fc1_w"] + params["fc1_b"][0]
    h = 0.5 * h * (1.0 + lax.erf(h * jnp.float32(_SQRT_HALF)))
    return h @ params["fc2_w"] + params["fc2_b"][0]


if __name__ == "__main__":
    key = jax.random.PRNGKey(0)
    B, H, W = 2, 32, 32              # size = (H, W), N = H*W tokens
    C, hidden = 96, 384              # DaViT stage-1 dims, mlp_ratio=4
    N = H * W

    k_x, k_p = jax.random.split(key)
    x = jax.random.normal(k_x, (B, N, C), jnp.float32)
    params = init_params(k_p, C, hidden)

    prepared = jax.tree_util.tree_map(jax.block_until_ready, prepare_params(params))

    fwd = jax.jit(functools.partial(mlp_forward, gelu_approximate=True),
                  static_argnums=(1,))
    out, size = fwd(x, (H, W), prepared)
    jax.block_until_ready(out)

    ref = mlp_reference(x, params)
    err = float(jnp.max(jnp.abs(out - ref)))
    assert out.shape == (B, N, C) and size == (H, W)
    # bf16 MXU operands + tanh-approx GELU vs f32 / exact-erf reference
    assert err < 2e-2, f"max abs error too large: {err}"
    print("KERNEL_OK")
</pallas_src>

<mosaic_0001>
module attributes {stable_mosaic.version = 11 : i64} {
  func.func @_mlp_kernel(%arg0: i32, %arg1: i32, %arg2: memref<512x128xbf16, #tpu.memory_space<vmem>>, %arg3: memref<128x384xbf16, #tpu.memory_space<vmem>>, %arg4: memref<1x384xf32, #tpu.memory_space<vmem>>, %arg5: memref<384x128xbf16, #tpu.memory_space<vmem>>, %arg6: memref<1x128xf32, #tpu.memory_space<vmem>>, %arg7: memref<512x128xf32, #tpu.memory_space<vmem>>, %arg8: memref<512x128xf32, #tpu.memory_space<vmem>>) attributes {dimension_semantics = [#tpu.dimension_semantics<parallel>, #tpu.dimension_semantics<arbitrary>], iteration_bounds = array<i64: 4, 1>, scalar_prefetch = 0 : i64, scratch_operands = 1 : i64, tpu.core_type = #tpu.core_type<tc>, window_params = [{transform_indices = @transform_0, window_bounds = array<i64: 512, 128>}, {transform_indices = @transform_1, window_bounds = array<i64: 128, 384>}, {transform_indices = @transform_2, window_bounds = array<i64: 1, 384>}, {transform_indices = @transform_3, window_bounds = array<i64: 384, 128>}, {pipeline_mode = #tpu.pipeline_mode<synchronous>, transform_indices = @transform_4, window_bounds = array<i64: 1, 128>}, {transform_indices = @transform_5, window_bounds = array<i64: 512, 128>}]} {
    %c0_i32 = arith.constant 0 : i32
    %0 = arith.cmpi eq, %arg1, %c0_i32 : i32
    %1 = arith.extui %0 : i1 to i32
    %c0_i32_0 = arith.constant 0 : i32
    %2 = arith.cmpi ne, %1, %c0_i32_0 : i32
    scf.if %2 {
      %cst_19 = arith.constant 0.000000e+00 : f32
      %31 = vector.broadcast %cst_19 : f32 to vector<512x128xf32>
      %c0_20 = arith.constant 0 : index
      %c0_21 = arith.constant 0 : index
      %32 = vector.load %arg8[%c0_20, %c0_21] : memref<512x128xf32, #tpu.memory_space<vmem>>, vector<512x128xf32>
      tpu.vector_store %arg8[%c0_20, %c0_21], %31 {strides = array<i32>} : memref<512x128xf32, #tpu.memory_space<vmem>>, vector<512x128xf32>,
    } else {
    }
    %c0 = arith.constant 0 : index
    %c0_1 = arith.constant 0 : index
    %3 = vector.load %arg2[%c0, %c0_1] : memref<512x128xbf16, #tpu.memory_space<vmem>>, vector<512x128xbf16>
    %c0_2 = arith.constant 0 : index
    %c0_3 = arith.constant 0 : index
    %4 = vector.load %arg3[%c0_2, %c0_3] : memref<128x384xbf16, #tpu.memory_space<vmem>>, vector<128x384xbf16>
    %cst = arith.constant dense<0.000000e+00> : vector<512x384xf32>
    %5 = tpu.matmul %3, %4, %cst {dimension_numbers = #tpu.dot_dimension_numbers<[1], [0], [0], [1], [0, 0, 1, 1], [], []>} : vector<512x128xbf16>, vector<128x384xbf16>, vector<512x384xf32> -> vector<512x384xf32>
    %c0_4 = arith.constant 0 : index
    %c0_5 = arith.constant 0 : index
    %6 = vector.load %arg4[%c0_4, %c0_5] : memref<1x384xf32, #tpu.memory_space<vmem>>, vector<1x384xf32>
    %7 = vector.broadcast %6 : vector<1x384xf32> to vector<512x384xf32>
    %8 = arith.addf %5, %7 : vector<512x384xf32>
    %9 = arith.mulf %8, %8 : vector<512x384xf32>
    %10 = arith.mulf %8, %9 : vector<512x384xf32>
    %cst_6 = arith.constant 4.471500e-02 : f32
    %11 = vector.broadcast %cst_6 : f32 to vector<512x384xf32>
    %12 = arith.mulf %11, %10 : vector<512x384xf32>
    %13 = arith.addf %8, %12 : vector<512x384xf32>
    %cst_7 = arith.constant 0.797884583 : f32
    %14 = vector.broadcast %cst_7 : f32 to vector<512x384xf32>
    %15 = arith.mulf %14, %13 : vector<512x384xf32>
    %16 = math.tanh %15 : vector<512x384xf32>
    %cst_8 = arith.constant 1.000000e+00 : f32
    %17 = vector.broadcast %cst_8 : f32 to vector<512x384xf32>
    %18 = arith.addf %17, %16 : vector<512x384xf32>
    %cst_9 = arith.constant 5.000000e-01 : f32
    %19 = vector.broadcast %cst_9 : f32 to vector<512x384xf32>
    %20 = arith.mulf %19, %18 : vector<512x384xf32>
    %21 = arith.mulf %8, %20 : vector<512x384xf32>
    %c0_10 = arith.constant 0 : index
    %c0_11 = arith.constant 0 : index
    %22 = vector.load %arg8[%c0_10, %c0_11] : memref<512x128xf32, #tpu.memory_space<vmem>>, vector<512x128xf32>
    %23 = arith.truncf %21 : vector<512x384xf32> to vector<512x384xbf16>
    %c0_12 = arith.constant 0 : index
    %c0_13 = arith.constant 0 : index
    %24 = vector.load %arg5[%c0_12, %c0_13] : memref<384x128xbf16, #tpu.memory_space<vmem>>, vector<384x128xbf16>
    %cst_14 = arith.constant dense<0.000000e+00> : vector<512x128xf32>
    %25 = tpu.matmul %23, %24, %cst_14 {dimension_numbers = #tpu.dot_dimension_numbers<[1], [0], [0], [1], [0, 0, 1, 1], [], []>} : vector<512x384xbf16>, vector<384x128xbf16>, vector<512x128xf32> -> vector<512x128xf32>
    %26 = arith.addf %22, %25 : vector<512x128xf32>
    %c0_15 = arith.constant 0 : index
    %c0_16 = arith.constant 0 : index
    %27 = vector.load %arg8[%c0_15, %c0_16] : memref<512x128xf32, #tpu.memory_space<vmem>>, vector<512x128xf32>
    tpu.vector_store %arg8[%c0_15, %c0_16], %26 {strides = array<i32>} : memref<512x128xf32, #tpu.memory_space<vmem>>, vector<512x128xf32>,
    %c0_i32_17 = arith.constant 0 : i32
    %28 = arith.cmpi eq, %arg1, %c0_i32_17 : i32
    %29 = arith.extui %28 : i1 to i32
    %c0_i32_18 = arith.constant 0 : i32
    %30 = arith.cmpi ne, %29, %c0_i32_18 : i32
    scf.if %30 {
      %c0_19 = arith.constant 0 : index
      %c0_20 = arith.constant 0 : index
      %31 = vector.load %arg8[%c0_19, %c0_20] : memref<512x128xf32, #tpu.memory_space<vmem>>, vector<512x128xf32>
      %c0_21 = arith.constant 0 : index
      %c0_22 = arith.constant 0 : index
      %32 = vector.load %arg6[%c0_21, %c0_22] : memref<1x128xf32, #tpu.memory_space<vmem>>, vector<1x128xf32>
      %33 = vector.broadcast %32 : vector<1x128xf32> to vector<512x128xf32>
      %34 = arith.addf %31, %33 : vector<512x128xf32>
      %c0_23 = arith.constant 0 : index
      %c0_24 = arith.constant 0 : index
      %35 = vector.load %arg7[%c0_23, %c0_24] : memref<512x128xf32, #tpu.memory_space<vmem>>, vector<512x128xf32>
      tpu.vector_store %arg7[%c0_23, %c0_24], %34 {strides = array<i32>} : memref<512x128xf32, #tpu.memory_space<vmem>>, vector<512x128xf32>,
    } else {
    }
    return
  }
  func.func @transform_0(%arg0: i32, %arg1: i32) -> (i32, i32) {
    %c0_i32 = arith.constant 0 : i32
    %c0_i32_0 = arith.constant 0 : i32
    return %arg0, %c0_i32 : i32, i32
  }
  func.func @transform_1(%arg0: i32, %arg1: i32) -> (i32, i32) {
    %c0_i32 = arith.constant 0 : i32
    %c0_i32_0 = arith.constant 0 : i32
    return %c0_i32, %arg1 : i32, i32
  }
  func.func @transform_2(%arg0: i32, %arg1: i32) -> (i32, i32) {
    %c0_i32 = arith.constant 0 : i32
    %c0_i32_0 = arith.constant 0 : i32
    return %c0_i32, %arg1 : i32, i32
  }
  func.func @transform_3(%arg0: i32, %arg1: i32) -> (i32, i32) {
    %c0_i32 = arith.constant 0 : i32
    %c0_i32_0 = arith.constant 0 : i32
    return %arg1, %c0_i32 : i32, i32
  }
  func.func @transform_4(%arg0: i32, %arg1: i32) -> (i32, i32) {
    %c0_i32 = arith.constant 0 : i32
    %c0_i32_0 = arith.constant 0 : i32
    %c0_i32_1 = arith.constant 0 : i32
    return %c0_i32, %c0_i32_0 : i32, i32
  }
  func.func @transform_5(%arg0: i32, %arg1: i32) -> (i32, i32) {
    %c0_i32 = arith.constant 0 : i32
    %c0_i32_0 = arith.constant 0 : i32
    return %arg0, %c0_i32 : i32, i32
  }
}

</mosaic_0001>

<llo_original>
// kernel: mlp_forward.1
$region0: #{mlp_forward.1}
  #allocation0 [shape = 'u32[]', space=smem, size = 0x4, offset = 0x4, fixed_abs, tag = 'smem constant byte address 0x4 - core index']
  #allocation1 [shape = 'u32[144,128]{1,0:T(1,128)}', space=vmem, size = 0x12000, scoped, tag = 'internal scratch']
  #allocation2 [shape = 'f32[512,128]{1,0:T(8,128)}', space=vmem, size = 0x40000, scoped, tag = 'scratch operand']
  %s0 = inlined_call_operand.vmem [shape: bf16[2048,128], index: 0, kind: input, shape index: {}]
  %s1 = inlined_call_operand.vmem [shape: bf16[128,384], index: 1, kind: input, shape index: {}]
  %s2 = inlined_call_operand.vmem [shape: f32[1,384], index: 2, kind: input, shape index: {}]
  %s3 = inlined_call_operand.vmem [shape: bf16[384,128], index: 3, kind: input, shape index: {}]
  %s4 = inlined_call_operand.vmem [shape: f32[1,128], index: 4, kind: input, shape index: {}]
  %s5 = inlined_call_operand.vmem [shape: f32[2048,128], index: 5, kind: output, shape index: {}]
  %s6 = sld [smem:[#allocation0]]
  $region61: #{mlp_forward.1} parent=0
    _
  %s8 = ssub.s32 1, %s6
  %s9 = scalar_select 0, %s8, %s6
  loop: start=0, step=1, limit=6
  $region2: #{mlp_forward.1} parent=0 // loop_pre_header
    _
  $region3: #{mlp_forward.1} parent=0 // loop_header
    %s11 = sphi 0, %s15
    %p12 = scmp.ge.s32.totalorder %s11, 6
    %s18 = sphi 0, %s30
    %s19 = sphi 0, %s26
    %s20 = sphi 0, %s18
    %s21 = sphi 0, %s19
    %s22 = sphi 0, %s20
    %s23 = sphi 0, %s21
    %s33 = sphi 0, %s35
    %s36 = sphi 0, %s33
    %s37 = sphi 0, %s36
    %s53 = sphi 0, %s37
    %s59 = sphi 0, %s61
    %s62 = sphi 0, %s59
    %s63 = sphi 0, %s62
    %s79 = sphi 0, %s63
    %s85 = sphi 0, %s87
    %s88 = sphi 0, %s85
    %s89 = sphi 0, %s88
    %s105 = sphi 0, %s89
    %s111 = sphi 0, %s113
    %s114 = sphi 0, %s111
    %s115 = sphi 0, %s114
    %s131 = sphi 0, %s115
    %s135 = sphi 0, %s135
    %s137 = sphi 0, %s135
    %s138 = sphi 0, %s137
    %s152 = sphi 0, %s138
    %s158 = sphi 0, %s160
    %s161 = sphi 0, %s158
    %s162 = sphi 0, %s161
    %s178 = sphi 0, %s162
  $region4: #{mlp_forward.1} parent=0 // loop_header_branch
    %14 = sbr.rel (%p12) target = $region8
  $region5: #{mlp_forward.1} parent=0 // loop_body
    %s16 = ssub.s32 %s11, 1
    %s17 = ssub.s32 %s11, 2
    %s24 = sadd.s32 1, %s19
    %p25 = scmp.ge.s32.totalorder %s24, 1
    %s26 = scalar_select %p25, 0, %s24
    %s27 = sadd.s32 1, %s18
    %s28 = scalar_select %p25, %s27, %s18
    %p29 = scmp.ge.s32.totalorder %s28, 4
    %s30 = scalar_select %p29, 0, %s28
    %s31 = ssub.s32 %s18, %s30
    %p32 = scmp.eq.s32.totalorder %s31, 0
    %s34 = sadd.s32 %s33, 1
    %s35 = scalar_select %p32, %s33, %s34
    %p38 = pneg %p32
    %p39 = scmp.eq.s32.totalorder %s11, 3
    %p40 = por %p38, %p39
    %p41 = scmp.ne.s32.totalorder %s33, %s36
    %p42 = scmp.eq.s32.totalorder %s11, 0
    %p43 = por %p41, %p42
    %p44 = scmp.ne.s32.totalorder %s33, %s36
    %p45 = scmp.eq.s32.totalorder %s16, 3
    %p46 = por %p44, %p45
    %p47 = scmp.ne.s32.totalorder %s36, %s37
    %p48 = scmp.eq.s32.totalorder %s16, 0
    %p49 = por %p47, %p48
    %p50 = scmp.ne.s32.totalorder %s36, %s37
    %p51 = scmp.eq.s32.totalorder %s17, 3
    %p52 = por %p50, %p51
    %p54 = scmp.ne.s32.totalorder %s37, %s53
    %p55 = scmp.eq.s32.totalorder %s17, 0
    %p56 = por %p54, %p55
    %s57 = ssub.s32 %s19, %s26
    %p58 = scmp.eq.s32.totalorder %s57, 0
    %s60 = sadd.s32 %s59, 1
    %s61 = scalar_select %p58, %s59, %s60
    %p64 = pneg %p58
    %p65 = scmp.eq.s32.totalorder %s11, 3
    %p66 = por %p64, %p65
    %p67 = scmp.ne.s32.totalorder %s59, %s62
    %p68 = scmp.eq.s32.totalorder %s11, 0
    %p69 = por %p67, %p68
    %p70 = scmp.ne.s32.totalorder %s59, %s62
    %p71 = scmp.eq.s32.totalorder %s16, 3
    %p72 = por %p70, %p71
    %p73 = scmp.ne.s32.totalorder %s62, %s63
    %p74 = scmp.eq.s32.totalorder %s16, 0
    %p75 = por %p73, %p74
    %p76 = scmp.ne.s32.totalorder %s62, %s63
    %p77 = scmp.eq.s32.totalorder %s17, 3
    %p78 = por %p76, %p77
    %p80 = scmp.ne.s32.totalorder %s63, %s79
    %p81 = scmp.eq.s32.totalorder %s17, 0
    %p82 = por %p80, %p81
    %s83 = ssub.s32 %s19, %s26
    %p84 = scmp.eq.s32.totalorder %s83, 0
    %s86 = sadd.s32 %s85, 1
    %s87 = scalar_select %p84, %s85, %s86
    %p90 = pneg %p84
    %p91 = scmp.eq.s32.totalorder %s11, 3
    %p92 = por %p90, %p91
    %p93 = scmp.ne.s32.totalorder %s85, %s88
    %p94 = scmp.eq.s32.totalorder %s11, 0
    %p95 = por %p93, %p94
    %p96 = scmp.ne.s32.totalorder %s85, %s88
    %p97 = scmp.eq.s32.totalorder %s16, 3
    %p98 = por %p96, %p97
    %p99 = scmp.ne.s32.totalorder %s88, %s89
    %p100 = scmp.eq.s32.totalorder %s16, 0
    %p101 = por %p99, %p100
    %p102 = scmp.ne.s32.totalorder %s88, %s89
    %p103 = scmp.eq.s32.totalorder %s17, 3
    %p104 = por %p102, %p103
    %p106 = scmp.ne.s32.totalorder %s89, %s105
    %p107 = scmp.eq.s32.totalorder %s17, 0
    %p108 = por %p106, %p107
    %s109 = ssub.s32 %s19, %s26
    %p110 = scmp.eq.s32.totalorder %s109, 0
    %s112 = sadd.s32 %s111, 1
    %s113 = scalar_select %p110, %s111, %s112
    %p116 = pneg %p110
    %p117 = scmp.eq.s32.totalorder %s11, 3
    %p118 = por %p116, %p117
    %p119 = scmp.ne.s32.totalorder %s111, %s114
    %p120 = scmp.eq.s32.totalorder %s11, 0
    %p121 = por %p119, %p120
    %p122 = scmp.ne.s32.totalorder %s111, %s114
    %p123 = scmp.eq.s32.totalorder %s16, 3
    %p124 = por %p122, %p123
    %p125 = scmp.ne.s32.totalorder %s114, %s115
    %p126 = scmp.eq.s32.totalorder %s16, 0
    %p127 = por %p125, %p126
    %p128 = scmp.ne.s32.totalorder %s114, %s115
    %p129 = scmp.eq.s32.totalorder %s17, 3
    %p130 = por %p128, %p129
    %p132 = scmp.ne.s32.totalorder %s115, %s131
    %p133 = scmp.eq.s32.totalorder %s17, 0
    %p134 = por %p132, %p133
    %s136 = sadd.s32 %s135, 1
    %p139 = scmp.eq.s32.totalorder %s11, 3
    %p140 = scmp.ne.s32.totalorder %s135, %s137
    %p141 = scmp.eq.s32.totalorder %s11, 0
    %p142 = por %p140, %p141
    %p143 = scmp.ne.s32.totalorder %s135, %s137
    %p144 = scmp.eq.s32.totalorder %s16, 3
    %p145 = por %p143, %p144
    %p146 = scmp.ne.s32.totalorder %s137, %s138
    %p147 = scmp.eq.s32.totalorder %s16, 0
    %p148 = por %p146, %p147
    %p149 = scmp.ne.s32.totalorder %s137, %s138
    %p150 = scmp.eq.s32.totalorder %s17, 3
    %p151 = por %p149, %p150
    %p153 = scmp.ne.s32.totalorder %s138, %s152
    %p154 = scmp.eq.s32.totalorder %s17, 0
    %p155 = por %p153, %p154
    %s156 = ssub.s32 %s18, %s30
    %p157 = scmp.eq.s32.totalorder %s156, 0
    %s159 = sadd.s32 %s158, 1
    %s160 = scalar_select %p157, %s158, %s159
    %p163 = pneg %p157
    %p164 = scmp.eq.s32.totalorder %s11, 3
    %p165 = por %p163, %p164
    %p166 = scmp.ne.s32.totalorder %s158, %s161
    %p167 = scmp.eq.s32.totalorder %s11, 0
    %p168 = por %p166, %p167
    %p169 = scmp.ne.s32.totalorder %s158, %s161
    %p170 = scmp.eq.s32.totalorder %s16, 3
    %p171 = por %p169, %p170
    %p172 = scmp.ne.s32.totalorder %s161, %s162
    %p173 = scmp.eq.s32.totalorder %s16, 0
    %p174 = por %p172, %p173
    %p175 = scmp.ne.s32.totalorder %s161, %s162
    %p176 = scmp.eq.s32.totalorder %s17, 3
    %p177 = por %p175, %p176
    %p179 = scmp.ne.s32.totalorder %s162, %s178
    %p180 = scmp.eq.s32.totalorder %s17, 0
    %p181 = por %p179, %p180
    %p182 = scmp.le.s32.totalorder 1, %s11
    %p183 = scmp.lt.s32.totalorder %s11, 5
    %p184 = pnand %p182, %p183
    %p185 = pneg %p184
    // Predicated region
    $region9: #{mlp_forward.1} parent=5 // pred_check
      _
    $region10: #{mlp_forward.1} parent=5 // pred_check_branch
      %187 = sbr.rel (%p184) target = $region12
    $region11: #{mlp_forward.1} parent=5 // pred_region
      %s188 = ssub.s32 %s11, 1
      // Predicated region
      $region13: #{mlp_forward.1} parent=11 // pred_check
        %p189 = pneg %p75
      $region14: #{mlp_forward.1} parent=11 // pred_check_branch
        %191 = sbr.rel (%p189) target = $region16
      $region15: #{mlp_forward.1} parent=11 // pred_region
        %s192 = smul.u32 3, %s21
        %p193 = scmp.lt.s32.totalorder %s192, 2
        %s194 = scalar_select %p193, %s192, 2
        %s195 = smul.addr %s194, 4
        %s196 = scalar_lea.vmem %s1, %s195
        %s197 = smul.u32 3, %s21
      $region16: #{mlp_forward.1} parent=11 // pred_fallthru
        _
      // Predicated region
      $region17: #{mlp_forward.1} parent=11 // pred_check
        %p198 = pneg %p101
      $region18: #{mlp_forward.1} parent=11 // pred_check_branch
        %200 = sbr.rel (%p198) target = $region20
      $region19: #{mlp_forward.1} parent=11 // pred_region
        %s201 = smul.u32 3, %s21
        %p202 = scmp.lt.s32.totalorder %s201, 2
        %s203 = scalar_select %p202, %s201, 2
        %s204 = scalar_lea.vmem %s2, %s203
        %s205 = smul.u32 3, %s21
      $region20: #{mlp_forward.1} parent=11 // pred_fallthru
        _
      // Predicated region
      $region21: #{mlp_forward.1} parent=11 // pred_check
        %p206 = pneg %p127
      $region22: #{mlp_forward.1} parent=11 // pred_check_branch
        %208 = sbr.rel (%p206) target = $region24
      $region23: #{mlp_forward.1} parent=11 // pred_region
        %s209 = smul.u32 48, %s21
        %p210 = scmp.lt.s32.totalorder %s209, 47
        %s211 = scalar_select %p210, %s209, 47
        %s212 = smul.addr %s211, 4
        %s213 = scalar_lea.vmem %s3, %s212
        %s214 = smul.u32 48, %s21
      $region24: #{mlp_forward.1} parent=11 // pred_fallthru
        _
      // Predicated region
      $region25: #{mlp_forward.1} parent=11 // pred_check
        %p215 = pneg %p148
      $region26: #{mlp_forward.1} parent=11 // pred_check_branch
        %217 = sbr.rel (%p215) target = $region28
      $region27: #{mlp_forward.1} parent=11 // pred_region
        _
      $region28: #{mlp_forward.1} parent=11 // pred_fallthru
        _
    $region12: #{mlp_forward.1} parent=5 // pred_fallthru
      _
    %p218 = scmp.lt.s32.totalorder %s11, 4
    // Predicated region
    $region29: #{mlp_forward.1} parent=5 // pred_check
      %p219 = pneg %p218
    $region30: #{mlp_forward.1} parent=5 // pred_check_branch
      %221 = sbr.rel (%p219) target = $region32
    $region31: #{mlp_forward.1} parent=5 // pred_region
      // Predicated region
      $region33: #{mlp_forward.1} parent=31 // pred_check
        %p222 = pneg %p43
      $region34: #{mlp_forward.1} parent=31 // pred_check_branch
        %224 = sbr.rel (%p222) target = $region36
      $region35: #{mlp_forward.1} parent=31 // pred_region
        %s225 = smul.u32 64, %s18
        %p226 = scmp.lt.s32.totalorder %s225, 255
        %s227 = scalar_select %p226, %s225, 255
        %s228 = smul.addr %s227, 4
        %s229 = scalar_lea.vmem %s0, %s228
        %s230 = smul.u32 64, %s18
      $region36: #{mlp_forward.1} parent=31 // pred_fallthru
        _
    $region32: #{mlp_forward.1} parent=5 // pred_fallthru
      _
    %p231 = scmp.le.s32.totalorder 1, %s11
    %p232 = scmp.lt.s32.totalorder %s11, 5
    %p233 = pnand %p231, %p232
    %p234 = pneg %p233
    // Predicated region
    $region37: #{mlp_forward.1} parent=5 // pred_check
      _
    $region38: #{mlp_forward.1} parent=5 // pred_check_branch
      %236 = sbr.rel (%p233) target = $region40
    $region39: #{mlp_forward.1} parent=5 // pred_region
      %s237 = ssub.s32 %s11, 1
      %s238 = smul.u32 64, %s20
      %p239 = scmp.lt.s32.totalorder %s238, 255
      %s240 = scalar_select %p239, %s238, 255
      %s241 = smul.addr %s240, 4
      %s242 = scalar_lea.vmem %s0, %s241
      %p243 = pneg %p49
      %p244 = pneg %p46
      %s245 = smul.u32 3, %s21
      %p246 = scmp.lt.s32.totalorder %s245, 2
      %s247 = scalar_select %p246, %s245, 2
      %s248 = smul.addr %s247, 4
      %s249 = scalar_lea.vmem %s1, %s248
      %p250 = pneg %p75
      %p251 = pneg %p72
      %s252 = smul.u32 3, %s21
      %p253 = scmp.lt.s32.totalorder %s252, 2
      %s254 = scalar_select %p253, %s252, 2
      %s255 = scalar_lea.vmem %s2, %s254
      %p256 = pneg %p101
      %p257 = pneg %p98
      %s258 = smul.u32 48, %s21
      %p259 = scmp.lt.s32.totalorder %s258, 47
      %s260 = scalar_select %p259, %s258, 47
      %s261 = smul.addr %s260, 4
      %s262 = scalar_lea.vmem %s3, %s261
      %p263 = pneg %p127
      %p264 = pneg %p124
      %p265 = pneg %p148
      %p266 = pneg %p145
      %p267 = pneg %p174
      %p268 = pneg %p171
      %s269 = smul.u32 64, %s20
      %p270 = scmp.lt.s32.totalorder %s269, 255
      %s271 = scalar_select %p270, %s269, 255
      %s272 = smul.addr %s271, 8
      %s273 = scalar_lea.vmem %s5, %s272
      %s274 = smul.u32 64, %s20
      %p275 = scmp.lt.s32.totalorder %s274, 255
      %s276 = scalar_select %p275, %s274, 255
      %s277 = smul.addr %s276, 4
      %s278 = scalar_lea.vmem %s0, %s277
      %s279 = smul.u32 64, %s20
      %s280 = smul.u32 3, %s21
      %p281 = scmp.lt.s32.totalorder %s280, 2
      %s282 = scalar_select %p281, %s280, 2
      %s283 = smul.addr %s282, 4
      %s284 = scalar_lea.vmem %s1, %s283
      %s285 = smul.u32 3, %s21
      %s286 = smul.u32 3, %s21
      %p287 = scmp.lt.s32.totalorder %s286, 2
      %s288 = scalar_select %p287, %s286, 2
      %s289 = scalar_lea.vmem %s2, %s288
      %s290 = smul.u32 3, %s21
      %s291 = smul.u32 48, %s21
      %p292 = scmp.lt.s32.totalorder %s291, 47
      %s293 = scalar_select %p292, %s291, 47
      %s294 = smul.addr %s293, 4
      %s295 = scalar_lea.vmem %s3, %s294
      %s296 = smul.u32 48, %s21
      %s297 = smul.u32 64, %s20
      %p298 = scmp.lt.s32.totalorder %s297, 255
      %s299 = scalar_select %p298, %s297, 255
      %s300 = smul.addr %s299, 8
      %s301 = scalar_lea.vmem %s5, %s300
      %s302 = smul.u32 64, %s20
      %p304 = scmp.eq.s32.totalorder %s21, 0
      // Predicated region
      $region41: #{mlp_forward.1} parent=39 // pred_check
        %p305 = pneg %p304
      $region42: #{mlp_forward.1} parent=39 // pred_check_branch
        %307 = sbr.rel (%p305) target = $region44
      $region43: #{mlp_forward.1} parent=39 // pred_region
        %308 = vst [vmem:[#allocation2] sm:$0xff] 0.0
        %309 = vst [vmem:[#allocation2 + $0x8] sm:$0xff] 0.0
        %310 = vst [vmem:[#allocation2 + $0x10] sm:$0xff] 0.0
        %311 = vst [vmem:[#allocation2 + $0x18] sm:$0xff] 0.0
        %312 = vst [vmem:[#allocation2 + $0x20] sm:$0xff] 0.0
        %313 = vst [vmem:[#allocation2 + $0x28] sm:$0xff] 0.0
        %314 = vst [vmem:[#allocation2 + $0x30] sm:$0xff] 0.0
        %315 = vst [vmem:[#allocation2 + $0x38] sm:$0xff] 0.0
        %316 = vst [vmem:[#allocation2 + $0x40] sm:$0xff] 0.0
        %317 = vst [vmem:[#allocation2 + $0x48] sm:$0xff] 0.0
        %318 = vst [vmem:[#allocation2 + $0x50] sm:$0xff] 0.0
        %319 = vst [vmem:[#allocation2 + $0x58] sm:$0xff] 0.0
        %320 = vst [vmem:[#allocation2 + $0x60] sm:$0xff] 0.0
        %321 = vst [vmem:[#allocation2 + $0x68] sm:$0xff] 0.0
        %322 = vst [vmem:[#allocation2 + $0x70] sm:$0xff] 0.0
        %323 = vst [vmem:[#allocation2 + $0x78] sm:$0xff] 0.0
        %324 = vst [vmem:[#allocation2 + $0x80] sm:$0xff] 0.0
        %325 = vst [vmem:[#allocation2 + $0x88] sm:$0xff] 0.0
        %326 = vst [vmem:[#allocation2 + $0x90] sm:$0xff] 0.0
        %327 = vst [vmem:[#allocation2 + $0x98] sm:$0xff] 0.0
        %328 = vst [vmem:[#allocation2 + $0xa0] sm:$0xff] 0.0
        %329 = vst [vmem:[#allocation2 + $0xa8] sm:$0xff] 0.0
        %330 = vst [vmem:[#allocation2 + $0xb0] sm:$0xff] 0.0
        %331 = vst [vmem:[#allocation2 + $0xb8] sm:$0xff] 0.0
        %332 = vst [vmem:[#allocation2 + $0xc0] sm:$0xff] 0.0
        %333 = vst [vmem:[#allocation2 + $0xc8] sm:$0xff] 0.0
        %334 = vst [vmem:[#allocation2 + $0xd0] sm:$0xff] 0.0
        %335 = vst [vmem:[#allocation2 + $0xd8] sm:$0xff] 0.0
        %336 = vst [vmem:[#allocation2 + $0xe0] sm:$0xff] 0.0
        %337 = vst [vmem:[#allocation2 + $0xe8] sm:$0xff] 0.0
        %338 = vst [vmem:[#allocation2 + $0xf0] sm:$0xff] 0.0
        %339 = vst [vmem:[#allocation2 + $0xf8] sm:$0xff] 0.0
        %340 = vst [vmem:[#allocation2 + $0x100] sm:$0xff] 0.0
        %341 = vst [vmem:[#allocation2 + $0x108] sm:$0xff] 0.0
        %342 = vst [vmem:[#allocation2 + $0x110] sm:$0xff] 0.0
        %343 = vst [vmem:[#allocation2 + $0x118] sm:$0xff] 0.0
        %344 = vst [vmem:[#allocation2 + $0x120] sm:$0xff] 0.0
        %345 = vst [vmem:[#allocation2 + $0x128] sm:$0xff] 0.0
        %346 = vst [vmem:[#allocation2 + $0x130] sm:$0xff] 0.0
        %347 = vst [vmem:[#allocation2 + $0x138] sm:$0xff] 0.0
        %348 = vst [vmem:[#allocation2 + $0x140] sm:$0xff] 0.0
        %349 = vst [vmem:[#allocation2 + $0x148] sm:$0xff] 0.0
        %350 = vst [vmem:[#allocation2 + $0x150] sm:$0xff] 0.0
        %351 = vst [vmem:[#allocation2 + $0x158] sm:$0xff] 0.0
        %352 = vst [vmem:[#allocation2 + $0x160] sm:$0xff] 0.0
        %353 = vst [vmem:[#allocation2 + $0x168] sm:$0xff] 0.0
        %354 = vst [vmem:[#allocation2 + $0x170] sm:$0xff] 0.0
        %355 = vst [vmem:[#allocation2 + $0x178] sm:$0xff] 0.0
        %356 = vst [vmem:[#allocation2 + $0x180] sm:$0xff] 0.0
        %357 = vst [vmem:[#allocation2 + $0x188] sm:$0xff] 0.0
        %358 = vst [vmem:[#allocation2 + $0x190] sm:$0xff] 0.0
        %359 = vst [vmem:[#allocation2 + $0x198] sm:$0xff] 0.0
        %360 = vst [vmem:[#allocation2 + $0x1a0] sm:$0xff] 0.0
        %361 = vst [vmem:[#allocation2 + $0x1a8] sm:$0xff] 0.0
        %362 = vst [vmem:[#allocation2 + $0x1b0] sm:$0xff] 0.0
        %363 = vst [vmem:[#allocation2 + $0x1b8] sm:$0xff] 0.0
        %364 = vst [vmem:[#allocation2 + $0x1c0] sm:$0xff] 0.0
        %365 = vst [vmem:[#allocation2 + $0x1c8] sm:$0xff] 0.0
        %366 = vst [vmem:[#allocation2 + $0x1d0] sm:$0xff] 0.0
        %367 = vst [vmem:[#allocation2 + $0x1d8] sm:$0xff] 0.0
        %368 = vst [vmem:[#allocation2 + $0x1e0] sm:$0xff] 0.0
        %369 = vst [vmem:[#allocation2 + $0x1e8] sm:$0xff] 0.0
        %370 = vst [vmem:[#allocation2 + $0x1f0] sm:$0xff] 0.0
        %371 = vst [vmem:[#allocation2 + $0x1f8] sm:$0xff] 0.0
      $region44: #{mlp_forward.1} parent=39 // pred_fallthru
        _
      %v372 = vld [vmem:[%s278] sm:$0xf]
      %v373 = vld [vmem:[%s278 + $0x4] sm:$0xf]
      %v374 = vld [vmem:[%s278 + $0x8] sm:$0xf]
      %v375 = vld [vmem:[%s278 + $0xc] sm:$0xf]
      %v376 = vld [vmem:[%s278 + $0x10] sm:$0xf]
      %v377 = vld [vmem:[%s278 + $0x14] sm:$0xf]
      %v378 = vld [vmem:[%s278 + $0x18] sm:$0xf]
      %v379 = vld [vmem:[%s278 + $0x1c] sm:$0xf]
      %v380 = vld [vmem:[%s278 + $0x20] sm:$0xf]
      %v381 = vld [vmem:[%s278 + $0x24] sm:$0xf]
      %v382 = vld [vmem:[%s278 + $0x28] sm:$0xf]
      %v383 = vld [vmem:[%s278 + $0x2c] sm:$0xf]
      %v384 = vld [vmem:[%s278 + $0x30] sm:$0xf]
      %v385 = vld [vmem:[%s278 + $0x34] sm:$0xf]
      %v386 = vld [vmem:[%s278 + $0x38] sm:$0xf]
      %v387 = vld [vmem:[%s278 + $0x3c] sm:$0xf]
      %v388 = vld [vmem:[%s278 + $0x40] sm:$0xf]
      %v389 = vld [vmem:[%s278 + $0x44] sm:$0xf]
      %v390 = vld [vmem:[%s278 + $0x48] sm:$0xf]
      %v391 = vld [vmem:[%s278 + $0x4c] sm:$0xf]
      %v392 = vld [vmem:[%s278 + $0x50] sm:$0xf]
      %v393 = vld [vmem:[%s278 + $0x54] sm:$0xf]
      %v394 = vld [vmem:[%s278 + $0x58] sm:$0xf]
      %v395 = vld [vmem:[%s278 + $0x5c] sm:$0xf]
      %v396 = vld [vmem:[%s278 + $0x60] sm:$0xf]
      %v397 = vld [vmem:[%s278 + $0x64] sm:$0xf]
      %v398 = vld [vmem:[%s278 + $0x68] sm:$0xf]
      %v399 = vld [vmem:[%s278 + $0x6c] sm:$0xf]
      %v400 = vld [vmem:[%s278 + $0x70] sm:$0xf]
      %v401 = vld [vmem:[%s278 + $0x74] sm:$0xf]
      %v402 = vld [vmem:[%s278 + $0x78] sm:$0xf]
      %v403 = vld [vmem:[%s278 + $0x7c] sm:$0xf]
      %v404 = vld [vmem:[%s278 + $0x80] sm:$0xf]
      %v405 = vld [vmem:[%s278 + $0x84] sm:$0xf]
      %v406 = vld [vmem:[%s278 + $0x88] sm:$0xf]
      %v407 = vld [vmem:[%s278 + $0x8c] sm:$0xf]
      %v408 = vld [vmem:[%s278 + $0x90] sm:$0xf]
      %v409 = vld [vmem:[%s278 + $0x94] sm:$0xf]
      %v410 = vld [vmem:[%s278 + $0x98] sm:$0xf]
      %v411 = vld [vmem:[%s278 + $0x9c] sm:$0xf]
      %v412 = vld [vmem:[%s278 + $0xa0] sm:$0xf]
      %v413 = vld [vmem:[%s278 + $0xa4] sm:$0xf]
      %v414 = vld [vmem:[%s278 + $0xa8] sm:$0xf]
      %v415 = vld [vmem:[%s278 + $0xac] sm:$0xf]
      %v416 = vld [vmem:[%s278 + $0xb0] sm:$0xf]
      %v417 = vld [vmem:[%s278 + $0xb4] sm:$0xf]
      %v418 = vld [vmem:[%s278 + $0xb8] sm:$0xf]
      %v419 = vld [vmem:[%s278 + $0xbc] sm:$0xf]
      %v420 = vld [vmem:[%s278 + $0xc0] sm:$0xf]
      %v421 = vld [vmem:[%s278 + $0xc4] sm:$0xf]
      %v422 = vld [vmem:[%s278 + $0xc8] sm:$0xf]
      %v423 = vld [vmem:[%s278 + $0xcc] sm:$0xf]
      %v424 = vld [vmem:[%s278 + $0xd0] sm:$0xf]
      %v425 = vld [vmem:[%s278 + $0xd4] sm:$0xf]
      %v426 = vld [vmem:[%s278 + $0xd8] sm:$0xf]
      %v427 = vld [vmem:[%s278 + $0xdc] sm:$0xf]
      %v428 = vld [vmem:[%s278 + $0xe0] sm:$0xf]
      %v429 = vld [vmem:[%s278 + $0xe4] sm:$0xf]
      %v430 = vld [vmem:[%s278 + $0xe8] sm:$0xf]
      %v431 = vld [vmem:[%s278 + $0xec] sm:$0xf]
      %v432 = vld [vmem:[%s278 + $0xf0] sm:$0xf]
      %v433 = vld [vmem:[%s278 + $0xf4] sm:$0xf]
      %v434 = vld [vmem:[%s278 + $0xf8] sm:$0xf]
      %v435 = vld [vmem:[%s278 + $0xfc] sm:$0xf]
      %v436 = vld [vmem:[%s284] sm:$0xff]
      %v437 = vld [vmem:[%s284 + $0x8] sm:$0xf]
      %v438 = vld [vmem:[%s284 + $0xc] sm:$0xff]
      %v439 = vld [vmem:[%s284 + $0x14] sm:$0xf]
      %v440 = vld [vmem:[%s284 + $0x18] sm:$0xff]
      %v441 = vld [vmem:[%s284 + $0x20] sm:$0xf]
      %v442 = vld [vmem:[%s284 + $0x24] sm:$0xff]
      %v443 = vld [vmem:[%s284 + $0x2c] sm:$0xf]
      %v444 = vld [vmem:[%s284 + $0x30] sm:$0xff]
      %v445 = vld [vmem:[%s284 + $0x38] sm:$0xf]
      %v446 = vld [vmem:[%s284 + $0x3c] sm:$0xff]
      %v447 = vld [vmem:[%s284 + $0x44] sm:$0xf]
      %v448 = vld [vmem:[%s284 + $0x48] sm:$0xff]
      %v449 = vld [vmem:[%s284 + $0x50] sm:$0xf]
      %v450 = vld [vmem:[%s284 + $0x54] sm:$0xff]
      %v451 = vld [vmem:[%s284 + $0x5c] sm:$0xf]
      %v452 = vld [vmem:[%s284 + $0x60] sm:$0xff]
      %v453 = vld [vmem:[%s284 + $0x68] sm:$0xf]
      %v454 = vld [vmem:[%s284 + $0x6c] sm:$0xff]
      %v455 = vld [vmem:[%s284 + $0x74] sm:$0xf]
      %v456 = vld [vmem:[%s284 + $0x78] sm:$0xff]
      %v457 = vld [vmem:[%s284 + $0x80] sm:$0xf]
      %v458 = vld [vmem:[%s284 + $0x84] sm:$0xff]
      %v459 = vld [vmem:[%s284 + $0x8c] sm:$0xf]
      %v460 = vld [vmem:[%s284 + $0x90] sm:$0xff]
      %v461 = vld [vmem:[%s284 + $0x98] sm:$0xf]
      %v462 = vld [vmem:[%s284 + $0x9c] sm:$0xff]
      %v463 = vld [vmem:[%s284 + $0xa4] sm:$0xf]
      %v464 = vld [vmem:[%s284 + $0xa8] sm:$0xff]
      %v465 = vld [vmem:[%s284 + $0xb0] sm:$0xf]
      %v466 = vld [vmem:[%s284 + $0xb4] sm:$0xff]
      %v467 = vld [vmem:[%s284 + $0xbc] sm:$0xf]
      %v468 = vld [vmem:[%s289] sm:$0x7]
      %v470 = vlaneseq
      %v471 = vshrl.u32 %v470, 7
      %v472 = vsub.s32 0, %v471
      %v473 = vrot.slane %v468, %v472
      %v474 = vlaneseq
      %v475 = vshrl.u32 %v474, 7
      %v476 = vsub.s32 1, %v475
      %v477 = vrot.slane %v468, %v476
      %v478 = vlaneseq
      %v479 = vshrl.u32 %v478, 7
      %v480 = vsub.s32 2, %v479
      %v481 = vrot.slane %v468, %v480
      %v549 = vunpack.c.l.b16 %v372
      %v550 = vunpack.c.l.b16 %v373
      %v551 = vunpack.c.l.b16 %v374
      %v552 = vunpack.c.l.b16 %v375
      %v553 = vunpack.c.l.b16 %v376
      %v554 = vunpack.c.l.b16 %v377
      %v555 = vunpack.c.l.b16 %v378
      %v556 = vunpack.c.l.b16 %v379
      %v557 = vunpack.c.l.b16 %v380
      %v558 = vunpack.c.l.b16 %v381
      %v559 = vunpack.c.l.b16 %v382
      %v560 = vunpack.c.l.b16 %v383
      %v561 = vunpack.c.l.b16 %v384
      %v562 = vunpack.c.l.b16 %v385
      %v563 = vunpack.c.l.b16 %v386
      %v564 = vunpack.c.l.b16 %v387
      %v565 = vunpack.c.l.b16 %v388
      %v566 = vunpack.c.l.b16 %v389
      %v567 = vunpack.c.l.b16 %v390
      %v568 = vunpack.c.l.b16 %v391
      %v569 = vunpack.c.l.b16 %v392
      %v570 = vunpack.c.l.b16 %v393
      %v571 = vunpack.c.l.b16 %v394
      %v572 = vunpack.c.l.b16 %v395
      %v573 = vunpack.c.l.b16 %v396
      %v574 = vunpack.c.l.b16 %v397
      %v575 = vunpack.c.l.b16 %v398
      %v576 = vunpack.c.l.b16 %v399
      %v577 = vunpack.c.l.b16 %v400
      %v578 = vunpack.c.l.b16 %v401
      %v579 = vunpack.c.l.b16 %v402
      %v580 = vunpack.c.l.b16 %v403
      %v581 = vunpack.c.l.b16 %v404
      %v582 = vunpack.c.l.b16 %v405
      %v583 = vunpack.c.l.b16 %v406
      %v584 = vunpack.c.l.b16 %v407
      %v585 = vunpack.c.l.b16 %v408
      %v586 = vunpack.c.l.b16 %v409
      %v587 = vunpack.c.l.b16 %v410
      %v588 = vunpack.c.l.b16 %v411
      %v589 = vunpack.c.l.b16 %v412
      %v590 = vunpack.c.l.b16 %v413
      %v591 = vunpack.c.l.b16 %v414
      %v592 = vunpack.c.l.b16 %v415
      %v593 = vunpack.c.l.b16 %v416
      %v594 = vunpack.c.l.b16 %v417
      %v595 = vunpack.c.l.b16 %v418
      %v596 = vunpack.c.l.b16 %v419
      %v597 = vunpack.c.l.b16 %v420
      %v598 = vunpack.c.l.b16 %v421
      %v599 = vunpack.c.l.b16 %v422
      %v600 = vunpack.c.l.b16 %v423
      %v601 = vunpack.c.l.b16 %v424
      %v602 = vunpack.c.l.b16 %v425
      %v603 = vunpack.c.l.b16 %v426
      %v604 = vunpack.c.l.b16 %v427
      %v605 = vunpack.c.l.b16 %v428
      %v606 = vunpack.c.l.b16 %v429
      %v607 = vunpack.c.l.b16 %v430
      %v608 = vunpack.c.l.b16 %v431
      %v609 = vunpack.c.l.b16 %v432
      %v610 = vunpack.c.l.b16 %v433
      %v611 = vunpack.c.l.b16 %v434
      %v612 = vunpack.c.l.b16 %v435
      %v613 = vpack.c.b16 %v550, %v549
      %v614 = vpack.c.b16 %v552, %v551
      %v615 = vpack.c.b16 %v554, %v553
      %v616 = vpack.c.b16 %v556, %v555
      %v617 = vpack.c.b16 %v558, %v557
      %v618 = vpack.c.b16 %v560, %v559
      %v619 = vpack.c.b16 %v562, %v561
      %v620 = vpack.c.b16 %v564, %v563
      %v621 = vpack.c.b16 %v566, %v565
      %v622 = vpack.c.b16 %v568, %v567
      %v623 = vpack.c.b16 %v570, %v569
      %v624 = vpack.c.b16 %v572, %v571
      %v625 = vpack.c.b16 %v574, %v573
      %v626 = vpack.c.b16 %v576, %v575
      %v627 = vpack.c.b16 %v578, %v577
      %v628 = vpack.c.b16 %v580, %v579
      %v629 = vpack.c.b16 %v582, %v581
      %v630 = vpack.c.b16 %v584, %v583
      %v631 = vpack.c.b16 %v586, %v585
      %v632 = vpack.c.b16 %v588, %v587
      %v633 = vpack.c.b16 %v590, %v589
      %v634 = vpack.c.b16 %v592, %v591
      %v635 = vpack.c.b16 %v594, %v593
      %v636 = vpack.c.b16 %v596, %v595
      %v637 = vpack.c.b16 %v598, %v597
      %v638 = vpack.c.b16 %v600, %v599
      %v639 = vpack.c.b16 %v602, %v601
      %v640 = vpack.c.b16 %v604, %v603
      %v641 = vpack.c.b16 %v606, %v605
      %v642 = vpack.c.b16 %v608, %v607
      %v643 = vpack.c.b16 %v610, %v609
      %v644 = vpack.c.b16 %v612, %v611
      %v709 = vunpack.c.l.b16 %v436
      %v710 = vunpack.c.h.b16 %v436
      %v711 = vunpack.c.l.b16 %v437
      %v712 = vunpack.c.l.b16 %v438
      %v713 = vunpack.c.h.b16 %v438
      %v714 = vunpack.c.l.b16 %v439
      %v715 = vunpack.c.l.b16 %v440
      %v716 = vunpack.c.h.b16 %v440
      %v717 = vunpack.c.l.b16 %v441
      %v718 = vunpack.c.l.b16 %v442
      %v719 = vunpack.c.h.b16 %v442
      %v720 = vunpack.c.l.b16 %v443
      %v721 = vunpack.c.l.b16 %v444
      %v722 = vunpack.c.h.b16 %v444
      %v723 = vunpack.c.l.b16 %v445
      %v724 = vunpack.c.l.b16 %v446
      %v725 = vunpack.c.h.b16 %v446
      %v726 = vunpack.c.l.b16 %v447
      %v727 = vunpack.c.l.b16 %v448
      %v728 = vunpack.c.h.b16 %v448
      %v729 = vunpack.c.l.b16 %v449
      %v730 = vunpack.c.l.b16 %v450
      %v731 = vunpack.c.h.b16 %v450
      %v732 = vunpack.c.l.b16 %v451
      %v733 = vunpack.c.l.b16 %v452
      %v734 = vunpack.c.h.b16 %v452
      %v735 = vunpack.c.l.b16 %v453
      %v736 = vunpack.c.l.b16 %v454
      %v737 = vunpack.c.h.b16 %v454
      %v738 = vunpack.c.l.b16 %v455
      %v739 = vunpack.c.l.b16 %v456
      %v740 = vunpack.c.h.b16 %v456
      %v741 = vunpack.c.l.b16 %v457
      %v742 = vunpack.c.l.b16 %v458
      %v743 = vunpack.c.h.b16 %v458
      %v744 = vunpack.c.l.b16 %v459
      %v745 = vunpack.c.l.b16 %v460
      %v746 = vunpack.c.h.b16 %v460
      %v747 = vunpack.c.l.b16 %v461
      %v748 = vunpack.c.l.b16 %v462
      %v749 = vunpack.c.h.b16 %v462
      %v750 = vunpack.c.l.b16 %v463
      %v751 = vunpack.c.l.b16 %v464
      %v752 = vunpack.c.h.b16 %v464
      %v753 = vunpack.c.l.b16 %v465
      %v754 = vunpack.c.l.b16 %v466
      %v755 = vunpack.c.h.b16 %v466
      %v756 = vunpack.c.l.b16 %v467
      %v757 = vpack.c.b16 %v712, %v709
      %v758 = vpack.c.b16 %v713, %v710
      %v759 = vpack.c.b16 %v714, %v711
      %v760 = vpack.c.b16 %v718, %v715
      %v761 = vpack.c.b16 %v719, %v716
      %v762 = vpack.c.b16 %v720, %v717
      %v763 = vpack.c.b16 %v724, %v721
      %v764 = vpack.c.b16 %v725, %v722
      %v765 = vpack.c.b16 %v726, %v723
      %v766 = vpack.c.b16 %v730, %v727
      %v767 = vpack.c.b16 %v731, %v728
      %v768 = vpack.c.b16 %v732, %v729
      %v769 = vpack.c.b16 %v736, %v733
      %v770 = vpack.c.b16 %v737, %v734
      %v771 = vpack.c.b16 %v738, %v735
      %v772 = vpack.c.b16 %v742, %v739
      %v773 = vpack.c.b16 %v743, %v740
      %v774 = vpack.c.b16 %v744, %v741
      %v775 = vpack.c.b16 %v748, %v745
      %v776 = vpack.c.b16 %v749, %v746
      %v777 = vpack.c.b16 %v750, %v747
      %v778 = vpack.c.b16 %v754, %v751
      %v779 = vpack.c.b16 %v755, %v752
      %v780 = vpack.c.b16 %v756, %v753
      %805 = vmatprep.subr.bf16.mxu0 %v758
      %806 = vmatpush1.bf16.msra.mxu0 %v757
      %807 = vmatprep.subr.bf16.mxu0 %v761
      %808 = vmatpush1.bf16.msra.mxu0 %v760
      %809 = vmatprep.subr.bf16.mxu0 %v764
      %810 = vmatpush1.bf16.msra.mxu0 %v763
      %811 = vmatprep.subr.bf16.mxu0 %v767
      %812 = vmatpush1.bf16.msra.mxu0 %v766
      %813 = vmatprep.subr.bf16.mxu0 %v770
      %814 = vmatpush1.bf16.msra.mxu0 %v769
      %815 = vmatprep.subr.bf16.mxu0 %v773
      %816 = vmatpush1.bf16.msra.mxu0 %v772
      %817 = vmatprep.subr.bf16.mxu0 %v776
      %818 = vmatpush1.bf16.msra.mxu0 %v775
      %819 = vmatprep.subr.bf16.mxu0 %v779
      %820 = vmatpush1.bf16.msra.mxu0 %v778
      %821 = vmatprep.subr.bf16.mxu0 0
      %822 = vmatpush1.bf16.msra.mxu0 0
      %823 = vmatprep.subr.bf16.mxu0 0
      %824 = vmatpush1.bf16.msra.mxu0 0
      %825 = vmatprep.subr.bf16.mxu0 0
      %826 = vmatpush1.bf16.msra.mxu0 0
      %827 = vmatprep.subr.bf16.mxu0 0
      %828 = vmatpush1.bf16.msra.mxu0 0
      %829 = vmatprep.subr.bf16.mxu0 0
      %830 = vmatpush1.bf16.msra.mxu0 0
      %831 = vmatprep.subr.bf16.mxu0 0
      %832 = vmatpush1.bf16.msra.mxu0 0
      %833 = vmatprep.subr.bf16.mxu0 0
      %834 = vmatpush1.bf16.msra.mxu0 0
      %835 = vmatprep.subr.bf16.mxu0 0
      %836 = vmatpush1.bf16.msra.mxu0 0
      %837 = vmatprep.mubr.bf16.mxu0 0
      %838 = vmatmul.mubr.bf16.gmra.mrb[0].mxu0 %v613
      %v839 = vpop.f32.mrb[0].mxu0
      %v840 = vadd.f32 %v473, %v839
      %v841 = vpop.f32.mrb[0].mxu0
      %v842 = vadd.f32 %v477, %v841
      %v843 = vpop.f32.mrb[0].mxu0
      %v844 = vadd.f32 %v473, %v843
      %v845 = vpop.f32.mrb[0].mxu0
      %v846 = vadd.f32 %v477, %v845
      %847 = vmatprep.mubr.bf16.mxu0 0
      %848 = vmatmul.mubr.bf16.gmra.mrb[0].mxu0 %v614
      %v849 = vpop.f32.mrb[0].mxu0
      %v850 = vadd.f32 %v473, %v849
      %v851 = vpop.f32.mrb[0].mxu0
      %v852 = vadd.f32 %v477, %v851
      %v853 = vpop.f32.mrb[0].mxu0
      %v854 = vadd.f32 %v473, %v853
      %v855 = vpop.f32.mrb[0].mxu0
      %v856 = vadd.f32 %v477, %v855
      %857 = vmatprep.mubr.bf16.mxu0 0
      %858 = vmatmul.mubr.bf16.gmra.mrb[0].mxu0 %v615
      %v859 = vpop.f32.mrb[0].mxu0
      %v860 = vadd.f32 %v473, %v859
      %v861 = vpop.f32.mrb[0].mxu0
      %v862 = vadd.f32 %v477, %v861
      %v863 = vpop.f32.mrb[0].mxu0
      %v864 = vadd.f32 %v473, %v863
      %v865 = vpop.f32.mrb[0].mxu0
      %v866 = vadd.f32 %v477, %v865
      %867 = vmatprep.mubr.bf16.mxu0 0
      %868 = vmatmul.mubr.bf16.gmra.mrb[0].mxu0 %v616
      %v869 = vpop.f32.mrb[0].mxu0
      %v870 = vadd.f32 %v473, %v869
      %v871 = vpop.f32.mrb[0].mxu0
      %v872 = vadd.f32 %v477, %v871
      %v873 = vpop.f32.mrb[0].mxu0
      %v874 = vadd.f32 %v473, %v873
      %v875 = vpop.f32.mrb[0].mxu0
      %v876 = vadd.f32 %v477, %v875
      %877 = vmatprep.mubr.bf16.mxu0 0
      %878 = vmatmul.mubr.bf16.gmra.mrb[0].mxu0 %v617
      %v879 = vpop.f32.mrb[0].mxu0
      %v880 = vadd.f32 %v473, %v879
      %v881 = vpop.f32.mrb[0].mxu0
      %v882 = vadd.f32 %v477, %v881
      %v883 = vpop.f32.mrb[0].mxu0
      %v884 = vadd.f32 %v473, %v883
      %v885 = vpop.f32.mrb[0].mxu0
      %v886 = vadd.f32 %v477, %v885
      %887 = vmatprep.mubr.bf16.mxu0 0
      %888 = vmatmul.mubr.bf16.gmra.mrb[0].mxu0 %v618
      %v889 = vpop.f32.mrb[0].mxu0
      %v890 = vadd.f32 %v473, %v889
      %v891 = vpop.f32.mrb[0].mxu0
      %v892 = vadd.f32 %v477, %v891
      %v893 = vpop.f32.mrb[0].mxu0
      %v894 = vadd.f32 %v473, %v893
      %v895 = vpop.f32.mrb[0].mxu0
      %v896 = vadd.f32 %v477, %v895
      %897 = vmatprep.mubr.bf16.mxu0 0
      %898 = vmatmul.mubr.bf16.gmra.mrb[0].mxu0 %v619
      %v899 = vpop.f32.mrb[0].mxu0
      %v900 = vadd.f32 %v473, %v899
      %v901 = vpop.f32.mrb[0].mxu0
      %v902 = vadd.f32 %v477, %v901
      %v903 = vpop.f32.mrb[0].mxu0
      %v904 = vadd.f32 %v473, %v903
      %v905 = vpop.f32.mrb[0].mxu0
      %v906 = vadd.f32 %v477, %v905
      %907 = vmatprep.mubr.bf16.mxu0 0
      %908 = vmatmul.mubr.bf16.gmra.mrb[0].mxu0 %v620
      %v909 = vpop.f32.mrb[0].mxu0
      %v910 = vadd.f32 %v473, %v909
      %v911 = vpop.f32.mrb[0].mxu0
      %v912 = vadd.f32 %v477, %v911
      %v913 = vpop.f32.mrb[0].mxu0
      %v914 = vadd.f32 %v473, %v913
      %v915 = vpop.f32.mrb[0].mxu0
      %v916 = vadd.f32 %v477, %v915
      %917 = vmatprep.mubr.bf16.mxu0 0
      %918 = vmatmul.mubr.bf16.gmra.mrb[0].mxu0 %v621
      %v919 = vpop.f32.mrb[0].mxu0
      %v920 = vadd.f32 %v473, %v919
      %v921 = vpop.f32.mrb[0].mxu0
      %v922 = vadd.f32 %v477, %v921
      %v923 = vpop.f32.mrb[0].mxu0
      %v924 = vadd.f32 %v473, %v923
      %v925 = vpop.f32.mrb[0].mxu0
      %v926 = vadd.f32 %v477, %v925
      %927 = vmatprep.mubr.bf16.mxu0 0
      %928 = vmatmul.mubr.bf16.gmra.mrb[0].mxu0 %v622
      %v929 = vpop.f32.mrb[0].mxu0
      %v930 = vadd.f32 %v473, %v929
      %v931 = vpop.f32.mrb[0].mxu0
      %v932 = vadd.f32 %v477, %v931
      %v933 = vpop.f32.mrb[0].mxu0
      %v934 = vadd.f32 %v473, %v933
      %v935 = vpop.f32.mrb[0].mxu0
      %v936 = vadd.f32 %v477, %v935
      %937 = vmatprep.mubr.bf16.mxu0 0
      %938 = vmatmul.mubr.bf16.gmra.mrb[0].mxu0 %v623
      %v939 = vpop.f32.mrb[0].mxu0
      %v940 = vadd.f32 %v473, %v939
      %v941 = vpop.f32.mrb[0].mxu0
      %v942 = vadd.f32 %v477, %v941
      %v943 = vpop.f32.mrb[0].mxu0
      %v944 = vadd.f32 %v473, %v943
      %v945 = vpop.f32.mrb[0].mxu0
      %v946 = vadd.f32 %v477, %v945
      %947 = vmatprep.mubr.bf16.mxu0 0
      %948 = vmatmul.mubr.bf16.gmra.mrb[0].mxu0 %v624
      %v949 = vpop.f32.mrb[0].mxu0
      %v950 = vadd.f32 %v473, %v949
      %v951 = vpop.f32.mrb[0].mxu0
      %v952 = vadd.f32 %v477, %v951
      %v953 = vpop.f32.mrb[0].mxu0
      %v954 = vadd.f32 %v473, %v953
      %v955 = vpop.f32.mrb[0].mxu0
      %v956 = vadd.f32 %v477, %v955
      %957 = vmatprep.mubr.bf16.mxu0 0
      %958 = vmatmul.mubr.bf16.gmra.mrb[0].mxu0 %v625
      %v959 = vpop.f32.mrb[0].mxu0
      %v960 = vadd.f32 %v473, %v959
      %v961 = vpop.f32.mrb[0].mxu0
      %v962 = vadd.f32 %v477, %v961
      %v963 = vpop.f32.mrb[0].mxu0
      %v964 = vadd.f32 %v473, %v963
      %v965 = vpop.f32.mrb[0].mxu0
      %v966 = vadd.f32 %v477, %v965
      %967 = vmatprep.mubr.bf16.mxu0 0
      %968 = vmatmul.mubr.bf16.gmra.mrb[0].mxu0 %v626
      %v969 = vpop.f32.mrb[0].mxu0
      %v970 = vadd.f32 %v473, %v969
      %v971 = vpop.f32.mrb[0].mxu0
      %v972 = vadd.f32 %v477, %v971
      %v973 = vpop.f32.mrb[0].mxu0
      %v974 = vadd.f32 %v473, %v973
      %v975 = vpop.f32.mrb[0].mxu0
      %v976 = vadd.f32 %v477, %v975
      %977 = vmatprep.mubr.bf16.mxu0 0
      %978 = vmatmul.mubr.bf16.gmra.mrb[0].mxu0 %v627
      %v979 = vpop.f32.mrb[0].mxu0
      %v980 = vadd.f32 %v473, %v979
      %v981 = vpop.f32.mrb[0].mxu0
      %v982 = vadd.f32 %v477, %v981
      %v983 = vpop.f32.mrb[0].mxu0
      %v984 = vadd.f32 %v473, %v983
      %v985 = vpop.f32.mrb[0].mxu0
      %v986 = vadd.f32 %v477, %v985
      %987 = vmatprep.mubr.bf16.mxu0 0
      %988 = vmatmul.mubr.bf16.gmra.mrb[0].mxu0 %v628
      %v989 = vpop.f32.mrb[0].mxu0
      %v990 = vadd.f32 %v473, %v989
      %v991 = vpop.f32.mrb[0].mxu0
      %v992 = vadd.f32 %v477, %v991
      %v993 = vpop.f32.mrb[0].mxu0
      %v994 = vadd.f32 %v473, %v993
      %v995 = vpop.f32.mrb[0].mxu0
      %v996 = vadd.f32 %v477, %v995
      %997 = vmatprep.mubr.bf16.mxu0 0
      %998 = vmatmul.mubr.bf16.gmra.mrb[0].mxu0 %v629
      %v999 = vpop.f32.mrb[0].mxu0
      %v1000 = vadd.f32 %v473, %v999
      %v1001 = vpop.f32.mrb[0].mxu0
      %v1002 = vadd.f32 %v477, %v1001
      %v1003 = vpop.f32.mrb[0].mxu0
      %v1004 = vadd.f32 %v473, %v1003
      %v1005 = vpop.f32.mrb[0].mxu0
      %v1006 = vadd.f32 %v477, %v1005
      %1007 = vmatprep.mubr.bf16.mxu0 0
      %1008 = vmatmul.mubr.bf16.gmra.mrb[0].mxu0 %v630
      %v1009 = vpop.f32.mrb[0].mxu0
      %v1010 = vadd.f32 %v473, %v1009
      %v1011 = vpop.f32.mrb[0].mxu0
      %v1012 = vadd.f32 %v477, %v1011
      %v1013 = vpop.f32.mrb[0].mxu0
      %v1014 = vadd.f32 %v473, %v1013
      %v1015 = vpop.f32.mrb[0].mxu0
      %v1016 = vadd.f32 %v477, %v1015
      %1017 = vmatprep.mubr.bf16.mxu0 0
      %1018 = vmatmul.mubr.bf16.gmra.mrb[0].mxu0 %v631
      %v1019 = vpop.f32.mrb[0].mxu0
      %v1020 = vadd.f32 %v473, %v1019
      %v1021 = vpop.f32.mrb[0].mxu0
      %v1022 = vadd.f32 %v477, %v1021
      %v1023 = vpop.f32.mrb[0].mxu0
      %v1024 = vadd.f32 %v473, %v1023
      %v1025 = vpop.f32.mrb[0].mxu0
      %v1026 = vadd.f32 %v477, %v1025
      %1027 = vmatprep.mubr.bf16.mxu0 0
      %1028 = vmatmul.mubr.bf16.gmra.mrb[0].mxu0 %v632
      %v1029 = vpop.f32.mrb[0].mxu0
      %v1030 = vadd.f32 %v473, %v1029
      %v1031 = vpop.f32.mrb[0].mxu0
      %v1032 = vadd.f32 %v477, %v1031
      %v1033 = vpop.f32.mrb[0].mxu0
      %v1034 = vadd.f32 %v473, %v1033
      %v1035 = vpop.f32.mrb[0].mxu0
      %v1036 = vadd.f32 %v477, %v1035
      %1037 = vmatprep.mubr.bf16.mxu0 0
      %1038 = vmatmul.mubr.bf16.gmra.mrb[0].mxu0 %v633
      %v1039 = vpop.f32.mrb[0].mxu0
      %v1040 = vadd.f32 %v473, %v1039
      %v1041 = vpop.f32.mrb[0].mxu0
      %v1042 = vadd.f32 %v477, %v1041
      %v1043 = vpop.f32.mrb[0].mxu0
      %v1044 = vadd.f32 %v473, %v1043
      %v1045 = vpop.f32.mrb[0].mxu0
      %v1046 = vadd.f32 %v477, %v1045
      %1047 = vmatprep.mubr.bf16.mxu0 0
      %1048 = vmatmul.mubr.bf16.gmra.mrb[0].mxu0 %v634
      %v1049 = vpop.f32.mrb[0].mxu0
      %v1050 = vadd.f32 %v473, %v1049
      %v1051 = vpop.f32.mrb[0].mxu0
      %v1052 = vadd.f32 %v477, %v1051
      %v1053 = vpop.f32.mrb[0].mxu0
      %v1054 = vadd.f32 %v473, %v1053
      %v1055 = vpop.f32.mrb[0].mxu0
      %v1056 = vadd.f32 %v477, %v1055
      %1057 = vmatprep.mubr.bf16.mxu0 0
      %1058 = vmatmul.mubr.bf16.gmra.mrb[0].mxu0 %v635
      %v1059 = vpop.f32.mrb[0].mxu0
      %v1060 = vadd.f32 %v473, %v1059
      %v1061 = vpop.f32.mrb[0].mxu0
      %v1062 = vadd.f32 %v477, %v1061
      %v1063 = vpop.f32.mrb[0].mxu0
      %v1064 = vadd.f32 %v473, %v1063
      %v1065 = vpop.f32.mrb[0].mxu0
      %v1066 = vadd.f32 %v477, %v1065
      %1067 = vmatprep.mubr.bf16.mxu0 0
      %1068 = vmatmul.mubr.bf16.gmra.mrb[0].mxu0 %v636
      %v1069 = vpop.f32.mrb[0].mxu0
      %v1070 = vadd.f32 %v473, %v1069
      %v1071 = vpop.f32.mrb[0].mxu0
      %v1072 = vadd.f32 %v477, %v1071
      %v1073 = vpop.f32.mrb[0].mxu0
      %v1074 = vadd.f32 %v473, %v1073
      %v1075 = vpop.f32.mrb[0].mxu0
      %v1076 = vadd.f32 %v477, %v1075
      %1077 = vmatprep.mubr.bf16.mxu0 0
      %1078 = vmatmul.mubr.bf16.gmra.mrb[0].mxu0 %v637
      %v1079 = vpop.f32.mrb[0].mxu0
      %v1080 = vadd.f32 %v473, %v1079
      %v1081 = vpop.f32.mrb[0].mxu0
      %v1082 = vadd.f32 %v477, %v1081
      %v1083 = vpop.f32.mrb[0].mxu0
      %v1084 = vadd.f32 %v473, %v1083
      %v1085 = vpop.f32.mrb[0].mxu0
      %v1086 = vadd.f32 %v477, %v1085
      %1087 = vmatprep.mubr.bf16.mxu0 0
      %1088 = vmatmul.mubr.bf16.gmra.mrb[0].mxu0 %v638
      %v1089 = vpop.f32.mrb[0].mxu0
      %v1090 = vadd.f32 %v473, %v1089
      %v1091 = vpop.f32.mrb[0].mxu0
      %v1092 = vadd.f32 %v477, %v1091
      %v1093 = vpop.f32.mrb[0].mxu0
      %v1094 = vadd.f32 %v473, %v1093
      %v1095 = vpop.f32.mrb[0].mxu0
      %v1096 = vadd.f32 %v477, %v1095
      %1097 = vmatprep.mubr.bf16.mxu0 0
      %1098 = vmatmul.mubr.bf16.gmra.mrb[0].mxu0 %v639
      %v1099 = vpop.f32.mrb[0].mxu0
      %v1100 = vadd.f32 %v473, %v1099
      %v1101 = vpop.f32.mrb[0].mxu0
      %v1102 = vadd.f32 %v477, %v1101
      %v1103 = vpop.f32.mrb[0].mxu0
      %v1104 = vadd.f32 %v473, %v1103
      %v1105 = vpop.f32.mrb[0].mxu0
      %v1106 = vadd.f32 %v477, %v1105
      %1107 = vmatprep.mubr.bf16.mxu0 0
      %1108 = vmatmul.mubr.bf16.gmra.mrb[0].mxu0 %v640
      %v1109 = vpop.f32.mrb[0].mxu0
      %v1110 = vadd.f32 %v473, %v1109
      %v1111 = vpop.f32.mrb[0].mxu0
      %v1112 = vadd.f32 %v477, %v1111
      %v1113 = vpop.f32.mrb[0].mxu0
      %v1114 = vadd.f32 %v473, %v1113
      %v1115 = vpop.f32.mrb[0].mxu0
      %v1116 = vadd.f32 %v477, %v1115
      %1117 = vmatprep.mubr.bf16.mxu0 0
      %1118 = vmatmul.mubr.bf16.gmra.mrb[0].mxu0 %v641
      %v1119 = vpop.f32.mrb[0].mxu0
      %v1120 = vadd.f32 %v473, %v1119
      %v1121 = vpop.f32.mrb[0].mxu0
      %v1122 = vadd.f32 %v477, %v1121
      %v1123 = vpop.f32.mrb[0].mxu0
      %v1124 = vadd.f32 %v473, %v1123
      %v1125 = vpop.f32.mrb[0].mxu0
      %v1126 = vadd.f32 %v477, %v1125
      %1127 = vmatprep.mubr.bf16.mxu0 0
      %1128 = vmatmul.mubr.bf16.gmra.mrb[0].mxu0 %v642
      %v1129 = vpop.f32.mrb[0].mxu0
      %v1130 = vadd.f32 %v473, %v1129
      %v1131 = vpop.f32.mrb[0].mxu0
      %v1132 = vadd.f32 %v477, %v1131
      %v1133 = vpop.f32.mrb[0].mxu0
      %v1134 = vadd.f32 %v473, %v1133
      %v1135 = vpop.f32.mrb[0].mxu0
      %v1136 = vadd.f32 %v477, %v1135
      %1137 = vmatprep.mubr.bf16.mxu0 0
      %1138 = vmatmul.mubr.bf16.gmra.mrb[0].mxu0 %v643
      %v1139 = vpop.f32.mrb[0].mxu0
      %v1140 = vadd.f32 %v473, %v1139
      %v1141 = vpop.f32.mrb[0].mxu0
      %v1142 = vadd.f32 %v477, %v1141
      %v1143 = vpop.f32.mrb[0].mxu0
      %v1144 = vadd.f32 %v473, %v1143
      %v1145 = vpop.f32.mrb[0].mxu0
      %v1146 = vadd.f32 %v477, %v1145
      %1147 = vmatprep.mubr.bf16.mxu0 0
      %1148 = vmatmul.mubr.bf16.gmra.mrb[0].mxu0 %v644
      %v1149 = vpop.f32.mrb[0].mxu0
      %v1150 = vadd.f32 %v473, %v1149
      %v1151 = vpop.f32.mrb[0].mxu0
      %v1152 = vadd.f32 %v477, %v1151
      %v1153 = vpop.f32.mrb[0].mxu0
      %v1154 = vadd.f32 %v473, %v1153
      %v1155 = vpop.f32.mrb[0].mxu0
      %v1156 = vadd.f32 %v477, %v1155
      %1157 = vdwg.mxu0
      %1158 = vmatprep.subr.bf16.mxu0 0
      %1159 = vmatpush1.bf16.msra.mxu0 %v759
      %1160 = vmatprep.subr.bf16.mxu0 0
      %1161 = vmatpush1.bf16.msra.mxu0 %v762
      %1162 = vmatprep.subr.bf16.mxu0 0
      %1163 = vmatpush1.bf16.msra.mxu0 %v765
      %1164 = vmatprep.subr.bf16.mxu0 0
      %1165 = vmatpush1.bf16.msra.mxu0 %v768
      %1166 = vmatprep.subr.bf16.mxu0 0
      %1167 = vmatpush1.bf16.msra.mxu0 %v771
      %1168 = vmatprep.subr.bf16.mxu0 0
      %1169 = vmatpush1.bf16.msra.mxu0 %v774
      %1170 = vmatprep.subr.bf16.mxu0 0
      %1171 = vmatpush1.bf16.msra.mxu0 %v777
      %1172 = vmatprep.subr.bf16.mxu0 0
      %1173 = vmatpush1.bf16.msra.mxu0 %v780
      %1174 = vmatprep.subr.bf16.mxu0 0
      %1175 = vmatpush1.bf16.msra.mxu0 0
      %1176 = vmatprep.subr.bf16.mxu0 0
      %1177 = vmatpush1.bf16.msra.mxu0 0
      %1178 = vmatprep.subr.bf16.mxu0 0
      %1179 = vmatpush1.bf16.msra.mxu0 0
      %1180 = vmatprep.subr.bf16.mxu0 0
      %1181 = vmatpush1.bf16.msra.mxu0 0
      %1182 = vmatprep.subr.bf16.mxu0 0
      %1183 = vmatpush1.bf16.msra.mxu0 0
      %1184 = vmatprep.subr.bf16.mxu0 0
      %1185 = vmatpush1.bf16.msra.mxu0 0
      %1186 = vmatprep.subr.bf16.mxu0 0
      %1187 = vmatpush1.bf16.msra.mxu0 0
      %1188 = vmatprep.subr.bf16.mxu0 0
      %1189 = vmatpush1.bf16.msra.mxu0 0
      %1190 = vmatprep.mubr.bf16.mxu0 0
      %1191 = vmatmul.mubr.bf16.gmra.mrb[0].mxu0 %v613
      %v1192 = vpop.f32.mrb[0].mxu0
      %v1193 = vadd.f32 %v481, %v1192
      %v1194 = vpop.f32.mrb[0].mxu0
      %v1195 = vpop.f32.mrb[0].mxu0
      %v1196 = vadd.f32 %v481, %v1195
      %v1197 = vpop.f32.mrb[0].mxu0
      %1198 = vmatprep.mubr.bf16.mxu0 0
      %1199 = vmatmul.mubr.bf16.gmra.mrb[0].mxu0 %v614
      %v1200 = vpop.f32.mrb[0].mxu0
      %v1201 = vadd.f32 %v481, %v1200
      %v1202 = vpop.f32.mrb[0].mxu0
      %v1203 = vpop.f32.mrb[0].mxu0
      %v1204 = vadd.f32 %v481, %v1203
      %v1205 = vpop.f32.mrb[0].mxu0
      %1206 = vmatprep.mubr.bf16.mxu0 0
      %1207 = vmatmul.mubr.bf16.gmra.mrb[0].mxu0 %v615
      %v1208 = vpop.f32.mrb[0].mxu0
      %v1209 = vadd.f32 %v481, %v1208
      %v1210 = vpop.f32.mrb[0].mxu0
      %v1211 = vpop.f32.mrb[0].mxu0
      %v1212 = vadd.f32 %v481, %v1211
      %v1213 = vpop.f32.mrb[0].mxu0
      %1214 = vmatprep.mubr.bf16.mxu0 0
      %1215 = vmatmul.mubr.bf16.gmra.mrb[0].mxu0 %v616
      %v1216 = vpop.f32.mrb[0].mxu0
      %v1217 = vadd.f32 %v481, %v1216
      %v1218 = vpop.f32.mrb[0].mxu0
      %v1219 = vpop.f32.mrb[0].mxu0
      %v1220 = vadd.f32 %v481, %v1219
      %v1221 = vpop.f32.mrb[0].mxu0
      %1222 = vmatprep.mubr.bf16.mxu0 0
      %1223 = vmatmul.mubr.bf16.gmra.mrb[0].mxu0 %v617
      %v1224 = vpop.f32.mrb[0].mxu0
      %v1225 = vadd.f32 %v481, %v1224
      %v1226 = vpop.f32.mrb[0].mxu0
      %v1227 = vpop.f32.mrb[0].mxu0
      %v1228 = vadd.f32 %v481, %v1227
      %v1229 = vpop.f32.mrb[0].mxu0
      %1230 = vmatprep.mubr.bf16.mxu0 0
      %1231 = vmatmul.mubr.bf16.gmra.mrb[0].mxu0 %v618
      %v1232 = vpop.f32.mrb[0].mxu0
      %v1233 = vadd.f32 %v481, %v1232
      %v1234 = vpop.f32.mrb[0].mxu0
      %v1235 = vpop.f32.mrb[0].mxu0
      %v1236 = vadd.f32 %v481, %v1235
      %v1237 = vpop.f32.mrb[0].mxu0
      %1238 = vmatprep.mubr.bf16.mxu0 0
      %1239 = vmatmul.mubr.bf16.gmra.mrb[0].mxu0 %v619
      %v1240 = vpop.f32.mrb[0].mxu0
      %v1241 = vadd.f32 %v481, %v1240
      %v1242 = vpop.f32.mrb[0].mxu0
      %v1243 = vpop.f32.mrb[0].mxu0
      %v1244 = vadd.f32 %v481, %v1243
      %v1245 = vpop.f32.mrb[0].mxu0
      %1246 = vmatprep.mubr.bf16.mxu0 0
      %1247 = vmatmul.mubr.bf16.gmra.mrb[0].mxu0 %v620
      %v1248 = vpop.f32.mrb[0].mxu0
      %v1249 = vadd.f32 %v481, %v1248
      %v1250 = vpop.f32.mrb[0].mxu0
      %v1251 = vpop.f32.mrb[0].mxu0
      %v1252 = vadd.f32 %v481, %v1251
      %v1253 = vpop.f32.mrb[0].mxu0
      %1254 = vmatprep.mubr.bf16.mxu0 0
      %1255 = vmatmul.mubr.bf16.gmra.mrb[0].mxu0 %v621
      %v1256 = vpop.f32.mrb[0].mxu0
      %v1257 = vadd.f32 %v481, %v1256
      %v1258 = vpop.f32.mrb[0].mxu0
      %v1259 = vpop.f32.mrb[0].mxu0
      %v1260 = vadd.f32 %v481, %v1259
      %v1261 = vpop.f32.mrb[0].mxu0
      %1262 = vmatprep.mubr.bf16.mxu0 0
      %1263 = vmatmul.mubr.bf16.gmra.mrb[0].mxu0 %v622
      %v1264 = vpop.f32.mrb[0].mxu0
      %v1265 = vadd.f32 %v481, %v1264
      %v1266 = vpop.f32.mrb[0].mxu0
      %v1267 = vpop.f32.mrb[0].mxu0
      %v1268 = vadd.f32 %v481, %v1267
      %v1269 = vpop.f32.mrb[0].mxu0
      %1270 = vmatprep.mubr.bf16.mxu0 0
      %1271 = vmatmul.mubr.bf16.gmra.mrb[0].mxu0 %v623
      %v1272 = vpop.f32.mrb[0].mxu0
      %v1273 = vadd.f32 %v481, %v1272
      %v1274 = vpop.f32.mrb[0].mxu0
      %v1275 = vpop.f32.mrb[0].mxu0
      %v1276 = vadd.f32 %v481, %v1275
      %v1277 = vpop.f32.mrb[0].mxu0
      %1278 = vmatprep.mubr.bf16.mxu0 0
      %1279 = vmatmul.mubr.bf16.gmra.mrb[0].mxu0 %v624
      %v1280 = vpop.f32.mrb[0].mxu0
      %v1281 = vadd.f32 %v481, %v1280
      %v1282 = vpop.f32.mrb[0].mxu0
      %v1283 = vpop.f32.mrb[0].mxu0
      %v1284 = vadd.f32 %v481, %v1283
      %v1285 = vpop.f32.mrb[0].mxu0
      %1286 = vmatprep.mubr.bf16.mxu0 0
      %1287 = vmatmul.mubr.bf16.gmra.mrb[0].mxu0 %v625
      %v1288 = vpop.f32.mrb[0].mxu0
      %v1289 = vadd.f32 %v481, %v1288
      %v1290 = vpop.f32.mrb[0].mxu0
      %v1291 = vpop.f32.mrb[0].mxu0
      %v1292 = vadd.f32 %v481, %v1291
      %v1293 = vpop.f32.mrb[0].mxu0
      %1294 = vmatprep.mubr.bf16.mxu0 0
      %1295 = vmatmul.mubr.bf16.gmra.mrb[0].mxu0 %v626
      %v1296 = vpop.f32.mrb[0].mxu0
      %v1297 = vadd.f32 %v481, %v1296
      %v1298 = vpop.f32.mrb[0].mxu0
      %v1299 = vpop.f32.mrb[0].mxu0
      %v1300 = vadd.f32 %v481, %v1299
      %v1301 = vpop.f32.mrb[0].mxu0
      %1302 = vmatprep.mubr.bf16.mxu0 0
      %1303 = vmatmul.mubr.bf16.gmra.mrb[0].mxu0 %v627
      %v1304 = vpop.f32.mrb[0].mxu0
      %v1305 = vadd.f32 %v481, %v1304
      %v1306 = vpop.f32.mrb[0].mxu0
      %v1307 = vpop.f32.mrb[0].mxu0
      %v1308 = vadd.f32 %v481, %v1307
      %v1309 = vpop.f32.mrb[0].mxu0
      %1310 = vmatprep.mubr.bf16.mxu0 0
      %1311 = vmatmul.mubr.bf16.gmra.mrb[0].mxu0 %v628
      %v1312 = vpop.f32.mrb[0].mxu0
      %v1313 = vadd.f32 %v481, %v1312
      %v1314 = vpop.f32.mrb[0].mxu0
      %v1315 = vpop.f32.mrb[0].mxu0
      %v1316 = vadd.f32 %v481, %v1315
      %v1317 = vpop.f32.mrb[0].mxu0
      %1318 = vmatprep.mubr.bf16.mxu0 0
      %1319 = vmatmul.mubr.bf16.gmra.mrb[0].mxu0 %v629
      %v1320 = vpop.f32.mrb[0].mxu0
      %v1321 = vadd.f32 %v481, %v1320
      %v1322 = vpop.f32.mrb[0].mxu0
      %v1323 = vpop.f32.mrb[0].mxu0
      %v1324 = vadd.f32 %v481, %v1323
      %v1325 = vpop.f32.mrb[0].mxu0
      %1326 = vmatprep.mubr.bf16.mxu0 0
      %1327 = vmatmul.mubr.bf16.gmra.mrb[0].mxu0 %v630
      %v1328 = vpop.f32.mrb[0].mxu0
      %v1329 = vadd.f32 %v481, %v1328
      %v1330 = vpop.f32.mrb[0].mxu0
      %v1331 = vpop.f32.mrb[0].mxu0
      %v1332 = vadd.f32 %v481, %v1331
      %v1333 = vpop.f32.mrb[0].mxu0
      %1334 = vmatprep.mubr.bf16.mxu0 0
      %1335 = vmatmul.mubr.bf16.gmra.mrb[0].mxu0 %v631
      %v1336 = vpop.f32.mrb[0].mxu0
      %v1337 = vadd.f32 %v481, %v1336
      %v1338 = vpop.f32.mrb[0].mxu0
      %v1339 = vpop.f32.mrb[0].mxu0
      %v1340 = vadd.f32 %v481, %v1339
      %v1341 = vpop.f32.mrb[0].mxu0
      %1342 = vmatprep.mubr.bf16.mxu0 0
      %1343 = vmatmul.mubr.bf16.gmra.mrb[0].mxu0 %v632
      %v1344 = vpop.f32.mrb[0].mxu0
      %v1345 = vadd.f32 %v481, %v1344
      %v1346 = vpop.f32.mrb[0].mxu0
      %v1347 = vpop.f32.mrb[0].mxu0
      %v1348 = vadd.f32 %v481, %v1347
      %v1349 = vpop.f32.mrb[0].mxu0
      %1350 = vmatprep.mubr.bf16.mxu0 0
      %1351 = vmatmul.mubr.bf16.gmra.mrb[0].mxu0 %v633
      %v1352 = vpop.f32.mrb[0].mxu0
      %v1353 = vadd.f32 %v481, %v1352
      %v1354 = vpop.f32.mrb[0].mxu0
      %v1355 = vpop.f32.mrb[0].mxu0
      %v1356 = vadd.f32 %v481, %v1355
      %v1357 = vpop.f32.mrb[0].mxu0
      %1358 = vmatprep.mubr.bf16.mxu0 0
      %1359 = vmatmul.mubr.bf16.gmra.mrb[0].mxu0 %v634
      %v1360 = vpop.f32.mrb[0].mxu0
      %v1361 = vadd.f32 %v481, %v1360
      %v1362 = vpop.f32.mrb[0].mxu0
      %v1363 = vpop.f32.mrb[0].mxu0
      %v1364 = vadd.f32 %v481, %v1363
      %v1365 = vpop.f32.mrb[0].mxu0
      %1366 = vmatprep.mubr.bf16.mxu0 0
      %1367 = vmatmul.mubr.bf16.gmra.mrb[0].mxu0 %v635
      %v1368 = vpop.f32.mrb[0].mxu0
      %v1369 = vadd.f32 %v481, %v1368
      %v1370 = vpop.f32.mrb[0].mxu0
      %v1371 = vpop.f32.mrb[0].mxu0
      %v1372 = vadd.f32 %v481, %v1371
      %v1373 = vpop.f32.mrb[0].mxu0
      %1374 = vmatprep.mubr.bf16.mxu0 0
      %1375 = vmatmul.mubr.bf16.gmra.mrb[0].mxu0 %v636
      %v1376 = vpop.f32.mrb[0].mxu0
      %v1377 = vadd.f32 %v481, %v1376
      %v1378 = vpop.f32.mrb[0].mxu0
      %v1379 = vpop.f32.mrb[0].mxu0
      %v1380 = vadd.f32 %v481, %v1379
      %v1381 = vpop.f32.mrb[0].mxu0
      %1382 = vmatprep.mubr.bf16.mxu0 0
      %1383 = vmatmul.mubr.bf16.gmra.mrb[0].mxu0 %v637
      %v1384 = vpop.f32.mrb[0].mxu0
      %v1385 = vadd.f32 %v481, %v1384
      %v1386 = vpop.f32.mrb[0].mxu0
      %v1387 = vpop.f32.mrb[0].mxu0
      %v1388 = vadd.f32 %v481, %v1387
      %v1389 = vpop.f32.mrb[0].mxu0
      %1390 = vmatprep.mubr.bf16.mxu0 0
      %1391 = vmatmul.mubr.bf16.gmra.mrb[0].mxu0 %v638
      %v1392 = vpop.f32.mrb[0].mxu0
      %v1393 = vadd.f32 %v481, %v1392
      %v1394 = vpop.f32.mrb[0].mxu0
      %v1395 = vpop.f32.mrb[0].mxu0
      %v1396 = vadd.f32 %v481, %v1395
      %v1397 = vpop.f32.mrb[0].mxu0
      %1398 = vmatprep.mubr.bf16.mxu0 0
      %1399 = vmatmul.mubr.bf16.gmra.mrb[0].mxu0 %v639
      %v1400 = vpop.f32.mrb[0].mxu0
      %v1401 = vadd.f32 %v481, %v1400
      %v1402 = vpop.f32.mrb[0].mxu0
      %v1403 = vpop.f32.mrb[0].mxu0
      %v1404 = vadd.f32 %v481, %v1403
      %v1405 = vpop.f32.mrb[0].mxu0
      %1406 = vmatprep.mubr.bf16.mxu0 0
      %1407 = vmatmul.mubr.bf16.gmra.mrb[0].mxu0 %v640
      %v1408 = vpop.f32.mrb[0].mxu0
      %v1409 = vadd.f32 %v481, %v1408
      %v1410 = vpop.f32.mrb[0].mxu0
      %v1411 = vpop.f32.mrb[0].mxu0
      %v1412 = vadd.f32 %v481, %v1411
      %v1413 = vpop.f32.mrb[0].mxu0
      %1414 = vmatprep.mubr.bf16.mxu0 0
      %1415 = vmatmul.mubr.bf16.gmra.mrb[0].mxu0 %v641
      %v1416 = vpop.f32.mrb[0].mxu0
      %v1417 = vadd.f32 %v481, %v1416
      %v1418 = vpop.f32.mrb[0].mxu0
      %v1419 = vpop.f32.mrb[0].mxu0
      %v1420 = vadd.f32 %v481, %v1419
      %v1421 = vpop.f32.mrb[0].mxu0
      %1422 = vmatprep.mubr.bf16.mxu0 0
      %1423 = vmatmul.mubr.bf16.gmra.mrb[0].mxu0 %v642
      %v1424 = vpop.f32.mrb[0].mxu0
      %v1425 = vadd.f32 %v481, %v1424
      %v1426 = vpop.f32.mrb[0].mxu0
      %v1427 = vpop.f32.mrb[0].mxu0
      %v1428 = vadd.f32 %v481, %v1427
      %v1429 = vpop.f32.mrb[0].mxu0
      %1430 = vmatprep.mubr.bf16.mxu0 0
      %1431 = vmatmul.mubr.bf16.gmra.mrb[0].mxu0 %v643
      %v1432 = vpop.f32.mrb[0].mxu0
      %v1433 = vadd.f32 %v481, %v1432
      %v1434 = vpop.f32.mrb[0].mxu0
      %v1435 = vpop.f32.mrb[0].mxu0
      %v1436 = vadd.f32 %v481, %v1435
      %v1437 = vpop.f32.mrb[0].mxu0
      %1438 = vmatprep.mubr.bf16.mxu0 0
      %1439 = vmatmul.mubr.bf16.gmra.mrb[0].mxu0 %v644
      %v1440 = vpop.f32.mrb[0].mxu0
      %v1441 = vadd.f32 %v481, %v1440
      %v1442 = vpop.f32.mrb[0].mxu0
      %v1443 = vpop.f32.mrb[0].mxu0
      %v1444 = vadd.f32 %v481, %v1443
      %v1445 = vpop.f32.mrb[0].mxu0
      %1446 = vdwg.mxu0
      %v1447 = vmul.f32 %v840, %v840
      %v1448 = vmul.f32 %v842, %v842
      %v1449 = vmul.f32 %v1193, %v1193
      %v1450 = vmul.f32 %v844, %v844
      %v1451 = vmul.f32 %v846, %v846
      %v1452 = vmul.f32 %v1196, %v1196
      %v1453 = vmul.f32 %v850, %v850
      %v1454 = vmul.f32 %v852, %v852
      %v1455 = vmul.f32 %v1201, %v1201
      %v1456 = vmul.f32 %v854, %v854
      %v1457 = vmul.f32 %v856, %v856
      %v1458 = vmul.f32 %v1204, %v1204
      %v1459 = vmul.f32 %v860, %v860
      %v1460 = vmul.f32 %v862, %v862
      %v1461 = vmul.f32 %v1209, %v1209
      %v1462 = vmul.f32 %v864, %v864
      %v1463 = vmul.f32 %v866, %v866
      %v1464 = vmul.f32 %v1212, %v1212
      %v1465 = vmul.f32 %v870, %v870
      %v1466 = vmul.f32 %v872, %v872
      %v1467 = vmul.f32 %v1217, %v1217
      %v1468 = vmul.f32 %v874, %v874
      %v1469 = vmul.f32 %v876, %v876
      %v1470 = vmul.f32 %v1220, %v1220
      %v1471 = vmul.f32 %v880, %v880
      %v1472 = vmul.f32 %v882, %v882
      %v1473 = vmul.f32 %v1225, %v1225
      %v1474 = vmul.f32 %v884, %v884
      %v1475 = vmul.f32 %v886, %v886
      %v1476 = vmul.f32 %v1228, %v1228
      %v1477 = vmul.f32 %v890, %v890
      %v1478 = vmul.f32 %v892, %v892
      %v1479 = vmul.f32 %v1233, %v1233
      %v1480 = vmul.f32 %v894, %v894
      %v1481 = vmul.f32 %v896, %v896
      %v1482 = vmul.f32 %v1236, %v1236
      %v1483 = vmul.f32 %v900, %v900
      %v1484 = vmul.f32 %v902, %v902
      %v1485 = vmul.f32 %v1241, %v1241
      %v1486 = vmul.f32 %v904, %v904
      %v1487 = vmul.f32 %v906, %v906
      %v1488 = vmul.f32 %v1244, %v1244
      %v1489 = vmul.f32 %v910, %v910
      %v1490 = vmul.f32 %v912, %v912
      %v1491 = vmul.f32 %v1249, %v1249
      %v1492 = vmul.f32 %v914, %v914
      %v1493 = vmul.f32 %v916, %v916
      %v1494 = vmul.f32 %v1252, %v1252
      %v1495 = vmul.f32 %v920, %v920
      %v1496 = vmul.f32 %v922, %v922
      %v1497 = vmul.f32 %v1257, %v1257
      %v1498 = vmul.f32 %v924, %v924
      %v1499 = vmul.f32 %v926, %v926
      %v1500 = vmul.f32 %v1260, %v1260
      %v1501 = vmul.f32 %v930, %v930
      %v1502 = vmul.f32 %v932, %v932
      %v1503 = vmul.f32 %v1265, %v1265
      %v1504 = vmul.f32 %v934, %v934
      %v1505 = vmul.f32 %v936, %v936
      %v1506 = vmul.f32 %v1268, %v1268
      %v1507 = vmul.f32 %v940, %v940
      %v1508 = vmul.f32 %v942, %v942
      %v1509 = vmul.f32 %v1273, %v1273
      %v1510 = vmul.f32 %v944, %v944
      %v1511 = vmul.f32 %v946, %v946
      %v1512 = vmul.f32 %v1276, %v1276
      %v1513 = vmul.f32 %v950, %v950
      %v1514 = vmul.f32 %v952, %v952
      %v1515 = vmul.f32 %v1281, %v1281
      %v1516 = vmul.f32 %v954, %v954
      %v1517 = vmul.f32 %v956, %v956
      %v1518 = vmul.f32 %v1284, %v1284
      %v1519 = vmul.f32 %v960, %v960
      %v1520 = vmul.f32 %v962, %v962
      %v1521 = vmul.f32 %v1289, %v1289
      %v1522 = vmul.f32 %v964, %v964
      %v1523 = vmul.f32 %v966, %v966
      %v1524 = vmul.f32 %v1292, %v1292
      %v1525 = vmul.f32 %v970, %v970
      %v1526 = vmul.f32 %v972, %v972
      %v1527 = vmul.f32 %v1297, %v1297
      %v1528 = vmul.f32 %v974, %v974
      %v1529 = vmul.f32 %v976, %v976
      %v1530 = vmul.f32 %v1300, %v1300
      %v1531 = vmul.f32 %v980, %v980
      %v1532 = vmul.f32 %v982, %v982
      %v1533 = vmul.f32 %v1305, %v1305
      %v1534 = vmul.f32 %v984, %v984
      %v1535 = vmul.f32 %v986, %v986
      %v1536 = vmul.f32 %v1308, %v1308
      %v1537 = vmul.f32 %v990, %v990
      %v1538 = vmul.f32 %v992, %v992
      %v1539 = vmul.f32 %v1313, %v1313
      %v1540 = vmul.f32 %v994, %v994
      %v1541 = vmul.f32 %v996, %v996
      %v1542 = vmul.f32 %v1316, %v1316
      %v1543 = vmul.f32 %v1000, %v1000
      %v1544 = vmul.f32 %v1002, %v1002
      %v1545 = vmul.f32 %v1321, %v1321
      %v1546 = vmul.f32 %v1004, %v1004
      %v1547 = vmul.f32 %v1006, %v1006
      %v1548 = vmul.f32 %v1324, %v1324
      %v1549 = vmul.f32 %v1010, %v1010
      %v1550 = vmul.f32 %v1012, %v1012
      %v1551 = vmul.f32 %v1329, %v1329
      %v1552 = vmul.f32 %v1014, %v1014
      %v1553 = vmul.f32 %v1016, %v1016
      %v1554 = vmul.f32 %v1332, %v1332
      %v1555 = vmul.f32 %v1020, %v1020
      %v1556 = vmul.f32 %v1022, %v1022
      %v1557 = vmul.f32 %v1337, %v1337
      %v1558 = vmul.f32 %v1024, %v1024
      %v1559 = vmul.f32 %v1026, %v1026
      %v1560 = vmul.f32 %v1340, %v1340
      %v1561 = vmul.f32 %v1030, %v1030
      %v1562 = vmul.f32 %v1032, %v1032
      %v1563 = vmul.f32 %v1345, %v1345
      %v1564 = vmul.f32 %v1034, %v1034
      %v1565 = vmul.f32 %v1036, %v1036
      %v1566 = vmul.f32 %v1348, %v1348
      %v1567 = vmul.f32 %v1040, %v1040
      %v1568 = vmul.f32 %v1042, %v1042
      %v1569 = vmul.f32 %v1353, %v1353
      %v1570 = vmul.f32 %v1044, %v1044
      %v1571 = vmul.f32 %v1046, %v1046
      %v1572 = vmul.f32 %v1356, %v1356
      %v1573 = vmul.f32 %v1050, %v1050
      %v1574 = vmul.f32 %v1052, %v1052
      %v1575 = vmul.f32 %v1361, %v1361
      %v1576 = vmul.f32 %v1054, %v1054
      %v1577 = vmul.f32 %v1056, %v1056
      %v1578 = vmul.f32 %v1364, %v1364
      %v1579 = vmul.f32 %v1060, %v1060
      %v1580 = vmul.f32 %v1062, %v1062
      %v1581 = vmul.f32 %v1369, %v1369
      %v1582 = vmul.f32 %v1064, %v1064
      %v1583 = vmul.f32 %v1066, %v1066
      %v1584 = vmul.f32 %v1372, %v1372
      %v1585 = vmul.f32 %v1070, %v1070
      %v1586 = vmul.f32 %v1072, %v1072
      %v1587 = vmul.f32 %v1377, %v1377
      %v1588 = vmul.f32 %v1074, %v1074
      %v1589 = vmul.f32 %v1076, %v1076
      %v1590 = vmul.f32 %v1380, %v1380
      %v1591 = vmul.f32 %v1080, %v1080
      %v1592 = vmul.f32 %v1082, %v1082
      %v1593 = vmul.f32 %v1385, %v1385
      %v1594 = vmul.f32 %v1084, %v1084
      %v1595 = vmul.f32 %v1086, %v1086
      %v1596 = vmul.f32 %v1388, %v1388
      %v1597 = vmul.f32 %v1090, %v1090
      %v1598 = vmul.f32 %v1092, %v1092
      %v1599 = vmul.f32 %v1393, %v1393
      %v1600 = vmul.f32 %v1094, %v1094
      %v1601 = vmul.f32 %v1096, %v1096
      %v1602 = vmul.f32 %v1396, %v1396
      %v1603 = vmul.f32 %v1100, %v1100
      %v1604 = vmul.f32 %v1102, %v1102
      %v1605 = vmul.f32 %v1401, %v1401
      %v1606 = vmul.f32 %v1104, %v1104
      %v1607 = vmul.f32 %v1106, %v1106
      %v1608 = vmul.f32 %v1404, %v1404
      %v1609 = vmul.f32 %v1110, %v1110
      %v1610 = vmul.f32 %v1112, %v1112
      %v1611 = vmul.f32 %v1409, %v1409
      %v1612 = vmul.f32 %v1114, %v1114
      %v1613 = vmul.f32 %v1116, %v1116
      %v1614 = vmul.f32 %v1412, %v1412
      %v1615 = vmul.f32 %v1120, %v1120
      %v1616 = vmul.f32 %v1122, %v1122
      %v1617 = vmul.f32 %v1417, %v1417
      %v1618 = vmul.f32 %v1124, %v1124
      %v1619 = vmul.f32 %v1126, %v1126
      %v1620 = vmul.f32 %v1420, %v1420
      %v1621 = vmul.f32 %v1130, %v1130
      %v1622 = vmul.f32 %v1132, %v1132
      %v1623 = vmul.f32 %v1425, %v1425
      %v1624 = vmul.f32 %v1134, %v1134
      %v1625 = vmul.f32 %v1136, %v1136
      %v1626 = vmul.f32 %v1428, %v1428
      %v1627 = vmul.f32 %v1140, %v1140
      %v1628 = vmul.f32 %v1142, %v1142
      %v1629 = vmul.f32 %v1433, %v1433
      %v1630 = vmul.f32 %v1144, %v1144
      %v1631 = vmul.f32 %v1146, %v1146
      %v1632 = vmul.f32 %v1436, %v1436
      %v1633 = vmul.f32 %v1150, %v1150
      %v1634 = vmul.f32 %v1152, %v1152
      %v1635 = vmul.f32 %v1441, %v1441
      %v1636 = vmul.f32 %v1154, %v1154
      %v1637 = vmul.f32 %v1156, %v1156
      %v1638 = vmul.f32 %v1444, %v1444
      %v1639 = vmul.f32 %v840, %v1447
      %v1640 = vmul.f32 %v842, %v1448
      %v1641 = vmul.f32 %v1193, %v1449
      %v1642 = vmul.f32 %v844, %v1450
      %v1643 = vmul.f32 %v846, %v1451
      %v1644 = vmul.f32 %v1196, %v1452
      %v1645 = vmul.f32 %v850, %v1453
      %v1646 = vmul.f32 %v852, %v1454
      %v1647 = vmul.f32 %v1201, %v1455
      %v1648 = vmul.f32 %v854, %v1456
      %v1649 = vmul.f32 %v856, %v1457
      %v1650 = vmul.f32 %v1204, %v1458
      %v1651 = vmul.f32 %v860, %v1459
      %v1652 = vmul.f32 %v862, %v1460
      %v1653 = vmul.f32 %v1209, %v1461
      %v1654 = vmul.f32 %v864, %v1462
      %v1655 = vmul.f32 %v866, %v1463
      %v1656 = vmul.f32 %v1212, %v1464
      %v1657 = vmul.f32 %v870, %v1465
      %v1658 = vmul.f32 %v872, %v1466
      %v1659 = vmul.f32 %v1217, %v1467
      %v1660 = vmul.f32 %v874, %v1468
      %v1661 = vmul.f32 %v876, %v1469
      %v1662 = vmul.f32 %v1220, %v1470
      %v1663 = vmul.f32 %v880, %v1471
      %v1664 = vmul.f32 %v882, %v1472
      %v1665 = vmul.f32 %v1225, %v1473
      %v1666 = vmul.f32 %v884, %v1474
      %v1667 = vmul.f32 %v886, %v1475
      %v1668 = vmul.f32 %v1228, %v1476
      %v1669 = vmul.f32 %v890, %v1477
      %v1670 = vmul.f32 %v892, %v1478
      %v1671 = vmul.f32 %v1233, %v1479
      %v1672 = vmul.f32 %v894, %v1480
      %v1673 = vmul.f32 %v896, %v1481
      %v1674 = vmul.f32 %v1236, %v1482
      %v1675 = vmul.f32 %v900, %v1483
      %v1676 = vmul.f32 %v902, %v1484
      %v1677 = vmul.f32 %v1241, %v1485
      %v1678 = vmul.f32 %v904, %v1486
      %v1679 = vmul.f32 %v906, %v1487
      %v1680 = vmul.f32 %v1244, %v1488
      %v1681 = vmul.f32 %v910, %v1489
      %v1682 = vmul.f32 %v912, %v1490
      %v1683 = vmul.f32 %v1249, %v1491
      %v1684 = vmul.f32 %v914, %v1492
      %v1685 = vmul.f32 %v916, %v1493
      %v1686 = vmul.f32 %v1252, %v1494
      %v1687 = vmul.f32 %v920, %v1495
      %v1688 = vmul.f32 %v922, %v1496
      %v1689 = vmul.f32 %v1257, %v1497
      %v1690 = vmul.f32 %v924, %v1498
      %v1691 = vmul.f32 %v926, %v1499
      %v1692 = vmul.f32 %v1260, %v1500
      %v1693 = vmul.f32 %v930, %v1501
      %v1694 = vmul.f32 %v932, %v1502
      %v1695 = vmul.f32 %v1265, %v1503
      %v1696 = vmul.f32 %v934, %v1504
      %v1697 = vmul.f32 %v936, %v1505
      %v1698 = vmul.f32 %v1268, %v1506
      %v1699 = vmul.f32 %v940, %v1507
      %v1700 = vmul.f32 %v942, %v1508
      %v1701 = vmul.f32 %v1273, %v1509
      %v1702 = vmul.f32 %v944, %v1510
      %v1703 = vmul.f32 %v946, %v1511
      %v1704 = vmul.f32 %v1276, %v1512
      %v1705 = vmul.f32 %v950, %v1513
      %v1706 = vmul.f32 %v952, %v1514
      %v1707 = vmul.f32 %v1281, %v1515
      %v1708 = vmul.f32 %v954, %v1516
      %v1709 = vmul.f32 %v956, %v1517
      %v1710 = vmul.f32 %v1284, %v1518
      %v1711 = vmul.f32 %v960, %v1519
      %v1712 = vmul.f32 %v962, %v1520
      %v1713 = vmul.f32 %v1289, %v1521
      %v1714 = vmul.f32 %v964, %v1522
      %v1715 = vmul.f32 %v966, %v1523
      %v1716 = vmul.f32 %v1292, %v1524
      %v1717 = vmul.f32 %v970, %v1525
      %v1718 = vmul.f32 %v972, %v1526
      %v1719 = vmul.f32 %v1297, %v1527
      %v1720 = vmul.f32 %v974, %v1528
      %v1721 = vmul.f32 %v976, %v1529
      %v1722 = vmul.f32 %v1300, %v1530
      %v1723 = vmul.f32 %v980, %v1531
      %v1724 = vmul.f32 %v982, %v1532
      %v1725 = vmul.f32 %v1305, %v1533
      %v1726 = vmul.f32 %v984, %v1534
      %v1727 = vmul.f32 %v986, %v1535
      %v1728 = vmul.f32 %v1308, %v1536
      %v1729 = vmul.f32 %v990, %v1537
      %v1730 = vmul.f32 %v992, %v1538
      %v1731 = vmul.f32 %v1313, %v1539
      %v1732 = vmul.f32 %v994, %v1540
      %v1733 = vmul.f32 %v996, %v1541
      %v1734 = vmul.f32 %v1316, %v1542
      %v1735 = vmul.f32 %v1000, %v1543
      %v1736 = vmul.f32 %v1002, %v1544
      %v1737 = vmul.f32 %v1321, %v1545
      %v1738 = vmul.f32 %v1004, %v1546
      %v1739 = vmul.f32 %v1006, %v1547
      %v1740 = vmul.f32 %v1324, %v1548
      %v1741 = vmul.f32 %v1010, %v1549
      %v1742 = vmul.f32 %v1012, %v1550
      %v1743 = vmul.f32 %v1329, %v1551
      %v1744 = vmul.f32 %v1014, %v1552
      %v1745 = vmul.f32 %v1016, %v1553
      %v1746 = vmul.f32 %v1332, %v1554
      %v1747 = vmul.f32 %v1020, %v1555
      %v1748 = vmul.f32 %v1022, %v1556
      %v1749 = vmul.f32 %v1337, %v1557
      %v1750 = vmul.f32 %v1024, %v1558
      %v1751 = vmul.f32 %v1026, %v1559
      %v1752 = vmul.f32 %v1340, %v1560
      %v1753 = vmul.f32 %v1030, %v1561
      %v1754 = vmul.f32 %v1032, %v1562
      %v1755 = vmul.f32 %v1345, %v1563
      %v1756 = vmul.f32 %v1034, %v1564
      %v1757 = vmul.f32 %v1036, %v1565
      %v1758 = vmul.f32 %v1348, %v1566
      %v1759 = vmul.f32 %v1040, %v1567
      %v1760 = vmul.f32 %v1042, %v1568
      %v1761 = vmul.f32 %v1353, %v1569
      %v1762 = vmul.f32 %v1044, %v1570
      %v1763 = vmul.f32 %v1046, %v1571
      %v1764 = vmul.f32 %v1356, %v1572
      %v1765 = vmul.f32 %v1050, %v1573
      %v1766 = vmul.f32 %v1052, %v1574
      %v1767 = vmul.f32 %v1361, %v1575
      %v1768 = vmul.f32 %v1054, %v1576
      %v1769 = vmul.f32 %v1056, %v1577
      %v1770 = vmul.f32 %v1364, %v1578
      %v1771 = vmul.f32 %v1060, %v1579
      %v1772 = vmul.f32 %v1062, %v1580
      %v1773 = vmul.f32 %v1369, %v1581
      %v1774 = vmul.f32 %v1064, %v1582
      %v1775 = vmul.f32 %v1066, %v1583
      %v1776 = vmul.f32 %v1372, %v1584
      %v1777 = vmul.f32 %v1070, %v1585
      %v1778 = vmul.f32 %v1072, %v1586
      %v1779 = vmul.f32 %v1377, %v1587
      %v1780 = vmul.f32 %v1074, %v1588
      %v1781 = vmul.f32 %v1076, %v1589
      %v1782 = vmul.f32 %v1380, %v1590
      %v1783 = vmul.f32 %v1080, %v1591
      %v1784 = vmul.f32 %v1082, %v1592
      %v1785 = vmul.f32 %v1385, %v1593
      %v1786 = vmul.f32 %v1084, %v1594
      %v1787 = vmul.f32 %v1086, %v1595
      %v1788 = vmul.f32 %v1388, %v1596
      %v1789 = vmul.f32 %v1090, %v1597
      %v1790 = vmul.f32 %v1092, %v1598
      %v1791 = vmul.f32 %v1393, %v1599
      %v1792 = vmul.f32 %v1094, %v1600
      %v1793 = vmul.f32 %v1096, %v1601
      %v1794 = vmul.f32 %v1396, %v1602
      %v1795 = vmul.f32 %v1100, %v1603
      %v1796 = vmul.f32 %v1102, %v1604
      %v1797 = vmul.f32 %v1401, %v1605
      %v1798 = vmul.f32 %v1104, %v1606
      %v1799 = vmul.f32 %v1106, %v1607
      %v1800 = vmul.f32 %v1404, %v1608
      %v1801 = vmul.f32 %v1110, %v1609
      %v1802 = vmul.f32 %v1112, %v1610
      %v1803 = vmul.f32 %v1409, %v1611
      %v1804 = vmul.f32 %v1114, %v1612
      %v1805 = vmul.f32 %v1116, %v1613
      %v1806 = vmul.f32 %v1412, %v1614
      %v1807 = vmul.f32 %v1120, %v1615
      %v1808 = vmul.f32 %v1122, %v1616
      %v1809 = vmul.f32 %v1417, %v1617
      %v1810 = vmul.f32 %v1124, %v1618
      %v1811 = vmul.f32 %v1126, %v1619
      %v1812 = vmul.f32 %v1420, %v1620
      %v1813 = vmul.f32 %v1130, %v1621
      %v1814 = vmul.f32 %v1132, %v1622
      %v1815 = vmul.f32 %v1425, %v1623
      %v1816 = vmul.f32 %v1134, %v1624
      %v1817 = vmul.f32 %v1136, %v1625
      %v1818 = vmul.f32 %v1428, %v1626
      %v1819 = vmul.f32 %v1140, %v1627
      %v1820 = vmul.f32 %v1142, %v1628
      %v1821 = vmul.f32 %v1433, %v1629
      %v1822 = vmul.f32 %v1144, %v1630
      %v1823 = vmul.f32 %v1146, %v1631
      %v1824 = vmul.f32 %v1436, %v1632
      %v1825 = vmul.f32 %v1150, %v1633
      %v1826 = vmul.f32 %v1152, %v1634
      %v1827 = vmul.f32 %v1441, %v1635
      %v1828 = vmul.f32 %v1154, %v1636
      %v1829 = vmul.f32 %v1156, %v1637
      %v1830 = vmul.f32 %v1444, %v1638
      %v1831 = vmul.f32 %v1639, 0.044715
      %v1832 = vmul.f32 %v1640, 0.044715
      %v1833 = vmul.f32 %v1641, 0.044715
      %v1834 = vmul.f32 %v1642, 0.044715
      %v1835 = vmul.f32 %v1643, 0.044715
      %v1836 = vmul.f32 %v1644, 0.044715
      %v1837 = vmul.f32 %v1645, 0.044715
      %v1838 = vmul.f32 %v1646, 0.044715
      %v1839 = vmul.f32 %v1647, 0.044715
      %v1840 = vmul.f32 %v1648, 0.044715
      %v1841 = vmul.f32 %v1649, 0.044715
      %v1842 = vmul.f32 %v1650, 0.044715
      %v1843 = vmul.f32 %v1651, 0.044715
      %v1844 = vmul.f32 %v1652, 0.044715
      %v1845 = vmul.f32 %v1653, 0.044715
      %v1846 = vmul.f32 %v1654, 0.044715
      %v1847 = vmul.f32 %v1655, 0.044715
      %v1848 = vmul.f32 %v1656, 0.044715
      %v1849 = vmul.f32 %v1657, 0.044715
      %v1850 = vmul.f32 %v1658, 0.044715
      %v1851 = vmul.f32 %v1659, 0.044715
      %v1852 = vmul.f32 %v1660, 0.044715
      %v1853 = vmul.f32 %v1661, 0.044715
      %v1854 = vmul.f32 %v1662, 0.044715
      %v1855 = vmul.f32 %v1663, 0.044715
      %v1856 = vmul.f32 %v1664, 0.044715
      %v1857 = vmul.f32 %v1665, 0.044715
      %v1858 = vmul.f32 %v1666, 0.044715
      %v1859 = vmul.f32 %v1667, 0.044715
      %v1860 = vmul.f32 %v1668, 0.044715
      %v1861 = vmul.f32 %v1669, 0.044715
      %v1862 = vmul.f32 %v1670, 0.044715
      %v1863 = vmul.f32 %v1671, 0.044715
      %v1864 = vmul.f32 %v1672, 0.044715
      %v1865 = vmul.f32 %v1673, 0.044715
      %v1866 = vmul.f32 %v1674, 0.044715
      %v1867 = vmul.f32 %v1675, 0.044715
      %v1868 = vmul.f32 %v1676, 0.044715
      %v1869 = vmul.f32 %v1677, 0.044715
      %v1870 = vmul.f32 %v1678, 0.044715
      %v1871 = vmul.f32 %v1679, 0.044715
      %v1872 = vmul.f32 %v1680, 0.044715
      %v1873 = vmul.f32 %v1681, 0.044715
      %v1874 = vmul.f32 %v1682, 0.044715
      %v1875 = vmul.f32 %v1683, 0.044715
      %v1876 = vmul.f32 %v1684, 0.044715
      %v1877 = vmul.f32 %v1685, 0.044715
      %v1878 = vmul.f32 %v1686, 0.044715
      %v1879 = vmul.f32 %v1687, 0.044715
      %v1880 = vmul.f32 %v1688, 0.044715
      %v1881 = vmul.f32 %v1689, 0.044715
      %v1882 = vmul.f32 %v1690, 0.044715
      %v1883 = vmul.f32 %v1691, 0.044715
      %v1884 = vmul.f32 %v1692, 0.044715
      %v1885 = vmul.f32 %v1693, 0.044715
      %v1886 = vmul.f32 %v1694, 0.044715
      %v1887 = vmul.f32 %v1695, 0.044715
      %v1888 = vmul.f32 %v1696, 0.044715
      %v1889 = vmul.f32 %v1697, 0.044715
      %v1890 = vmul.f32 %v1698, 0.044715
      %v1891 = vmul.f32 %v1699, 0.044715
      %v1892 = vmul.f32 %v1700, 0.044715
      %v1893 = vmul.f32 %v1701, 0.044715
      %v1894 = vmul.f32 %v1702, 0.044715
      %v1895 = vmul.f32 %v1703, 0.044715
      %v1896 = vmul.f32 %v1704, 0.044715
      %v1897 = vmul.f32 %v1705, 0.044715
      %v1898 = vmul.f32 %v1706, 0.044715
      %v1899 = vmul.f32 %v1707, 0.044715
      %v1900 = vmul.f32 %v1708, 0.044715
      %v1901 = vmul.f32 %v1709, 0.044715
      %v1902 = vmul.f32 %v1710, 0.044715
      %v1903 = vmul.f32 %v1711, 0.044715
      %v1904 = vmul.f32 %v1712, 0.044715
      %v1905 = vmul.f32 %v1713, 0.044715
      %v1906 = vmul.f32 %v1714, 0.044715
      %v1907 = vmul.f32 %v1715, 0.044715
      %v1908 = vmul.f32 %v1716, 0.044715
      %v1909 = vmul.f32 %v1717, 0.044715
      %v1910 = vmul.f32 %v1718, 0.044715
      %v1911 = vmul.f32 %v1719, 0.044715
      %v1912 = vmul.f32 %v1720, 0.044715
      %v1913 = vmul.f32 %v1721, 0.044715
      %v1914 = vmul.f32 %v1722, 0.044715
      %v1915 = vmul.f32 %v1723, 0.044715
      %v1916 = vmul.f32 %v1724, 0.044715
      %v1917 = vmul.f32 %v1725, 0.044715
      %v1918 = vmul.f32 %v1726, 0.044715
      %v1919 = vmul.f32 %v1727, 0.044715
      %v1920 = vmul.f32 %v1728, 0.044715
      %v1921 = vmul.f32 %v1729, 0.044715
      %v1922 = vmul.f32 %v1730, 0.044715
      %v1923 = vmul.f32 %v1731, 0.044715
      %v1924 = vmul.f32 %v1732, 0.044715
      %v1925 = vmul.f32 %v1733, 0.044715
      %v1926 = vmul.f32 %v1734, 0.044715
      %v1927 = vmul.f32 %v1735, 0.044715
      %v1928 = vmul.f32 %v1736, 0.044715
      %v1929 = vmul.f32 %v1737, 0.044715
      %v1930 = vmul.f32 %v1738, 0.044715
      %v1931 = vmul.f32 %v1739, 0.044715
      %v1932 = vmul.f32 %v1740, 0.044715
      %v1933 = vmul.f32 %v1741, 0.044715
      %v1934 = vmul.f32 %v1742, 0.044715
      %v1935 = vmul.f32 %v1743, 0.044715
      %v1936 = vmul.f32 %v1744, 0.044715
      %v1937 = vmul.f32 %v1745, 0.044715
      %v1938 = vmul.f32 %v1746, 0.044715
      %v1939 = vmul.f32 %v1747, 0.044715
      %v1940 = vmul.f32 %v1748, 0.044715
      %v1941 = vmul.f32 %v1749, 0.044715
      %v1942 = vmul.f32 %v1750, 0.044715
      %v1943 = vmul.f32 %v1751, 0.044715
      %v1944 = vmul.f32 %v1752, 0.044715
      %v1945 = vmul.f32 %v1753, 0.044715
      %v1946 = vmul.f32 %v1754, 0.044715
      %v1947 = vmul.f32 %v1755, 0.044715
      %v1948 = vmul.f32 %v1756, 0.044715
      %v1949 = vmul.f32 %v1757, 0.044715
      %v1950 = vmul.f32 %v1758, 0.044715
      %v1951 = vmul.f32 %v1759, 0.044715
      %v1952 = vmul.f32 %v1760, 0.044715
      %v1953 = vmul.f32 %v1761, 0.044715
      %v1954 = vmul.f32 %v1762, 0.044715
      %v1955 = vmul.f32 %v1763, 0.044715
      %v1956 = vmul.f32 %v1764, 0.044715
      %v1957 = vmul.f32 %v1765, 0.044715
      %v1958 = vmul.f32 %v1766, 0.044715
      %v1959 = vmul.f32 %v1767, 0.044715
      %v1960 = vmul.f32 %v1768, 0.044715
      %v1961 = vmul.f32 %v1769, 0.044715
      %v1962 = vmul.f32 %v1770, 0.044715
      %v1963 = vmul.f32 %v1771, 0.044715
      %v1964 = vmul.f32 %v1772, 0.044715
      %v1965 = vmul.f32 %v1773, 0.044715
      %v1966 = vmul.f32 %v1774, 0.044715
      %v1967 = vmul.f32 %v1775, 0.044715
      %v1968 = vmul.f32 %v1776, 0.044715
      %v1969 = vmul.f32 %v1777, 0.044715
      %v1970 = vmul.f32 %v1778, 0.044715
      %v1971 = vmul.f32 %v1779, 0.044715
      %v1972 = vmul.f32 %v1780, 0.044715
      %v1973 = vmul.f32 %v1781, 0.044715
      %v1974 = vmul.f32 %v1782, 0.044715
      %v1975 = vmul.f32 %v1783, 0.044715
      %v1976 = vmul.f32 %v1784, 0.044715
      %v1977 = vmul.f32 %v1785, 0.044715
      %v1978 = vmul.f32 %v1786, 0.044715
      %v1979 = vmul.f32 %v1787, 0.044715
      %v1980 = vmul.f32 %v1788, 0.044715
      %v1981 = vmul.f32 %v1789, 0.044715
      %v1982 = vmul.f32 %v1790, 0.044715
      %v1983 = vmul.f32 %v1791, 0.044715
      %v1984 = vmul.f32 %v1792, 0.044715
      %v1985 = vmul.f32 %v1793, 0.044715
      %v1986 = vmul.f32 %v1794, 0.044715
      %v1987 = vmul.f32 %v1795, 0.044715
      %v1988 = vmul.f32 %v1796, 0.044715
      %v1989 = vmul.f32 %v1797, 0.044715
      %v1990 = vmul.f32 %v1798, 0.044715
      %v1991 = vmul.f32 %v1799, 0.044715
      %v1992 = vmul.f32 %v1800, 0.044715
      %v1993 = vmul.f32 %v1801, 0.044715
      %v1994 = vmul.f32 %v1802, 0.044715
      %v1995 = vmul.f32 %v1803, 0.044715
      %v1996 = vmul.f32 %v1804, 0.044715
      %v1997 = vmul.f32 %v1805, 0.044715
      %v1998 = vmul.f32 %v1806, 0.044715
      %v1999 = vmul.f32 %v1807, 0.044715
      %v2000 = vmul.f32 %v1808, 0.044715
      %v2001 = vmul.f32 %v1809, 0.044715
      %v2002 = vmul.f32 %v1810, 0.044715
      %v2003 = vmul.f32 %v1811, 0.044715
      %v2004 = vmul.f32 %v1812, 0.044715
      %v2005 = vmul.f32 %v1813, 0.044715
      %v2006 = vmul.f32 %v1814, 0.044715
      %v2007 = vmul.f32 %v1815, 0.044715
      %v2008 = vmul.f32 %v1816, 0.044715
      %v2009 = vmul.f32 %v1817, 0.044715
      %v2010 = vmul.f32 %v1818, 0.044715
      %v2011 = vmul.f32 %v1819, 0.044715
      %v2012 = vmul.f32 %v1820, 0.044715
      %v2013 = vmul.f32 %v1821, 0.044715
      %v2014 = vmul.f32 %v1822, 0.044715
      %v2015 = vmul.f32 %v1823, 0.044715
      %v2016 = vmul.f32 %v1824, 0.044715
      %v2017 = vmul.f32 %v1825, 0.044715
      %v2018 = vmul.f32 %v1826, 0.044715
      %v2019 = vmul.f32 %v1827, 0.044715
      %v2020 = vmul.f32 %v1828, 0.044715
      %v2021 = vmul.f32 %v1829, 0.044715
      %v2022 = vmul.f32 %v1830, 0.044715
      %v2023 = vadd.f32 %v840, %v1831
      %v2024 = vadd.f32 %v842, %v1832
      %v2025 = vadd.f32 %v1193, %v1833
      %v2026 = vadd.f32 %v844, %v1834
      %v2027 = vadd.f32 %v846, %v1835
      %v2028 = vadd.f32 %v1196, %v1836
      %v2029 = vadd.f32 %v850, %v1837
      %v2030 = vadd.f32 %v852, %v1838
      %v2031 = vadd.f32 %v1201, %v1839
      %v2032 = vadd.f32 %v854, %v1840
      %v2033 = vadd.f32 %v856, %v1841
      %v2034 = vadd.f32 %v1204, %v1842
      %v2035 = vadd.f32 %v860, %v1843
      %v2036 = vadd.f32 %v862, %v1844
      %v2037 = vadd.f32 %v1209, %v1845
      %v2038 = vadd.f32 %v864, %v1846
      %v2039 = vadd.f32 %v866, %v1847
      %v2040 = vadd.f32 %v1212, %v1848
      %v2041 = vadd.f32 %v870, %v1849
      %v2042 = vadd.f32 %v872, %v1850
      %v2043 = vadd.f32 %v1217, %v1851
      %v2044 = vadd.f32 %v874, %v1852
      %v2045 = vadd.f32 %v876, %v1853
      %v2046 = vadd.f32 %v1220, %v1854
      %v2047 = vadd.f32 %v880, %v1855
      %v2048 = vadd.f32 %v882, %v1856
      %v2049 = vadd.f32 %v1225, %v1857
      %v2050 = vadd.f32 %v884, %v1858
      %v2051 = vadd.f32 %v886, %v1859
      %v2052 = vadd.f32 %v1228, %v1860
      %v2053 = vadd.f32 %v890, %v1861
      %v2054 = vadd.f32 %v892, %v1862
      %v2055 = vadd.f32 %v1233, %v1863
      %v2056 = vadd.f32 %v894, %v1864
      %v2057 = vadd.f32 %v896, %v1865
      %v2058 = vadd.f32 %v1236, %v1866
      %v2059 = vadd.f32 %v900, %v1867
      %v2060 = vadd.f32 %v902, %v1868
      %v2061 = vadd.f32 %v1241, %v1869
      %v2062 = vadd.f32 %v904, %v1870
      %v2063 = vadd.f32 %v906, %v1871
      %v2064 = vadd.f32 %v1244, %v1872
      %v2065 = vadd.f32 %v910, %v1873
      %v2066 = vadd.f32 %v912, %v1874
      %v2067 = vadd.f32 %v1249, %v1875
      %v2068 = vadd.f32 %v914, %v1876
      %v2069 = vadd.f32 %v916, %v1877
      %v2070 = vadd.f32 %v1252, %v1878
      %v2071 = vadd.f32 %v920, %v1879
      %v2072 = vadd.f32 %v922, %v1880
      %v2073 = vadd.f32 %v1257, %v1881
      %v2074 = vadd.f32 %v924, %v1882
      %v2075 = vadd.f32 %v926, %v1883
      %v2076 = vadd.f32 %v1260, %v1884
      %v2077 = vadd.f32 %v930, %v1885
      %v2078 = vadd.f32 %v932, %v1886
      %v2079 = vadd.f32 %v1265, %v1887
      %v2080 = vadd.f32 %v934, %v1888
      %v2081 = vadd.f32 %v936, %v1889
      %v2082 = vadd.f32 %v1268, %v1890
      %v2083 = vadd.f32 %v940, %v1891
      %v2084 = vadd.f32 %v942, %v1892
      %v2085 = vadd.f32 %v1273, %v1893
      %v2086 = vadd.f32 %v944, %v1894
      %v2087 = vadd.f32 %v946, %v1895
      %v2088 = vadd.f32 %v1276, %v1896
      %v2089 = vadd.f32 %v950, %v1897
      %v2090 = vadd.f32 %v952, %v1898
      %v2091 = vadd.f32 %v1281, %v1899
      %v2092 = vadd.f32 %v954, %v1900
      %v2093 = vadd.f32 %v956, %v1901
      %v2094 = vadd.f32 %v1284, %v1902
      %v2095 = vadd.f32 %v960, %v1903
      %v2096 = vadd.f32 %v962, %v1904
      %v2097 = vadd.f32 %v1289, %v1905
      %v2098 = vadd.f32 %v964, %v1906
      %v2099 = vadd.f32 %v966, %v1907
      %v2100 = vadd.f32 %v1292, %v1908
      %v2101 = vadd.f32 %v970, %v1909
      %v2102 = vadd.f32 %v972, %v1910
      %v2103 = vadd.f32 %v1297, %v1911
      %v2104 = vadd.f32 %v974, %v1912
      %v2105 = vadd.f32 %v976, %v1913
      %v2106 = vadd.f32 %v1300, %v1914
      %v2107 = vadd.f32 %v980, %v1915
      %v2108 = vadd.f32 %v982, %v1916
      %v2109 = vadd.f32 %v1305, %v1917
      %v2110 = vadd.f32 %v984, %v1918
      %v2111 = vadd.f32 %v986, %v1919
      %v2112 = vadd.f32 %v1308, %v1920
      %v2113 = vadd.f32 %v990, %v1921
      %v2114 = vadd.f32 %v992, %v1922
      %v2115 = vadd.f32 %v1313, %v1923
      %v2116 = vadd.f32 %v994, %v1924
      %v2117 = vadd.f32 %v996, %v1925
      %v2118 = vadd.f32 %v1316, %v1926
      %v2119 = vadd.f32 %v1000, %v1927
      %v2120 = vadd.f32 %v1002, %v1928
      %v2121 = vadd.f32 %v1321, %v1929
      %v2122 = vadd.f32 %v1004, %v1930
      %v2123 = vadd.f32 %v1006, %v1931
      %v2124 = vadd.f32 %v1324, %v1932
      %v2125 = vadd.f32 %v1010, %v1933
      %v2126 = vadd.f32 %v1012, %v1934
      %v2127 = vadd.f32 %v1329, %v1935
      %v2128 = vadd.f32 %v1014, %v1936
      %v2129 = vadd.f32 %v1016, %v1937
      %v2130 = vadd.f32 %v1332, %v1938
      %v2131 = vadd.f32 %v1020, %v1939
      %v2132 = vadd.f32 %v1022, %v1940
      %v2133 = vadd.f32 %v1337, %v1941
      %v2134 = vadd.f32 %v1024, %v1942
      %v2135 = vadd.f32 %v1026, %v1943
      %v2136 = vadd.f32 %v1340, %v1944
      %v2137 = vadd.f32 %v1030, %v1945
      %v2138 = vadd.f32 %v1032, %v1946
      %v2139 = vadd.f32 %v1345, %v1947
      %v2140 = vadd.f32 %v1034, %v1948
      %v2141 = vadd.f32 %v1036, %v1949
      %v2142 = vadd.f32 %v1348, %v1950
      %v2143 = vadd.f32 %v1040, %v1951
      %v2144 = vadd.f32 %v1042, %v1952
      %v2145 = vadd.f32 %v1353, %v1953
      %v2146 = vadd.f32 %v1044, %v1954
      %v2147 = vadd.f32 %v1046, %v1955
      %v2148 = vadd.f32 %v1356, %v1956
      %v2149 = vadd.f32 %v1050, %v1957
      %v2150 = vadd.f32 %v1052, %v1958
      %v2151 = vadd.f32 %v1361, %v1959
      %v2152 = vadd.f32 %v1054, %v1960
      %v2153 = vadd.f32 %v1056, %v1961
      %v2154 = vadd.f32 %v1364, %v1962
      %v2155 = vadd.f32 %v1060, %v1963
      %v2156 = vadd.f32 %v1062, %v1964
      %v2157 = vadd.f32 %v1369, %v1965
      %v2158 = vadd.f32 %v1064, %v1966
      %v2159 = vadd.f32 %v1066, %v1967
      %v2160 = vadd.f32 %v1372, %v1968
      %v2161 = vadd.f32 %v1070, %v1969
      %v2162 = vadd.f32 %v1072, %v1970
      %v2163 = vadd.f32 %v1377, %v1971
      %v2164 = vadd.f32 %v1074, %v1972
      %v2165 = vadd.f32 %v1076, %v1973
      %v2166 = vadd.f32 %v1380, %v1974
      %v2167 = vadd.f32 %v1080, %v1975
      %v2168 = vadd.f32 %v1082, %v1976
      %v2169 = vadd.f32 %v1385, %v1977
      %v2170 = vadd.f32 %v1084, %v1978
      %v2171 = vadd.f32 %v1086, %v1979
      %v2172 = vadd.f32 %v1388, %v1980
      %v2173 = vadd.f32 %v1090, %v1981
      %v2174 = vadd.f32 %v1092, %v1982
      %v2175 = vadd.f32 %v1393, %v1983
      %v2176 = vadd.f32 %v1094, %v1984
      %v2177 = vadd.f32 %v1096, %v1985
      %v2178 = vadd.f32 %v1396, %v1986
      %v2179 = vadd.f32 %v1100, %v1987
      %v2180 = vadd.f32 %v1102, %v1988
      %v2181 = vadd.f32 %v1401, %v1989
      %v2182 = vadd.f32 %v1104, %v1990
      %v2183 = vadd.f32 %v1106, %v1991
      %v2184 = vadd.f32 %v1404, %v1992
      %v2185 = vadd.f32 %v1110, %v1993
      %v2186 = vadd.f32 %v1112, %v1994
      %v2187 = vadd.f32 %v1409, %v1995
      %v2188 = vadd.f32 %v1114, %v1996
      %v2189 = vadd.f32 %v1116, %v1997
      %v2190 = vadd.f32 %v1412, %v1998
      %v2191 = vadd.f32 %v1120, %v1999
      %v2192 = vadd.f32 %v1122, %v2000
      %v2193 = vadd.f32 %v1417, %v2001
      %v2194 = vadd.f32 %v1124, %v2002
      %v2195 = vadd.f32 %v1126, %v2003
      %v2196 = vadd.f32 %v1420, %v2004
      %v2197 = vadd.f32 %v1130, %v2005
      %v2198 = vadd.f32 %v1132, %v2006
      %v2199 = vadd.f32 %v1425, %v2007
      %v2200 = vadd.f32 %v1134, %v2008
      %v2201 = vadd.f32 %v1136, %v2009
      %v2202 = vadd.f32 %v1428, %v2010
      %v2203 = vadd.f32 %v1140, %v2011
      %v2204 = vadd.f32 %v1142, %v2012
      %v2205 = vadd.f32 %v1433, %v2013
      %v2206 = vadd.f32 %v1144, %v2014
      %v2207 = vadd.f32 %v1146, %v2015
      %v2208 = vadd.f32 %v1436, %v2016
      %v2209 = vadd.f32 %v1150, %v2017
      %v2210 = vadd.f32 %v1152, %v2018
      %v2211 = vadd.f32 %v1441, %v2019
      %v2212 = vadd.f32 %v1154, %v2020
      %v2213 = vadd.f32 %v1156, %v2021
      %v2214 = vadd.f32 %v1444, %v2022
      %v2215 = vmul.f32 %v2023, 0.7978846
      %v2216 = vmul.f32 %v2024, 0.7978846
      %v2217 = vmul.f32 %v2025, 0.7978846
      %v2218 = vmul.f32 %v2026, 0.7978846
      %v2219 = vmul.f32 %v2027, 0.7978846
      %v2220 = vmul.f32 %v2028, 0.7978846
      %v2221 = vmul.f32 %v2029, 0.7978846
      %v2222 = vmul.f32 %v2030, 0.7978846
      %v2223 = vmul.f32 %v2031, 0.7978846
      %v2224 = vmul.f32 %v2032, 0.7978846
      %v2225 = vmul.f32 %v2033, 0.7978846
      %v2226 = vmul.f32 %v2034, 0.7978846
      %v2227 = vmul.f32 %v2035, 0.7978846
      %v2228 = vmul.f32 %v2036, 0.7978846
      %v2229 = vmul.f32 %v2037, 0.7978846
      %v2230 = vmul.f32 %v2038, 0.7978846
      %v2231 = vmul.f32 %v2039, 0.7978846
      %v2232 = vmul.f32 %v2040, 0.7978846
      %v2233 = vmul.f32 %v2041, 0.7978846
      %v2234 = vmul.f32 %v2042, 0.7978846
      %v2235 = vmul.f32 %v2043, 0.7978846
      %v2236 = vmul.f32 %v2044, 0.7978846
      %v2237 = vmul.f32 %v2045, 0.7978846
      %v2238 = vmul.f32 %v2046, 0.7978846
      %v2239 = vmul.f32 %v2047, 0.7978846
      %v2240 = vmul.f32 %v2048, 0.7978846
      %v2241 = vmul.f32 %v2049, 0.7978846
      %v2242 = vmul.f32 %v2050, 0.7978846
      %v2243 = vmul.f32 %v2051, 0.7978846
      %v2244 = vmul.f32 %v2052, 0.7978846
      %v2245 = vmul.f32 %v2053, 0.7978846
      %v2246 = vmul.f32 %v2054, 0.7978846
      %v2247 = vmul.f32 %v2055, 0.7978846
      %v2248 = vmul.f32 %v2056, 0.7978846
      %v2249 = vmul.f32 %v2057, 0.7978846
      %v2250 = vmul.f32 %v2058, 0.7978846
      %v2251 = vmul.f32 %v2059, 0.7978846
      %v2252 = vmul.f32 %v2060, 0.7978846
      %v2253 = vmul.f32 %v2061, 0.7978846
      %v2254 = vmul.f32 %v2062, 0.7978846
      %v2255 = vmul.f32 %v2063, 0.7978846
      %v2256 = vmul.f32 %v2064, 0.7978846
      %v2257 = vmul.f32 %v2065, 0.7978846
      %v2258 = vmul.f32 %v2066, 0.7978846
      %v2259 = vmul.f32 %v2067, 0.7978846
      %v2260 = vmul.f32 %v2068, 0.7978846
      %v2261 = vmul.f32 %v2069, 0.7978846
      %v2262 = vmul.f32 %v2070, 0.7978846
      %v2263 = vmul.f32 %v2071, 0.7978846
      %v2264 = vmul.f32 %v2072, 0.7978846
      %v2265 = vmul.f32 %v2073, 0.7978846
      %v2266 = vmul.f32 %v2074, 0.7978846
      %v2267 = vmul.f32 %v2075, 0.7978846
      %v2268 = vmul.f32 %v2076, 0.7978846
      %v2269 = vmul.f32 %v2077, 0.7978846
      %v2270 = vmul.f32 %v2078, 0.7978846
      %v2271 = vmul.f32 %v2079, 0.7978846
      %v2272 = vmul.f32 %v2080, 0.7978846
      %v2273 = vmul.f32 %v2081, 0.7978846
      %v2274 = vmul.f32 %v2082, 0.7978846
      %v2275 = vmul.f32 %v2083, 0.7978846
      %v2276 = vmul.f32 %v2084, 0.7978846
      %v2277 = vmul.f32 %v2085, 0.7978846
      %v2278 = vmul.f32 %v2086, 0.7978846
      %v2279 = vmul.f32 %v2087, 0.7978846
      %v2280 = vmul.f32 %v2088, 0.7978846
      %v2281 = vmul.f32 %v2089, 0.7978846
      %v2282 = vmul.f32 %v2090, 0.7978846
      %v2283 = vmul.f32 %v2091, 0.7978846
      %v2284 = vmul.f32 %v2092, 0.7978846
      %v2285 = vmul.f32 %v2093, 0.7978846
      %v2286 = vmul.f32 %v2094, 0.7978846
      %v2287 = vmul.f32 %v2095, 0.7978846
      %v2288 = vmul.f32 %v2096, 0.7978846
      %v2289 = vmul.f32 %v2097, 0.7978846
      %v2290 = vmul.f32 %v2098, 0.7978846
      %v2291 = vmul.f32 %v2099, 0.7978846
      %v2292 = vmul.f32 %v2100, 0.7978846
      %v2293 = vmul.f32 %v2101, 0.7978846
      %v2294 = vmul.f32 %v2102, 0.7978846
      %v2295 = vmul.f32 %v2103, 0.7978846
      %v2296 = vmul.f32 %v2104, 0.7978846
      %v2297 = vmul.f32 %v2105, 0.7978846
      %v2298 = vmul.f32 %v2106, 0.7978846
      %v2299 = vmul.f32 %v2107, 0.7978846
      %v2300 = vmul.f32 %v2108, 0.7978846
      %v2301 = vmul.f32 %v2109, 0.7978846
      %v2302 = vmul.f32 %v2110, 0.7978846
      %v2303 = vmul.f32 %v2111, 0.7978846
      %v2304 = vmul.f32 %v2112, 0.7978846
      %v2305 = vmul.f32 %v2113, 0.7978846
      %v2306 = vmul.f32 %v2114, 0.7978846
      %v2307 = vmul.f32 %v2115, 0.7978846
      %v2308 = vmul.f32 %v2116, 0.7978846
      %v2309 = vmul.f32 %v2117, 0.7978846
      %v2310 = vmul.f32 %v2118, 0.7978846
      %v2311 = vmul.f32 %v2119, 0.7978846
      %v2312 = vmul.f32 %v2120, 0.7978846
      %v2313 = vmul.f32 %v2121, 0.7978846
      %v2314 = vmul.f32 %v2122, 0.7978846
      %v2315 = vmul.f32 %v2123, 0.7978846
      %v2316 = vmul.f32 %v2124, 0.7978846
      %v2317 = vmul.f32 %v2125, 0.7978846
      %v2318 = vmul.f32 %v2126, 0.7978846
      %v2319 = vmul.f32 %v2127, 0.7978846
      %v2320 = vmul.f32 %v2128, 0.7978846
      %v2321 = vmul.f32 %v2129, 0.7978846
      %v2322 = vmul.f32 %v2130, 0.7978846
      %v2323 = vmul.f32 %v2131, 0.7978846
      %v2324 = vmul.f32 %v2132, 0.7978846
      %v2325 = vmul.f32 %v2133, 0.7978846
      %v2326 = vmul.f32 %v2134, 0.7978846
      %v2327 = vmul.f32 %v2135, 0.7978846
      %v2328 = vmul.f32 %v2136, 0.7978846
      %v2329 = vmul.f32 %v2137, 0.7978846
      %v2330 = vmul.f32 %v2138, 0.7978846
      %v2331 = vmul.f32 %v2139, 0.7978846
      %v2332 = vmul.f32 %v2140, 0.7978846
      %v2333 = vmul.f32 %v2141, 0.7978846
      %v2334 = vmul.f32 %v2142, 0.7978846
      %v2335 = vmul.f32 %v2143, 0.7978846
      %v2336 = vmul.f32 %v2144, 0.7978846
      %v2337 = vmul.f32 %v2145, 0.7978846
      %v2338 = vmul.f32 %v2146, 0.7978846
      %v2339 = vmul.f32 %v2147, 0.7978846
      %v2340 = vmul.f32 %v2148, 0.7978846
      %v2341 = vmul.f32 %v2149, 0.7978846
      %v2342 = vmul.f32 %v2150, 0.7978846
      %v2343 = vmul.f32 %v2151, 0.7978846
      %v2344 = vmul.f32 %v2152, 0.7978846
      %v2345 = vmul.f32 %v2153, 0.7978846
      %v2346 = vmul.f32 %v2154, 0.7978846
      %v2347 = vmul.f32 %v2155, 0.7978846
      %v2348 = vmul.f32 %v2156, 0.7978846
      %v2349 = vmul.f32 %v2157, 0.7978846
      %v2350 = vmul.f32 %v2158, 0.7978846
      %v2351 = vmul.f32 %v2159, 0.7978846
      %v2352 = vmul.f32 %v2160, 0.7978846
      %v2353 = vmul.f32 %v2161, 0.7978846
      %v2354 = vmul.f32 %v2162, 0.7978846
      %v2355 = vmul.f32 %v2163, 0.7978846
      %v2356 = vmul.f32 %v2164, 0.7978846
      %v2357 = vmul.f32 %v2165, 0.7978846
      %v2358 = vmul.f32 %v2166, 0.7978846
      %v2359 = vmul.f32 %v2167, 0.7978846
      %v2360 = vmul.f32 %v2168, 0.7978846
      %v2361 = vmul.f32 %v2169, 0.7978846
      %v2362 = vmul.f32 %v2170, 0.7978846
      %v2363 = vmul.f32 %v2171, 0.7978846
      %v2364 = vmul.f32 %v2172, 0.7978846
      %v2365 = vmul.f32 %v2173, 0.7978846
      %v2366 = vmul.f32 %v2174, 0.7978846
      %v2367 = vmul.f32 %v2175, 0.7978846
      %v2368 = vmul.f32 %v2176, 0.7978846
      %v2369 = vmul.f32 %v2177, 0.7978846
      %v2370 = vmul.f32 %v2178, 0.7978846
      %v2371 = vmul.f32 %v2179, 0.7978846
      %v2372 = vmul.f32 %v2180, 0.7978846
      %v2373 = vmul.f32 %v2181, 0.7978846
      %v2374 = vmul.f32 %v2182, 0.7978846
      %v2375 = vmul.f32 %v2183, 0.7978846
      %v2376 = vmul.f32 %v2184, 0.7978846
      %v2377 = vmul.f32 %v2185, 0.7978846
      %v2378 = vmul.f32 %v2186, 0.7978846
      %v2379 = vmul.f32 %v2187, 0.7978846
      %v2380 = vmul.f32 %v2188, 0.7978846
      %v2381 = vmul.f32 %v2189, 0.7978846
      %v2382 = vmul.f32 %v2190, 0.7978846
      %v2383 = vmul.f32 %v2191, 0.7978846
      %v2384 = vmul.f32 %v2192, 0.7978846
      %v2385 = vmul.f32 %v2193, 0.7978846
      %v2386 = vmul.f32 %v2194, 0.7978846
      %v2387 = vmul.f32 %v2195, 0.7978846
      %v2388 = vmul.f32 %v2196, 0.7978846
      %v2389 = vmul.f32 %v2197, 0.7978846
      %v2390 = vmul.f32 %v2198, 0.7978846
      %v2391 = vmul.f32 %v2199, 0.7978846
      %v2392 = vmul.f32 %v2200, 0.7978846
      %v2393 = vmul.f32 %v2201, 0.7978846
      %v2394 = vmul.f32 %v2202, 0.7978846
      %v2395 = vmul.f32 %v2203, 0.7978846
      %v2396 = vmul.f32 %v2204, 0.7978846
      %v2397 = vmul.f32 %v2205, 0.7978846
      %v2398 = vmul.f32 %v2206, 0.7978846
      %v2399 = vmul.f32 %v2207, 0.7978846
      %v2400 = vmul.f32 %v2208, 0.7978846
      %v2401 = vmul.f32 %v2209, 0.7978846
      %v2402 = vmul.f32 %v2210, 0.7978846
      %v2403 = vmul.f32 %v2211, 0.7978846
      %v2404 = vmul.f32 %v2212, 0.7978846
      %v2405 = vmul.f32 %v2213, 0.7978846
      %v2406 = vmul.f32 %v2214, 0.7978846
      %v2407 = vtanh.pop %v2215
      %v2408 = vtanh.pop %v2216
      %v2409 = vtanh.pop %v2217
      %v2410 = vtanh.pop %v2218
      %v2411 = vtanh.pop %v2219
      %v2412 = vtanh.pop %v2220
      %v2413 = vtanh.pop %v2221
      %v2414 = vtanh.pop %v2222
      %v2415 = vtanh.pop %v2223
      %v2416 = vtanh.pop %v2224
      %v2417 = vtanh.pop %v2225
      %v2418 = vtanh.pop %v2226
      %v2419 = vtanh.pop %v2227
      %v2420 = vtanh.pop %v2228
      %v2421 = vtanh.pop %v2229
      %v2422 = vtanh.pop %v2230
      %v2423 = vtanh.pop %v2231
      %v2424 = vtanh.pop %v2232
      %v2425 = vtanh.pop %v2233
      %v2426 = vtanh.pop %v2234
      %v2427 = vtanh.pop %v2235
      %v2428 = vtanh.pop %v2236
      %v2429 = vtanh.pop %v2237
      %v2430 = vtanh.pop %v2238
      %v2431 = vtanh.pop %v2239
      %v2432 = vtanh.pop %v2240
      %v2433 = vtanh.pop %v2241
      %v2434 = vtanh.pop %v2242
      %v2435 = vtanh.pop %v2243
      %v2436 = vtanh.pop %v2244
      %v2437 = vtanh.pop %v2245
      %v2438 = vtanh.pop %v2246
      %v2439 = vtanh.pop %v2247
      %v2440 = vtanh.pop %v2248
      %v2441 = vtanh.pop %v2249
      %v2442 = vtanh.pop %v2250
      %v2443 = vtanh.pop %v2251
      %v2444 = vtanh.pop %v2252
      %v2445 = vtanh.pop %v2253
      %v2446 = vtanh.pop %v2254
      %v2447 = vtanh.pop %v2255
      %v2448 = vtanh.pop %v2256
      %v2449 = vtanh.pop %v2257
      %v2450 = vtanh.pop %v2258
      %v2451 = vtanh.pop %v2259
      %v2452 = vtanh.pop %v2260
      %v2453 = vtanh.pop %v2261
      %v2454 = vtanh.pop %v2262
      %v2455 = vtanh.pop %v2263
      %v2456 = vtanh.pop %v2264
      %v2457 = vtanh.pop %v2265
      %v2458 = vtanh.pop %v2266
      %v2459 = vtanh.pop %v2267
      %v2460 = vtanh.pop %v2268
      %v2461 = vtanh.pop %v2269
      %v2462 = vtanh.pop %v2270
      %v2463 = vtanh.pop %v2271
      %v2464 = vtanh.pop %v2272
      %v2465 = vtanh.pop %v2273
      %v2466 = vtanh.pop %v2274
      %v2467 = vtanh.pop %v2275
      %v2468 = vtanh.pop %v2276
      %v2469 = vtanh.pop %v2277
      %v2470 = vtanh.pop %v2278
      %v2471 = vtanh.pop %v2279
      %v2472 = vtanh.pop %v2280
      %v2473 = vtanh.pop %v2281
      %v2474 = vtanh.pop %v2282
      %v2475 = vtanh.pop %v2283
      %v2476 = vtanh.pop %v2284
      %v2477 = vtanh.pop %v2285
      %v2478 = vtanh.pop %v2286
      %v2479 = vtanh.pop %v2287
      %v2480 = vtanh.pop %v2288
      %v2481 = vtanh.pop %v2289
      %v2482 = vtanh.pop %v2290
      %v2483 = vtanh.pop %v2291
      %v2484 = vtanh.pop %v2292
      %v2485 = vtanh.pop %v2293
      %v2486 = vtanh.pop %v2294
      %v2487 = vtanh.pop %v2295
      %v2488 = vtanh.pop %v2296
      %v2489 = vtanh.pop %v2297
      %v2490 = vtanh.pop %v2298
      %v2491 = vtanh.pop %v2299
      %v2492 = vtanh.pop %v2300
      %v2493 = vtanh.pop %v2301
      %v2494 = vtanh.pop %v2302
      %v2495 = vtanh.pop %v2303
      %v2496 = vtanh.pop %v2304
      %v2497 = vtanh.pop %v2305
      %v2498 = vtanh.pop %v2306
      %v2499 = vtanh.pop %v2307
      %v2500 = vtanh.pop %v2308
      %v2501 = vtanh.pop %v2309
      %v2502 = vtanh.pop %v2310
      %v2503 = vtanh.pop %v2311
      %v2504 = vtanh.pop %v2312
      %v2505 = vtanh.pop %v2313
      %v2506 = vtanh.pop %v2314
      %v2507 = vtanh.pop %v2315
      %v2508 = vtanh.pop %v2316
      %v2509 = vtanh.pop %v2317
      %v2510 = vtanh.pop %v2318
      %v2511 = vtanh.pop %v2319
      %v2512 = vtanh.pop %v2320
      %v2513 = vtanh.pop %v2321
      %v2514 = vtanh.pop %v2322
      %v2515 = vtanh.pop %v2323
      %v2516 = vtanh.pop %v2324
      %v2517 = vtanh.pop %v2325
      %v2518 = vtanh.pop %v2326
      %v2519 = vtanh.pop %v2327
      %v2520 = vtanh.pop %v2328
      %v2521 = vtanh.pop %v2329
      %v2522 = vtanh.pop %v2330
      %v2523 = vtanh.pop %v2331
      %v2524 = vtanh.pop %v2332
      %v2525 = vtanh.pop %v2333
      %v2526 = vtanh.pop %v2334
      %v2527 = vtanh.pop %v2335
      %v2528 = vtanh.pop %v2336
      %v2529 = vtanh.pop %v2337
      %v2530 = vtanh.pop %v2338
      %v2531 = vtanh.pop %v2339
      %v2532 = vtanh.pop %v2340
      %v2533 = vtanh.pop %v2341
      %v2534 = vtanh.pop %v2342
      %v2535 = vtanh.pop %v2343
      %v2536 = vtanh.pop %v2344
      %v2537 = vtanh.pop %v2345
      %v2538 = vtanh.pop %v2346
      %v2539 = vtanh.pop %v2347
      %v2540 = vtanh.pop %v2348
      %v2541 = vtanh.pop %v2349
      %v2542 = vtanh.pop %v2350
      %v2543 = vtanh.pop %v2351
      %v2544 = vtanh.pop %v2352
      %v2545 = vtanh.pop %v2353
      %v2546 = vtanh.pop %v2354
      %v2547 = vtanh.pop %v2355
      %v2548 = vtanh.pop %v2356
      %v2549 = vtanh.pop %v2357
      %v2550 = vtanh.pop %v2358
      %v2551 = vtanh.pop %v2359
      %v2552 = vtanh.pop %v2360
      %v2553 = vtanh.pop %v2361
      %v2554 = vtanh.pop %v2362
      %v2555 = vtanh.pop %v2363
      %v2556 = vtanh.pop %v2364
      %v2557 = vtanh.pop %v2365
      %v2558 = vtanh.pop %v2366
      %v2559 = vtanh.pop %v2367
      %v2560 = vtanh.pop %v2368
      %v2561 = vtanh.pop %v2369
      %v2562 = vtanh.pop %v2370
      %v2563 = vtanh.pop %v2371
      %v2564 = vtanh.pop %v2372
      %v2565 = vtanh.pop %v2373
      %v2566 = vtanh.pop %v2374
      %v2567 = vtanh.pop %v2375
      %v2568 = vtanh.pop %v2376
      %v2569 = vtanh.pop %v2377
      %v2570 = vtanh.pop %v2378
      %v2571 = vtanh.pop %v2379
      %v2572 = vtanh.pop %v2380
      %v2573 = vtanh.pop %v2381
      %v2574 = vtanh.pop %v2382
      %v2575 = vtanh.pop %v2383
      %v2576 = vtanh.pop %v2384
      %v2577 = vtanh.pop %v2385
      %v2578 = vtanh.pop %v2386
      %v2579 = vtanh.pop %v2387
      %v2580 = vtanh.pop %v2388
      %v2581 = vtanh.pop %v2389
      %v2582 = vtanh.pop %v2390
      %v2583 = vtanh.pop %v2391
      %v2584 = vtanh.pop %v2392
      %v2585 = vtanh.pop %v2393
      %v2586 = vtanh.pop %v2394
      %v2587 = vtanh.pop %v2395
      %v2588 = vtanh.pop %v2396
      %v2589 = vtanh.pop %v2397
      %v2590 = vtanh.pop %v2398
      %v2591 = vtanh.pop %v2399
      %v2592 = vtanh.pop %v2400
      %v2593 = vtanh.pop %v2401
      %v2594 = vtanh.pop %v2402
      %v2595 = vtanh.pop %v2403
      %v2596 = vtanh.pop %v2404
      %v2597 = vtanh.pop %v2405
      %v2598 = vtanh.pop %v2406
      %v2599 = vadd.f32 %v2407, 1.0
      %v2600 = vadd.f32 %v2408, 1.0
      %v2601 = vadd.f32 %v2409, 1.0
      %v2602 = vadd.f32 %v2410, 1.0
      %v2603 = vadd.f32 %v2411, 1.0
      %v2604 = vadd.f32 %v2412, 1.0
      %v2605 = vadd.f32 %v2413, 1.0
      %v2606 = vadd.f32 %v2414, 1.0
      %v2607 = vadd.f32 %v2415, 1.0
      %v2608 = vadd.f32 %v2416, 1.0
      %v2609 = vadd.f32 %v2417, 1.0
      %v2610 = vadd.f32 %v2418, 1.0
      %v2611 = vadd.f32 %v2419, 1.0
      %v2612 = vadd.f32 %v2420, 1.0
      %v2613 = vadd.f32 %v2421, 1.0
      %v2614 = vadd.f32 %v2422, 1.0
      %v2615 = vadd.f32 %v2423, 1.0
      %v2616 = vadd.f32 %v2424, 1.0
      %v2617 = vadd.f32 %v2425, 1.0
      %v2618 = vadd.f32 %v2426, 1.0
      %v2619 = vadd.f32 %v2427, 1.0
      %v2620 = vadd.f32 %v2428, 1.0
      %v2621 = vadd.f32 %v2429, 1.0
      %v2622 = vadd.f32 %v2430, 1.0
      %v2623 = vadd.f32 %v2431, 1.0
      %v2624 = vadd.f32 %v2432, 1.0
      %v2625 = vadd.f32 %v2433, 1.0
      %v2626 = vadd.f32 %v2434, 1.0
      %v2627 = vadd.f32 %v2435, 1.0
      %v2628 = vadd.f32 %v2436, 1.0
      %v2629 = vadd.f32 %v2437, 1.0
      %v2630 = vadd.f32 %v2438, 1.0
      %v2631 = vadd.f32 %v2439, 1.0
      %v2632 = vadd.f32 %v2440, 1.0
      %v2633 = vadd.f32 %v2441, 1.0
      %v2634 = vadd.f32 %v2442, 1.0
      %v2635 = vadd.f32 %v2443, 1.0
      %v2636 = vadd.f32 %v2444, 1.0
      %v2637 = vadd.f32 %v2445, 1.0
      %v2638 = vadd.f32 %v2446, 1.0
      %v2639 = vadd.f32 %v2447, 1.0
      %v2640 = vadd.f32 %v2448, 1.0
      %v2641 = vadd.f32 %v2449, 1.0
      %v2642 = vadd.f32 %v2450, 1.0
      %v2643 = vadd.f32 %v2451, 1.0
      %v2644 = vadd.f32 %v2452, 1.0
      %v2645 = vadd.f32 %v2453, 1.0
      %v2646 = vadd.f32 %v2454, 1.0
      %v2647 = vadd.f32 %v2455, 1.0
      %v2648 = vadd.f32 %v2456, 1.0
      %v2649 = vadd.f32 %v2457, 1.0
      %v2650 = vadd.f32 %v2458, 1.0
      %v2651 = vadd.f32 %v2459, 1.0
      %v2652 = vadd.f32 %v2460, 1.0
      %v2653 = vadd.f32 %v2461, 1.0
      %v2654 = vadd.f32 %v2462, 1.0
      %v2655 = vadd.f32 %v2463, 1.0
      %v2656 = vadd.f32 %v2464, 1.0
      %v2657 = vadd.f32 %v2465, 1.0
      %v2658 = vadd.f32 %v2466, 1.0
      %v2659 = vadd.f32 %v2467, 1.0
      %v2660 = vadd.f32 %v2468, 1.0
      %v2661 = vadd.f32 %v2469, 1.0
      %v2662 = vadd.f32 %v2470, 1.0
      %v2663 = vadd.f32 %v2471, 1.0
      %v2664 = vadd.f32 %v2472, 1.0
      %v2665 = vadd.f32 %v2473, 1.0
      %v2666 = vadd.f32 %v2474, 1.0
      %v2667 = vadd.f32 %v2475, 1.0
      %v2668 = vadd.f32 %v2476, 1.0
      %v2669 = vadd.f32 %v2477, 1.0
      %v2670 = vadd.f32 %v2478, 1.0
      %v2671 = vadd.f32 %v2479, 1.0
      %v2672 = vadd.f32 %v2480, 1.0
      %v2673 = vadd.f32 %v2481, 1.0
      %v2674 = vadd.f32 %v2482, 1.0
      %v2675 = vadd.f32 %v2483, 1.0
      %v2676 = vadd.f32 %v2484, 1.0
      %v2677 = vadd.f32 %v2485, 1.0
      %v2678 = vadd.f32 %v2486, 1.0
      %v2679 = vadd.f32 %v2487, 1.0
      %v2680 = vadd.f32 %v2488, 1.0
      %v2681 = vadd.f32 %v2489, 1.0
      %v2682 = vadd.f32 %v2490, 1.0
      %v2683 = vadd.f32 %v2491, 1.0
      %v2684 = vadd.f32 %v2492, 1.0
      %v2685 = vadd.f32 %v2493, 1.0
      %v2686 = vadd.f32 %v2494, 1.0
      %v2687 = vadd.f32 %v2495, 1.0
      %v2688 = vadd.f32 %v2496, 1.0
      %v2689 = vadd.f32 %v2497, 1.0
      %v2690 = vadd.f32 %v2498, 1.0
      %v2691 = vadd.f32 %v2499, 1.0
      %v2692 = vadd.f32 %v2500, 1.0
      %v2693 = vadd.f32 %v2501, 1.0
      %v2694 = vadd.f32 %v2502, 1.0
      %v2695 = vadd.f32 %v2503, 1.0
      %v2696 = vadd.f32 %v2504, 1.0
      %v2697 = vadd.f32 %v2505, 1.0
      %v2698 = vadd.f32 %v2506, 1.0
      %v2699 = vadd.f32 %v2507, 1.0
      %v2700 = vadd.f32 %v2508, 1.0
      %v2701 = vadd.f32 %v2509, 1.0
      %v2702 = vadd.f32 %v2510, 1.0
      %v2703 = vadd.f32 %v2511, 1.0
      %v2704 = vadd.f32 %v2512, 1.0
      %v2705 = vadd.f32 %v2513, 1.0
      %v2706 = vadd.f32 %v2514, 1.0
      %v2707 = vadd.f32 %v2515, 1.0
      %v2708 = vadd.f32 %v2516, 1.0
      %v2709 = vadd.f32 %v2517, 1.0
      %v2710 = vadd.f32 %v2518, 1.0
      %v2711 = vadd.f32 %v2519, 1.0
      %v2712 = vadd.f32 %v2520, 1.0
      %v2713 = vadd.f32 %v2521, 1.0
      %v2714 = vadd.f32 %v2522, 1.0
      %v2715 = vadd.f32 %v2523, 1.0
      %v2716 = vadd.f32 %v2524, 1.0
      %v2717 = vadd.f32 %v2525, 1.0
      %v2718 = vadd.f32 %v2526, 1.0
      %v2719 = vadd.f32 %v2527, 1.0
      %v2720 = vadd.f32 %v2528, 1.0
      %v2721 = vadd.f32 %v2529, 1.0
      %v2722 = vadd.f32 %v2530, 1.0
      %v2723 = vadd.f32 %v2531, 1.0
      %v2724 = vadd.f32 %v2532, 1.0
      %v2725 = vadd.f32 %v2533, 1.0
      %v2726 = vadd.f32 %v2534, 1.0
      %v2727 = vadd.f32 %v2535, 1.0
      %v2728 = vadd.f32 %v2536, 1.0
      %v2729 = vadd.f32 %v2537, 1.0
      %v2730 = vadd.f32 %v2538, 1.0
      %v2731 = vadd.f32 %v2539, 1.0
      %v2732 = vadd.f32 %v2540, 1.0
      %v2733 = vadd.f32 %v2541, 1.0
      %v2734 = vadd.f32 %v2542, 1.0
      %v2735 = vadd.f32 %v2543, 1.0
      %v2736 = vadd.f32 %v2544, 1.0
      %v2737 = vadd.f32 %v2545, 1.0
      %v2738 = vadd.f32 %v2546, 1.0
      %v2739 = vadd.f32 %v2547, 1.0
      %v2740 = vadd.f32 %v2548, 1.0
      %v2741 = vadd.f32 %v2549, 1.0
      %v2742 = vadd.f32 %v2550, 1.0
      %v2743 = vadd.f32 %v2551, 1.0
      %v2744 = vadd.f32 %v2552, 1.0
      %v2745 = vadd.f32 %v2553, 1.0
      %v2746 = vadd.f32 %v2554, 1.0
      %v2747 = vadd.f32 %v2555, 1.0
      %v2748 = vadd.f32 %v2556, 1.0
      %v2749 = vadd.f32 %v2557, 1.0
      %v2750 = vadd.f32 %v2558, 1.0
      %v2751 = vadd.f32 %v2559, 1.0
      %v2752 = vadd.f32 %v2560, 1.0
      %v2753 = vadd.f32 %v2561, 1.0
      %v2754 = vadd.f32 %v2562, 1.0
      %v2755 = vadd.f32 %v2563, 1.0
      %v2756 = vadd.f32 %v2564, 1.0
      %v2757 = vadd.f32 %v2565, 1.0
      %v2758 = vadd.f32 %v2566, 1.0
      %v2759 = vadd.f32 %v2567, 1.0
      %v2760 = vadd.f32 %v2568, 1.0
      %v2761 = vadd.f32 %v2569, 1.0
      %v2762 = vadd.f32 %v2570, 1.0
      %v2763 = vadd.f32 %v2571, 1.0
      %v2764 = vadd.f32 %v2572, 1.0
      %v2765 = vadd.f32 %v2573, 1.0
      %v2766 = vadd.f32 %v2574, 1.0
      %v2767 = vadd.f32 %v2575, 1.0
      %v2768 = vadd.f32 %v2576, 1.0
      %v2769 = vadd.f32 %v2577, 1.0
      %v2770 = vadd.f32 %v2578, 1.0
      %v2771 = vadd.f32 %v2579, 1.0
      %v2772 = vadd.f32 %v2580, 1.0
      %v2773 = vadd.f32 %v2581, 1.0
      %v2774 = vadd.f32 %v2582, 1.0
      %v2775 = vadd.f32 %v2583, 1.0
      %v2776 = vadd.f32 %v2584, 1.0
      %v2777 = vadd.f32 %v2585, 1.0
      %v2778 = vadd.f32 %v2586, 1.0
      %v2779 = vadd.f32 %v2587, 1.0
      %v2780 = vadd.f32 %v2588, 1.0
      %v2781 = vadd.f32 %v2589, 1.0
      %v2782 = vadd.f32 %v2590, 1.0
      %v2783 = vadd.f32 %v2591, 1.0
      %v2784 = vadd.f32 %v2592, 1.0
      %v2785 = vadd.f32 %v2593, 1.0
      %v2786 = vadd.f32 %v2594, 1.0
      %v2787 = vadd.f32 %v2595, 1.0
      %v2788 = vadd.f32 %v2596, 1.0
      %v2789 = vadd.f32 %v2597, 1.0
      %v2790 = vadd.f32 %v2598, 1.0
      %v2791 = vmul.f32 %v2599, 0.5
      %v2792 = vmul.f32 %v2600, 0.5
      %v2793 = vmul.f32 %v2601, 0.5
      %v2794 = vmul.f32 %v2602, 0.5
      %v2795 = vmul.f32 %v2603, 0.5
      %v2796 = vmul.f32 %v2604, 0.5
      %v2797 = vmul.f32 %v2605, 0.5
      %v2798 = vmul.f32 %v2606, 0.5
      %v2799 = vmul.f32 %v2607, 0.5
      %v2800 = vmul.f32 %v2608, 0.5
      %v2801 = vmul.f32 %v2609, 0.5
      %v2802 = vmul.f32 %v2610, 0.5
      %v2803 = vmul.f32 %v2611, 0.5
      %v2804 = vmul.f32 %v2612, 0.5
      %v2805 = vmul.f32 %v2613, 0.5
      %v2806 = vmul.f32 %v2614, 0.5
      %v2807 = vmul.f32 %v2615, 0.5
      %v2808 = vmul.f32 %v2616, 0.5
      %v2809 = vmul.f32 %v2617, 0.5
      %v2810 = vmul.f32 %v2618, 0.5
      %v2811 = vmul.f32 %v2619, 0.5
      %v2812 = vmul.f32 %v2620, 0.5
      %v2813 = vmul.f32 %v2621, 0.5
      %v2814 = vmul.f32 %v2622, 0.5
      %v2815 = vmul.f32 %v2623, 0.5
      %v2816 = vmul.f32 %v2624, 0.5
      %v2817 = vmul.f32 %v2625, 0.5
      %v2818 = vmul.f32 %v2626, 0.5
      %v2819 = vmul.f32 %v2627, 0.5
      %v2820 = vmul.f32 %v2628, 0.5
      %v2821 = vmul.f32 %v2629, 0.5
      %v2822 = vmul.f32 %v2630, 0.5
      %v2823 = vmul.f32 %v2631, 0.5
      %v2824 = vmul.f32 %v2632, 0.5
      %v2825 = vmul.f32 %v2633, 0.5
      %v2826 = vmul.f32 %v2634, 0.5
      %v2827 = vmul.f32 %v2635, 0.5
      %v2828 = vmul.f32 %v2636, 0.5
      %v2829 = vmul.f32 %v2637, 0.5
      %v2830 = vmul.f32 %v2638, 0.5
      %v2831 = vmul.f32 %v2639, 0.5
      %v2832 = vmul.f32 %v2640, 0.5
      %v2833 = vmul.f32 %v2641, 0.5
      %v2834 = vmul.f32 %v2642, 0.5
      %v2835 = vmul.f32 %v2643, 0.5
      %v2836 = vmul.f32 %v2644, 0.5
      %v2837 = vmul.f32 %v2645, 0.5
      %v2838 = vmul.f32 %v2646, 0.5
      %v2839 = vmul.f32 %v2647, 0.5
      %v2840 = vmul.f32 %v2648, 0.5
      %v2841 = vmul.f32 %v2649, 0.5
      %v2842 = vmul.f32 %v2650, 0.5
      %v2843 = vmul.f32 %v2651, 0.5
      %v2844 = vmul.f32 %v2652, 0.5
      %v2845 = vmul.f32 %v2653, 0.5
      %v2846 = vmul.f32 %v2654, 0.5
      %v2847 = vmul.f32 %v2655, 0.5
      %v2848 = vmul.f32 %v2656, 0.5
      %v2849 = vmul.f32 %v2657, 0.5
      %v2850 = vmul.f32 %v2658, 0.5
      %v2851 = vmul.f32 %v2659, 0.5
      %v2852 = vmul.f32 %v2660, 0.5
      %v2853 = vmul.f32 %v2661, 0.5
      %v2854 = vmul.f32 %v2662, 0.5
      %v2855 = vmul.f32 %v2663, 0.5
      %v2856 = vmul.f32 %v2664, 0.5
      %v2857 = vmul.f32 %v2665, 0.5
      %v2858 = vmul.f32 %v2666, 0.5
      %v2859 = vmul.f32 %v2667, 0.5
      %v2860 = vmul.f32 %v2668, 0.5
      %v2861 = vmul.f32 %v2669, 0.5
      %v2862 = vmul.f32 %v2670, 0.5
      %v2863 = vmul.f32 %v2671, 0.5
      %v2864 = vmul.f32 %v2672, 0.5
      %v2865 = vmul.f32 %v2673, 0.5
      %v2866 = vmul.f32 %v2674, 0.5
      %v2867 = vmul.f32 %v2675, 0.5
      %v2868 = vmul.f32 %v2676, 0.5
      %v2869 = vmul.f32 %v2677, 0.5
      %v2870 = vmul.f32 %v2678, 0.5
      %v2871 = vmul.f32 %v2679, 0.5
      %v2872 = vmul.f32 %v2680, 0.5
      %v2873 = vmul.f32 %v2681, 0.5
      %v2874 = vmul.f32 %v2682, 0.5
      %v2875 = vmul.f32 %v2683, 0.5
      %v2876 = vmul.f32 %v2684, 0.5
      %v2877 = vmul.f32 %v2685, 0.5
      %v2878 = vmul.f32 %v2686, 0.5
      %v2879 = vmul.f32 %v2687, 0.5
      %v2880 = vmul.f32 %v2688, 0.5
      %v2881 = vmul.f32 %v2689, 0.5
      %v2882 = vmul.f32 %v2690, 0.5
      %v2883 = vmul.f32 %v2691, 0.5
      %v2884 = vmul.f32 %v2692, 0.5
      %v2885 = vmul.f32 %v2693, 0.5
      %v2886 = vmul.f32 %v2694, 0.5
      %v2887 = vmul.f32 %v2695, 0.5
      %v2888 = vmul.f32 %v2696, 0.5
      %v2889 = vmul.f32 %v2697, 0.5
      %v2890 = vmul.f32 %v2698, 0.5
      %v2891 = vmul.f32 %v2699, 0.5
      %v2892 = vmul.f32 %v2700, 0.5
      %v2893 = vmul.f32 %v2701, 0.5
      %v2894 = vmul.f32 %v2702, 0.5
      %v2895 = vmul.f32 %v2703, 0.5
      %v2896 = vmul.f32 %v2704, 0.5
      %v2897 = vmul.f32 %v2705, 0.5
      %v2898 = vmul.f32 %v2706, 0.5
      %v2899 = vmul.f32 %v2707, 0.5
      %v2900 = vmul.f32 %v2708, 0.5
      %v2901 = vmul.f32 %v2709, 0.5
      %v2902 = vmul.f32 %v2710, 0.5
      %v2903 = vmul.f32 %v2711, 0.5
      %v2904 = vmul.f32 %v2712, 0.5
      %v2905 = vmul.f32 %v2713, 0.5
      %v2906 = vmul.f32 %v2714, 0.5
      %v2907 = vmul.f32 %v2715, 0.5
      %v2908 = vmul.f32 %v2716, 0.5
      %v2909 = vmul.f32 %v2717, 0.5
      %v2910 = vmul.f32 %v2718, 0.5
      %v2911 = vmul.f32 %v2719, 0.5
      %v2912 = vmul.f32 %v2720, 0.5
      %v2913 = vmul.f32 %v2721, 0.5
      %v2914 = vmul.f32 %v2722, 0.5
      %v2915 = vmul.f32 %v2723, 0.5
      %v2916 = vmul.f32 %v2724, 0.5
      %v2917 = vmul.f32 %v2725, 0.5
      %v2918 = vmul.f32 %v2726, 0.5
      %v2919 = vmul.f32 %v2727, 0.5
      %v2920 = vmul.f32 %v2728, 0.5
      %v2921 = vmul.f32 %v2729, 0.5
      %v2922 = vmul.f32 %v2730, 0.5
      %v2923 = vmul.f32 %v2731, 0.5
      %v2924 = vmul.f32 %v2732, 0.5
      %v2925 = vmul.f32 %v2733, 0.5
      %v2926 = vmul.f32 %v2734, 0.5
      %v2927 = vmul.f32 %v2735, 0.5
      %v2928 = vmul.f32 %v2736, 0.5
      %v2929 = vmul.f32 %v2737, 0.5
      %v2930 = vmul.f32 %v2738, 0.5
      %v2931 = vmul.f32 %v2739, 0.5
      %v2932 = vmul.f32 %v2740, 0.5
      %v2933 = vmul.f32 %v2741, 0.5
      %v2934 = vmul.f32 %v2742, 0.5
      %v2935 = vmul.f32 %v2743, 0.5
      %v2936 = vmul.f32 %v2744, 0.5
      %v2937 = vmul.f32 %v2745, 0.5
      %v2938 = vmul.f32 %v2746, 0.5
      %v2939 = vmul.f32 %v2747, 0.5
      %v2940 = vmul.f32 %v2748, 0.5
      %v2941 = vmul.f32 %v2749, 0.5
      %v2942 = vmul.f32 %v2750, 0.5
      %v2943 = vmul.f32 %v2751, 0.5
      %v2944 = vmul.f32 %v2752, 0.5
      %v2945 = vmul.f32 %v2753, 0.5
      %v2946 = vmul.f32 %v2754, 0.5
      %v2947 = vmul.f32 %v2755, 0.5
      %v2948 = vmul.f32 %v2756, 0.5
      %v2949 = vmul.f32 %v2757, 0.5
      %v2950 = vmul.f32 %v2758, 0.5
      %v2951 = vmul.f32 %v2759, 0.5
      %v2952 = vmul.f32 %v2760, 0.5
      %v2953 = vmul.f32 %v2761, 0.5
      %v2954 = vmul.f32 %v2762, 0.5
      %v2955 = vmul.f32 %v2763, 0.5
      %v2956 = vmul.f32 %v2764, 0.5
      %v2957 = vmul.f32 %v2765, 0.5
      %v2958 = vmul.f32 %v2766, 0.5
      %v2959 = vmul.f32 %v2767, 0.5
      %v2960 = vmul.f32 %v2768, 0.5
      %v2961 = vmul.f32 %v2769, 0.5
      %v2962 = vmul.f32 %v2770, 0.5
      %v2963 = vmul.f32 %v2771, 0.5
      %v2964 = vmul.f32 %v2772, 0.5
      %v2965 = vmul.f32 %v2773, 0.5
      %v2966 = vmul.f32 %v2774, 0.5
      %v2967 = vmul.f32 %v2775, 0.5
      %v2968 = vmul.f32 %v2776, 0.5
      %v2969 = vmul.f32 %v2777, 0.5
      %v2970 = vmul.f32 %v2778, 0.5
      %v2971 = vmul.f32 %v2779, 0.5
      %v2972 = vmul.f32 %v2780, 0.5
      %v2973 = vmul.f32 %v2781, 0.5
      %v2974 = vmul.f32 %v2782, 0.5
      %v2975 = vmul.f32 %v2783, 0.5
      %v2976 = vmul.f32 %v2784, 0.5
      %v2977 = vmul.f32 %v2785, 0.5
      %v2978 = vmul.f32 %v2786, 0.5
      %v2979 = vmul.f32 %v2787, 0.5
      %v2980 = vmul.f32 %v2788, 0.5
      %v2981 = vmul.f32 %v2789, 0.5
      %v2982 = vmul.f32 %v2790, 0.5
      %v2983 = vmul.f32 %v840, %v2791
      %v2984 = vmul.f32 %v842, %v2792
      %v2985 = vmul.f32 %v1193, %v2793
      %v2986 = vmul.f32 %v844, %v2794
      %v2987 = vmul.f32 %v846, %v2795
      %v2988 = vmul.f32 %v1196, %v2796
      %v2989 = vmul.f32 %v850, %v2797
      %v2990 = vmul.f32 %v852, %v2798
      %v2991 = vmul.f32 %v1201, %v2799
      %v2992 = vmul.f32 %v854, %v2800
      %v2993 = vmul.f32 %v856, %v2801
      %v2994 = vmul.f32 %v1204, %v2802
      %v2995 = vmul.f32 %v860, %v2803
      %v2996 = vmul.f32 %v862, %v2804
      %v2997 = vmul.f32 %v1209, %v2805
      %v2998 = vmul.f32 %v864, %v2806
      %v2999 = vmul.f32 %v866, %v2807
      %v3000 = vmul.f32 %v1212, %v2808
      %v3001 = vmul.f32 %v870, %v2809
      %v3002 = vmul.f32 %v872, %v2810
      %v3003 = vmul.f32 %v1217, %v2811
      %v3004 = vmul.f32 %v874, %v2812
      %v3005 = vmul.f32 %v876, %v2813
      %v3006 = vmul.f32 %v1220, %v2814
      %v3007 = vmul.f32 %v880, %v2815
      %v3008 = vmul.f32 %v882, %v2816
      %v3009 = vmul.f32 %v1225, %v2817
      %v3010 = vmul.f32 %v884, %v2818
      %v3011 = vmul.f32 %v886, %v2819
      %v3012 = vmul.f32 %v1228, %v2820
      %v3013 = vmul.f32 %v890, %v2821
      %v3014 = vmul.f32 %v892, %v2822
      %v3015 = vmul.f32 %v1233, %v2823
      %v3016 = vmul.f32 %v894, %v2824
      %v3017 = vmul.f32 %v896, %v2825
      %v3018 = vmul.f32 %v1236, %v2826
      %v3019 = vmul.f32 %v900, %v2827
      %v3020 = vmul.f32 %v902, %v2828
      %v3021 = vmul.f32 %v1241, %v2829
      %v3022 = vmul.f32 %v904, %v2830
      %v3023 = vmul.f32 %v906, %v2831
      %v3024 = vmul.f32 %v1244, %v2832
      %v3025 = vmul.f32 %v910, %v2833
      %v3026 = vmul.f32 %v912, %v2834
      %v3027 = vmul.f32 %v1249, %v2835
      %v3028 = vmul.f32 %v914, %v2836
      %v3029 = vmul.f32 %v916, %v2837
      %v3030 = vmul.f32 %v1252, %v2838
      %v3031 = vmul.f32 %v920, %v2839
      %v3032 = vmul.f32 %v922, %v2840
      %v3033 = vmul.f32 %v1257, %v2841
      %v3034 = vmul.f32 %v924, %v2842
      %v3035 = vmul.f32 %v926, %v2843
      %v3036 = vmul.f32 %v1260, %v2844
      %v3037 = vmul.f32 %v930, %v2845
      %v3038 = vmul.f32 %v932, %v2846
      %v3039 = vmul.f32 %v1265, %v2847
      %v3040 = vmul.f32 %v934, %v2848
      %v3041 = vmul.f32 %v936, %v2849
      %v3042 = vmul.f32 %v1268, %v2850
      %v3043 = vmul.f32 %v940, %v2851
      %v3044 = vmul.f32 %v942, %v2852
      %v3045 = vmul.f32 %v1273, %v2853
      %v3046 = vmul.f32 %v944, %v2854
      %v3047 = vmul.f32 %v946, %v2855
      %v3048 = vmul.f32 %v1276, %v2856
      %v3049 = vmul.f32 %v950, %v2857
      %v3050 = vmul.f32 %v952, %v2858
      %v3051 = vmul.f32 %v1281, %v2859
      %v3052 = vmul.f32 %v954, %v2860
      %v3053 = vmul.f32 %v956, %v2861
      %v3054 = vmul.f32 %v1284, %v2862
      %v3055 = vmul.f32 %v960, %v2863
      %v3056 = vmul.f32 %v962, %v2864
      %v3057 = vmul.f32 %v1289, %v2865
      %v3058 = vmul.f32 %v964, %v2866
      %v3059 = vmul.f32 %v966, %v2867
      %v3060 = vmul.f32 %v1292, %v2868
      %v3061 = vmul.f32 %v970, %v2869
      %v3062 = vmul.f32 %v972, %v2870
      %v3063 = vmul.f32 %v1297, %v2871
      %v3064 = vmul.f32 %v974, %v2872
      %v3065 = vmul.f32 %v976, %v2873
      %v3066 = vmul.f32 %v1300, %v2874
      %v3067 = vmul.f32 %v980, %v2875
      %v3068 = vmul.f32 %v982, %v2876
      %v3069 = vmul.f32 %v1305, %v2877
      %v3070 = vmul.f32 %v984, %v2878
      %v3071 = vmul.f32 %v986, %v2879
      %v3072 = vmul.f32 %v1308, %v2880
      %v3073 = vmul.f32 %v990, %v2881
      %v3074 = vmul.f32 %v992, %v2882
      %v3075 = vmul.f32 %v1313, %v2883
      %v3076 = vmul.f32 %v994, %v2884
      %v3077 = vmul.f32 %v996, %v2885
      %v3078 = vmul.f32 %v1316, %v2886
      %v3079 = vmul.f32 %v1000, %v2887
      %v3080 = vmul.f32 %v1002, %v2888
      %v3081 = vmul.f32 %v1321, %v2889
      %v3082 = vmul.f32 %v1004, %v2890
      %v3083 = vmul.f32 %v1006, %v2891
      %v3084 = vmul.f32 %v1324, %v2892
      %v3085 = vmul.f32 %v1010, %v2893
      %v3086 = vmul.f32 %v1012, %v2894
      %v3087 = vmul.f32 %v1329, %v2895
      %v3088 = vmul.f32 %v1014, %v2896
      %v3089 = vmul.f32 %v1016, %v2897
      %v3090 = vmul.f32 %v1332, %v2898
      %v3091 = vmul.f32 %v1020, %v2899
      %v3092 = vmul.f32 %v1022, %v2900
      %v3093 = vmul.f32 %v1337, %v2901
      %v3094 = vmul.f32 %v1024, %v2902
      %v3095 = vmul.f32 %v1026, %v2903
      %v3096 = vmul.f32 %v1340, %v2904
      %v3097 = vmul.f32 %v1030, %v2905
      %v3098 = vmul.f32 %v1032, %v2906
      %v3099 = vmul.f32 %v1345, %v2907
      %v3100 = vmul.f32 %v1034, %v2908
      %v3101 = vmul.f32 %v1036, %v2909
      %v3102 = vmul.f32 %v1348, %v2910
      %v3103 = vmul.f32 %v1040, %v2911
      %v3104 = vmul.f32 %v1042, %v2912
      %v3105 = vmul.f32 %v1353, %v2913
      %v3106 = vmul.f32 %v1044, %v2914
      %v3107 = vmul.f32 %v1046, %v2915
      %v3108 = vmul.f32 %v1356, %v2916
      %v3109 = vmul.f32 %v1050, %v2917
      %v3110 = vmul.f32 %v1052, %v2918
      %v3111 = vmul.f32 %v1361, %v2919
      %v3112 = vmul.f32 %v1054, %v2920
      %v3113 = vmul.f32 %v1056, %v2921
      %v3114 = vmul.f32 %v1364, %v2922
      %v3115 = vmul.f32 %v1060, %v2923
      %v3116 = vmul.f32 %v1062, %v2924
      %v3117 = vmul.f32 %v1369, %v2925
      %v3118 = vmul.f32 %v1064, %v2926
      %v3119 = vmul.f32 %v1066, %v2927
      %v3120 = vmul.f32 %v1372, %v2928
      %v3121 = vmul.f32 %v1070, %v2929
      %v3122 = vmul.f32 %v1072, %v2930
      %v3123 = vmul.f32 %v1377, %v2931
      %v3124 = vmul.f32 %v1074, %v2932
      %v3125 = vmul.f32 %v1076, %v2933
      %v3126 = vmul.f32 %v1380, %v2934
      %v3127 = vmul.f32 %v1080, %v2935
      %v3128 = vmul.f32 %v1082, %v2936
      %v3129 = vmul.f32 %v1385, %v2937
      %v3130 = vmul.f32 %v1084, %v2938
      %v3131 = vmul.f32 %v1086, %v2939
      %v3132 = vmul.f32 %v1388, %v2940
      %v3133 = vmul.f32 %v1090, %v2941
      %v3134 = vmul.f32 %v1092, %v2942
      %v3135 = vmul.f32 %v1393, %v2943
      %v3136 = vmul.f32 %v1094, %v2944
      %v3137 = vmul.f32 %v1096, %v2945
      %v3138 = vmul.f32 %v1396, %v2946
      %v3139 = vmul.f32 %v1100, %v2947
      %v3140 = vmul.f32 %v1102, %v2948
      %v3141 = vmul.f32 %v1401, %v2949
      %v3142 = vmul.f32 %v1104, %v2950
      %v3143 = vmul.f32 %v1106, %v2951
      %v3144 = vmul.f32 %v1404, %v2952
      %v3145 = vmul.f32 %v1110, %v2953
      %v3146 = vmul.f32 %v1112, %v2954
      %v3147 = vmul.f32 %v1409, %v2955
      %v3148 = vmul.f32 %v1114, %v2956
      %v3149 = vmul.f32 %v1116, %v2957
      %v3150 = vmul.f32 %v1412, %v2958
      %v3151 = vmul.f32 %v1120, %v2959
      %v3152 = vmul.f32 %v1122, %v2960
      %v3153 = vmul.f32 %v1417, %v2961
      %v3154 = vmul.f32 %v1124, %v2962
      %v3155 = vmul.f32 %v1126, %v2963
      %v3156 = vmul.f32 %v1420, %v2964
      %v3157 = vmul.f32 %v1130, %v2965
      %v3158 = vmul.f32 %v1132, %v2966
      %v3159 = vmul.f32 %v1425, %v2967
      %v3160 = vmul.f32 %v1134, %v2968
      %v3161 = vmul.f32 %v1136, %v2969
      %v3162 = vmul.f32 %v1428, %v2970
      %v3163 = vmul.f32 %v1140, %v2971
      %v3164 = vmul.f32 %v1142, %v2972
      %v3165 = vmul.f32 %v1433, %v2973
      %v3166 = vmul.f32 %v1144, %v2974
      %v3167 = vmul.f32 %v1146, %v2975
      %v3168 = vmul.f32 %v1436, %v2976
      %v3169 = vmul.f32 %v1150, %v2977
      %v3170 = vmul.f32 %v1152, %v2978
      %v3171 = vmul.f32 %v1441, %v2979
      %v3172 = vmul.f32 %v1154, %v2980
      %v3173 = vmul.f32 %v1156, %v2981
      %v3174 = vmul.f32 %v1444, %v2982
      %v3175 = vld [vmem:[#allocation2] sm:$0xff]
      %v3176 = vld [vmem:[#allocation2 + $0x8] sm:$0xff]
      %v3177 = vld [vmem:[#allocation2 + $0x10] sm:$0xff]
      %v3178 = vld [vmem:[#allocation2 + $0x18] sm:$0xff]
      %v3179 = vld [vmem:[#allocation2 + $0x20] sm:$0xff]
      %v3180 = vld [vmem:[#allocation2 + $0x28] sm:$0xff]
      %v3181 = vld [vmem:[#allocation2 + $0x30] sm:$0xff]
      %v3182 = vld [vmem:[#allocation2 + $0x38] sm:$0xff]
      %v3183 = vld [vmem:[#allocation2 + $0x40] sm:$0xff]
      %v3184 = vld [vmem:[#allocation2 + $0x48] sm:$0xff]
      %v3185 = vld [vmem:[#allocation2 + $0x50] sm:$0xff]
      %v3186 = vld [vmem:[#allocation2 + $0x58] sm:$0xff]
      %v3187 = vld [vmem:[#allocation2 + $0x60] sm:$0xff]
      %v3188 = vld [vmem:[#allocation2 + $0x68] sm:$0xff]
      %v3189 = vld [vmem:[#allocation2 + $0x70] sm:$0xff]
      %v3190 = vld [vmem:[#allocation2 + $0x78] sm:$0xff]
      %v3191 = vld [vmem:[#allocation2 + $0x80] sm:$0xff]
      %v3192 = vld [vmem:[#allocation2 + $0x88] sm:$0xff]
      %v3193 = vld [vmem:[#allocation2 + $0x90] sm:$0xff]
      %v3194 = vld [vmem:[#allocation2 + $0x98] sm:$0xff]
      %v3195 = vld [vmem:[#allocation2 + $0xa0] sm:$0xff]
      %v3196 = vld [vmem:[#allocation2 + $0xa8] sm:$0xff]
      %v3197 = vld [vmem:[#allocation2 + $0xb0] sm:$0xff]
      %v3198 = vld [vmem:[#allocation2 + $0xb8] sm:$0xff]
      %v3199 = vld [vmem:[#allocation2 + $0xc0] sm:$0xff]
      %v3200 = vld [vmem:[#allocation2 + $0xc8] sm:$0xff]
      %v3201 = vld [vmem:[#allocation2 + $0xd0] sm:$0xff]
      %v3202 = vld [vmem:[#allocation2 + $0xd8] sm:$0xff]
      %v3203 = vld [vmem:[#allocation2 + $0xe0] sm:$0xff]
      %v3204 = vld [vmem:[#allocation2 + $0xe8] sm:$0xff]
      %v3205 = vld [vmem:[#allocation2 + $0xf0] sm:$0xff]
      %v3206 = vld [vmem:[#allocation2 + $0xf8] sm:$0xff]
      %v3207 = vld [vmem:[#allocation2 + $0x100] sm:$0xff]
      %v3208 = vld [vmem:[#allocation2 + $0x108] sm:$0xff]
      %v3209 = vld [vmem:[#allocation2 + $0x110] sm:$0xff]
      %v3210 = vld [vmem:[#allocation2 + $0x118] sm:$0xff]
      %v3211 = vld [vmem:[#allocation2 + $0x120] sm:$0xff]
      %v3212 = vld [vmem:[#allocation2 + $0x128] sm:$0xff]
      %v3213 = vld [vmem:[#allocation2 + $0x130] sm:$0xff]
      %v3214 = vld [vmem:[#allocation2 + $0x138] sm:$0xff]
      %v3215 = vld [vmem:[#allocation2 + $0x140] sm:$0xff]
      %v3216 = vld [vmem:[#allocation2 + $0x148] sm:$0xff]
      %v3217 = vld [vmem:[#allocation2 + $0x150] sm:$0xff]
      %v3218 = vld [vmem:[#allocation2 + $0x158] sm:$0xff]
      %v3219 = vld [vmem:[#allocation2 + $0x160] sm:$0xff]
      %v3220 = vld [vmem:[#allocation2 + $0x168] sm:$0xff]
      %v3221 = vld [vmem:[#allocation2 + $0x170] sm:$0xff]
      %v3222 = vld [vmem:[#allocation2 + $0x178] sm:$0xff]
      %v3223 = vld [vmem:[#allocation2 + $0x180] sm:$0xff]
      %v3224 = vld [vmem:[#allocation2 + $0x188] sm:$0xff]
      %v3225 = vld [vmem:[#allocation2 + $0x190] sm:$0xff]
      %v3226 = vld [vmem:[#allocation2 + $0x198] sm:$0xff]
      %v3227 = vld [vmem:[#allocation2 + $0x1a0] sm:$0xff]
      %v3228 = vld [vmem:[#allocation2 + $0x1a8] sm:$0xff]
      %v3229 = vld [vmem:[#allocation2 + $0x1b0] sm:$0xff]
      %v3230 = vld [vmem:[#allocation2 + $0x1b8] sm:$0xff]
      %v3231 = vld [vmem:[#allocation2 + $0x1c0] sm:$0xff]
      %v3232 = vld [vmem:[#allocation2 + $0x1c8] sm:$0xff]
      %v3233 = vld [vmem:[#allocation2 + $0x1d0] sm:$0xff]
      %v3234 = vld [vmem:[#allocation2 + $0x1d8] sm:$0xff]
      %v3235 = vld [vmem:[#allocation2 + $0x1e0] sm:$0xff]
      %v3236 = vld [vmem:[#allocation2 + $0x1e8] sm:$0xff]
      %v3237 = vld [vmem:[#allocation2 + $0x1f0] sm:$0xff]
      %v3238 = vld [vmem:[#allocation2 + $0x1f8] sm:$0xff]
      %v3239 = vpack.c.bf16 %v2986, %v2983
      %v3240 = vpack.c.bf16 %v2987, %v2984
      %v3241 = vpack.c.bf16 %v2988, %v2985
      %v3242 = vpack.c.bf16 %v2992, %v2989
      %v3243 = vpack.c.bf16 %v2993, %v2990
      %v3244 = vpack.c.bf16 %v2994, %v2991
      %v3245 = vpack.c.bf16 %v2998, %v2995
      %v3246 = vpack.c.bf16 %v2999, %v2996
      %v3247 = vpack.c.bf16 %v3000, %v2997
      %v3248 = vpack.c.bf16 %v3004, %v3001
      %v3249 = vpack.c.bf16 %v3005, %v3002
      %v3250 = vpack.c.bf16 %v3006, %v3003
      %v3251 = vpack.c.bf16 %v3010, %v3007
      %v3252 = vpack.c.bf16 %v3011, %v3008
      %v3253 = vpack.c.bf16 %v3012, %v3009
      %v3254 = vpack.c.bf16 %v3016, %v3013
      %v3255 = vpack.c.bf16 %v3017, %v3014
      %v3256 = vpack.c.bf16 %v3018, %v3015
      %v3257 = vpack.c.bf16 %v3022, %v3019
      %v3258 = vpack.c.bf16 %v3023, %v3020
      %v3259 = vpack.c.bf16 %v3024, %v3021
      %v3260 = vpack.c.bf16 %v3028, %v3025
      %v3261 = vpack.c.bf16 %v3029, %v3026
      %v3262 = vpack.c.bf16 %v3030, %v3027
      %v3263 = vpack.c.bf16 %v3034, %v3031
      %v3264 = vpack.c.bf16 %v3035, %v3032
      %v3265 = vpack.c.bf16 %v3036, %v3033
      %v3266 = vpack.c.bf16 %v3040, %v3037
      %v3267 = vpack.c.bf16 %v3041, %v3038
      %v3268 = vpack.c.bf16 %v3042, %v3039
      %v3269 = vpack.c.bf16 %v3046, %v3043
      %v3270 = vpack.c.bf16 %v3047, %v3044
      %v3271 = vpack.c.bf16 %v3048, %v3045
      %v3272 = vpack.c.bf16 %v3052, %v3049
      %v3273 = vpack.c.bf16 %v3053, %v3050
      %v3274 = vpack.c.bf16 %v3054, %v3051
      %v3275 = vpack.c.bf16 %v3058, %v3055
      %v3276 = vpack.c.bf16 %v3059, %v3056
      %v3277 = vpack.c.bf16 %v3060, %v3057
      %v3278 = vpack.c.bf16 %v3064, %v3061
      %v3279 = vpack.c.bf16 %v3065, %v3062
      %v3280 = vpack.c.bf16 %v3066, %v3063
      %v3281 = vpack.c.bf16 %v3070, %v3067
      %v3282 = vpack.c.bf16 %v3071, %v3068
      %v3283 = vpack.c.bf16 %v3072, %v3069
      %v3284 = vpack.c.bf16 %v3076, %v3073
      %v3285 = vpack.c.bf16 %v3077, %v3074
      %v3286 = vpack.c.bf16 %v3078, %v3075
      %v3287 = vpack.c.bf16 %v3082, %v3079
      %v3288 = vpack.c.bf16 %v3083, %v3080
      %v3289 = vpack.c.bf16 %v3084, %v3081
      %v3290 = vpack.c.bf16 %v3088, %v3085
      %v3291 = vpack.c.bf16 %v3089, %v3086
      %v3292 = vpack.c.bf16 %v3090, %v3087
      %v3293 = vpack.c.bf16 %v3094, %v3091
      %v3294 = vpack.c.bf16 %v3095, %v3092
      %v3295 = vpack.c.bf16 %v3096, %v3093
      %v3296 = vpack.c.bf16 %v3100, %v3097
      %v3297 = vpack.c.bf16 %v3101, %v3098
      %v3298 = vpack.c.bf16 %v3102, %v3099
      %v3299 = vpack.c.bf16 %v3106, %v3103
      %v3300 = vpack.c.bf16 %v3107, %v3104
      %v3301 = vpack.c.bf16 %v3108, %v3105
      %v3302 = vpack.c.bf16 %v3112, %v3109
      %v3303 = vpack.c.bf16 %v3113, %v3110
      %v3304 = vpack.c.bf16 %v3114, %v3111
      %v3305 = vpack.c.bf16 %v3118, %v3115
      %v3306 = vpack.c.bf16 %v3119, %v3116
      %v3307 = vpack.c.bf16 %v3120, %v3117
      %v3308 = vpack.c.bf16 %v3124, %v3121
      %v3309 = vpack.c.bf16 %v3125, %v3122
      %v3310 = vpack.c.bf16 %v3126, %v3123
      %v3311 = vpack.c.bf16 %v3130, %v3127
      %v3312 = vpack.c.bf16 %v3131, %v3128
      %v3313 = vpack.c.bf16 %v3132, %v3129
      %v3314 = vpack.c.bf16 %v3136, %v3133
      %v3315 = vpack.c.bf16 %v3137, %v3134
      %v3316 = vpack.c.bf16 %v3138, %v3135
      %v3317 = vpack.c.bf16 %v3142, %v3139
      %v3318 = vpack.c.bf16 %v3143, %v3140
      %v3319 = vpack.c.bf16 %v3144, %v3141
      %v3320 = vpack.c.bf16 %v3148, %v3145
      %v3321 = vpack.c.bf16 %v3149, %v3146
      %v3322 = vpack.c.bf16 %v3150, %v3147
      %v3323 = vpack.c.bf16 %v3154, %v3151
      %v3324 = vpack.c.bf16 %v3155, %v3152
      %v3325 = vpack.c.bf16 %v3156, %v3153
      %v3326 = vpack.c.bf16 %v3160, %v3157
      %v3327 = vpack.c.bf16 %v3161, %v3158
      %v3328 = vpack.c.bf16 %v3162, %v3159
      %v3329 = vpack.c.bf16 %v3166, %v3163
      %v3330 = vpack.c.bf16 %v3167, %v3164
      %v3331 = vpack.c.bf16 %v3168, %v3165
      %v3332 = vpack.c.bf16 %v3172, %v3169
      %v3333 = vpack.c.bf16 %v3173, %v3170
      %v3334 = vpack.c.bf16 %v3174, %v3171
      %v3335 = vld [vmem:[%s295] sm:$0xf]
      %v3336 = vld [vmem:[%s295 + $0x4] sm:$0xf]
      %v3337 = vld [vmem:[%s295 + $0x8] sm:$0xf]
      %v3338 = vld [vmem:[%s295 + $0xc] sm:$0xf]
      %v3339 = vld [vmem:[%s295 + $0x10] sm:$0xf]
      %v3340 = vld [vmem:[%s295 + $0x14] sm:$0xf]
      %v3341 = vld [vmem:[%s295 + $0x18] sm:$0xf]
      %v3342 = vld [vmem:[%s295 + $0x1c] sm:$0xf]
      %v3343 = vld [vmem:[%s295 + $0x20] sm:$0xf]
      %v3344 = vld [vmem:[%s295 + $0x24] sm:$0xf]
      %v3345 = vld [vmem:[%s295 + $0x28] sm:$0xf]
      %v3346 = vld [vmem:[%s295 + $0x2c] sm:$0xf]
      %v3347 = vld [vmem:[%s295 + $0x30] sm:$0xf]
      %v3348 = vld [vmem:[%s295 + $0x34] sm:$0xf]
      %v3349 = vld [vmem:[%s295 + $0x38] sm:$0xf]
      %v3350 = vld [vmem:[%s295 + $0x3c] sm:$0xf]
      %v3351 = vld [vmem:[%s295 + $0x40] sm:$0xf]
      %v3352 = vld [vmem:[%s295 + $0x44] sm:$0xf]
      %v3353 = vld [vmem:[%s295 + $0x48] sm:$0xf]
      %v3354 = vld [vmem:[%s295 + $0x4c] sm:$0xf]
      %v3355 = vld [vmem:[%s295 + $0x50] sm:$0xf]
      %v3356 = vld [vmem:[%s295 + $0x54] sm:$0xf]
      %v3357 = vld [vmem:[%s295 + $0x58] sm:$0xf]
      %v3358 = vld [vmem:[%s295 + $0x5c] sm:$0xf]
      %v3359 = vld [vmem:[%s295 + $0x60] sm:$0xf]
      %v3360 = vld [vmem:[%s295 + $0x64] sm:$0xf]
      %v3361 = vld [vmem:[%s295 + $0x68] sm:$0xf]
      %v3362 = vld [vmem:[%s295 + $0x6c] sm:$0xf]
      %v3363 = vld [vmem:[%s295 + $0x70] sm:$0xf]
      %v3364 = vld [vmem:[%s295 + $0x74] sm:$0xf]
      %v3365 = vld [vmem:[%s295 + $0x78] sm:$0xf]
      %v3366 = vld [vmem:[%s295 + $0x7c] sm:$0xf]
      %v3367 = vld [vmem:[%s295 + $0x80] sm:$0xf]
      %v3368 = vld [vmem:[%s295 + $0x84] sm:$0xf]
      %v3369 = vld [vmem:[%s295 + $0x88] sm:$0xf]
      %v3370 = vld [vmem:[%s295 + $0x8c] sm:$0xf]
      %v3371 = vld [vmem:[%s295 + $0x90] sm:$0xf]
      %v3372 = vld [vmem:[%s295 + $0x94] sm:$0xf]
      %v3373 = vld [vmem:[%s295 + $0x98] sm:$0xf]
      %v3374 = vld [vmem:[%s295 + $0x9c] sm:$0xf]
      %v3375 = vld [vmem:[%s295 + $0xa0] sm:$0xf]
      %v3376 = vld [vmem:[%s295 + $0xa4] sm:$0xf]
      %v3377 = vld [vmem:[%s295 + $0xa8] sm:$0xf]
      %v3378 = vld [vmem:[%s295 + $0xac] sm:$0xf]
      %v3379 = vld [vmem:[%s295 + $0xb0] sm:$0xf]
      %v3380 = vld [vmem:[%s295 + $0xb4] sm:$0xf]
      %v3381 = vld [vmem:[%s295 + $0xb8] sm:$0xf]
      %v3382 = vld [vmem:[%s295 + $0xbc] sm:$0xf]
      %v3431 = vunpack.c.l.b16 %v3335
      %v3432 = vunpack.c.l.b16 %v3336
      %v3433 = vunpack.c.l.b16 %v3337
      %v3434 = vunpack.c.l.b16 %v3338
      %v3435 = vunpack.c.l.b16 %v3339
      %v3436 = vunpack.c.l.b16 %v3340
      %v3437 = vunpack.c.l.b16 %v3341
      %v3438 = vunpack.c.l.b16 %v3342
      %v3439 = vunpack.c.l.b16 %v3343
      %v3440 = vunpack.c.l.b16 %v3344
      %v3441 = vunpack.c.l.b16 %v3345
      %v3442 = vunpack.c.l.b16 %v3346
      %v3443 = vunpack.c.l.b16 %v3347
      %v3444 = vunpack.c.l.b16 %v3348
      %v3445 = vunpack.c.l.b16 %v3349
      %v3446 = vunpack.c.l.b16 %v3350
      %v3447 = vunpack.c.l.b16 %v3351
      %v3448 = vunpack.c.l.b16 %v3352
      %v3449 = vunpack.c.l.b16 %v3353
      %v3450 = vunpack.c.l.b16 %v3354
      %v3451 = vunpack.c.l.b16 %v3355
      %v3452 = vunpack.c.l.b16 %v3356
      %v3453 = vunpack.c.l.b16 %v3357
      %v3454 = vunpack.c.l.b16 %v3358
      %v3455 = vunpack.c.l.b16 %v3359
      %v3456 = vunpack.c.l.b16 %v3360
      %v3457 = vunpack.c.l.b16 %v3361
      %v3458 = vunpack.c.l.b16 %v3362
      %v3459 = vunpack.c.l.b16 %v3363
      %v3460 = vunpack.c.l.b16 %v3364
      %v3461 = vunpack.c.l.b16 %v3365
      %v3462 = vunpack.c.l.b16 %v3366
      %v3463 = vunpack.c.l.b16 %v3367
      %v3464 = vunpack.c.l.b16 %v3368
      %v3465 = vunpack.c.l.b16 %v3369
      %v3466 = vunpack.c.l.b16 %v3370
      %v3467 = vunpack.c.l.b16 %v3371
      %v3468 = vunpack.c.l.b16 %v3372
      %v3469 = vunpack.c.l.b16 %v3373
      %v3470 = vunpack.c.l.b16 %v3374
      %v3471 = vunpack.c.l.b16 %v3375
      %v3472 = vunpack.c.l.b16 %v3376
      %v3473 = vunpack.c.l.b16 %v3377
      %v3474 = vunpack.c.l.b16 %v3378
      %v3475 = vunpack.c.l.b16 %v3379
      %v3476 = vunpack.c.l.b16 %v3380
      %v3477 = vunpack.c.l.b16 %v3381
      %v3478 = vunpack.c.l.b16 %v3382
      %v3479 = vpack.c.b16 %v3432, %v3431
      %v3480 = vpack.c.b16 %v3434, %v3433
      %v3481 = vpack.c.b16 %v3436, %v3435
      %v3482 = vpack.c.b16 %v3438, %v3437
      %v3483 = vpack.c.b16 %v3440, %v3439
      %v3484 = vpack.c.b16 %v3442, %v3441
      %v3485 = vpack.c.b16 %v3444, %v3443
      %v3486 = vpack.c.b16 %v3446, %v3445
      %v3487 = vpack.c.b16 %v3448, %v3447
      %v3488 = vpack.c.b16 %v3450, %v3449
      %v3489 = vpack.c.b16 %v3452, %v3451
      %v3490 = vpack.c.b16 %v3454, %v3453
      %v3491 = vpack.c.b16 %v3456, %v3455
      %v3492 = vpack.c.b16 %v3458, %v3457
      %v3493 = vpack.c.b16 %v3460, %v3459
      %v3494 = vpack.c.b16 %v3462, %v3461
      %v3495 = vpack.c.b16 %v3464, %v3463
      %v3496 = vpack.c.b16 %v3466, %v3465
      %v3497 = vpack.c.b16 %v3468, %v3467
      %v3498 = vpack.c.b16 %v3470, %v3469
      %v3499 = vpack.c.b16 %v3472, %v3471
      %v3500 = vpack.c.b16 %v3474, %v3473
      %v3501 = vpack.c.b16 %v3476, %v3475
      %v3502 = vpack.c.b16 %v3478, %v3477
      %3527 = vmatprep.subr.bf16.mxu0 0
      %3528 = vmatpush1.bf16.msra.mxu0 %v3479
      %3529 = vmatprep.subr.bf16.mxu0 0
      %3530 = vmatpush1.bf16.msra.mxu0 %v3480
      %3531 = vmatprep.subr.bf16.mxu0 0
      %3532 = vmatpush1.bf16.msra.mxu0 %v3481
      %3533 = vmatprep.subr.bf16.mxu0 0
      %3534 = vmatpush1.bf16.msra.mxu0 %v3482
      %3535 = vmatprep.subr.bf16.mxu0 0
      %3536 = vmatpush1.bf16.msra.mxu0 %v3483
      %3537 = vmatprep.subr.bf16.mxu0 0
      %3538 = vmatpush1.bf16.msra.mxu0 %v3484
      %3539 = vmatprep.subr.bf16.mxu0 0
      %3540 = vmatpush1.bf16.msra.mxu0 %v3485
      %3541 = vmatprep.subr.bf16.mxu0 0
      %3542 = vmatpush1.bf16.msra.mxu0 %v3486
      %3543 = vmatprep.subr.bf16.mxu0 0
      %3544 = vmatpush1.bf16.msra.mxu0 %v3487
      %3545 = vmatprep.subr.bf16.mxu0 0
      %3546 = vmatpush1.bf16.msra.mxu0 %v3488
      %3547 = vmatprep.subr.bf16.mxu0 0
      %3548 = vmatpush1.bf16.msra.mxu0 %v3489
      %3549 = vmatprep.subr.bf16.mxu0 0
      %3550 = vmatpush1.bf16.msra.mxu0 %v3490
      %3551 = vmatprep.subr.bf16.mxu0 0
      %3552 = vmatpush1.bf16.msra.mxu0 %v3491
      %3553 = vmatprep.subr.bf16.mxu0 0
      %3554 = vmatpush1.bf16.msra.mxu0 %v3492
      %3555 = vmatprep.subr.bf16.mxu0 0
      %3556 = vmatpush1.bf16.msra.mxu0 %v3493
      %3557 = vmatprep.subr.bf16.mxu0 0
      %3558 = vmatpush1.bf16.msra.mxu0 %v3494
      %3559 = vmatprep.mubr.bf16.mxu0 %v3240
      %3560 = vmatmul.mubr.bf16.gmra.mrb[0].mxu0 %v3239
      %v3561 = vpop.f32.mrb[0].mxu0
      %v3562 = vadd.f32 0.0, %v3561
      %v3563 = vpop.f32.mrb[0].mxu0
      %v3564 = vpop.f32.mrb[0].mxu0
      %v3565 = vadd.f32 0.0, %v3564
      %v3566 = vpop.f32.mrb[0].mxu0
      %3567 = vmatprep.mubr.bf16.mxu0 %v3243
      %3568 = vmatmul.mubr.bf16.gmra.mrb[0].mxu0 %v3242
      %v3569 = vpop.f32.mrb[0].mxu0
      %v3570 = vadd.f32 0.0, %v3569
      %v3571 = vpop.f32.mrb[0].mxu0
      %v3572 = vpop.f32.mrb[0].mxu0
      %v3573 = vadd.f32 0.0, %v3572
      %v3574 = vpop.f32.mrb[0].mxu0
      %3575 = vmatprep.mubr.bf16.mxu0 %v3246
      %3576 = vmatmul.mubr.bf16.gmra.mrb[0].mxu0 %v3245
      %v3577 = vpop.f32.mrb[0].mxu0
      %v3578 = vadd.f32 0.0, %v3577
      %v3579 = vpop.f32.mrb[0].mxu0
      %v3580 = vpop.f32.mrb[0].mxu0
      %v3581 = vadd.f32 0.0, %v3580
      %v3582 = vpop.f32.mrb[0].mxu0
      %3583 = vmatprep.mubr.bf16.mxu0 %v3249
      %3584 = vmatmul.mubr.bf16.gmra.mrb[0].mxu0 %v3248
      %v3585 = vpop.f32.mrb[0].mxu0
      %v3586 = vadd.f32 0.0, %v3585
      %v3587 = vpop.f32.mrb[0].mxu0
      %v3588 = vpop.f32.mrb[0].mxu0
      %v3589 = vadd.f32 0.0, %v3588
      %v3590 = vpop.f32.mrb[0].mxu0
      %3591 = vmatprep.mubr.bf16.mxu0 %v3252
      %3592 = vmatmul.mubr.bf16.gmra.mrb[0].mxu0 %v3251
      %v3593 = vpop.f32.mrb[0].mxu0
      %v3594 = vadd.f32 0.0, %v3593
      %v3595 = vpop.f32.mrb[0].mxu0
      %v3596 = vpop.f32.mrb[0].mxu0
      %v3597 = vadd.f32 0.0, %v3596
      %v3598 = vpop.f32.mrb[0].mxu0
      %3599 = vmatprep.mubr.bf16.mxu0 %v3255
      %3600 = vmatmul.mubr.bf16.gmra.mrb[0].mxu0 %v3254
      %v3601 = vpop.f32.mrb[0].mxu0
      %v3602 = vadd.f32 0.0, %v3601
      %v3603 = vpop.f32.mrb[0].mxu0
      %v3604 = vpop.f32.mrb[0].mxu0
      %v3605 = vadd.f32 0.0, %v3604
      %v3606 = vpop.f32.mrb[0].mxu0
      %3607 = vmatprep.mubr.bf16.mxu0 %v3258
      %3608 = vmatmul.mubr.bf16.gmra.mrb[0].mxu0 %v3257
      %v3609 = vpop.f32.mrb[0].mxu0
      %v3610 = vadd.f32 0.0, %v3609
      %v3611 = vpop.f32.mrb[0].mxu0
      %v3612 = vpop.f32.mrb[0].mxu0
      %v3613 = vadd.f32 0.0, %v3612
      %v3614 = vpop.f32.mrb[0].mxu0
      %3615 = vmatprep.mubr.bf16.mxu0 %v3261
      %3616 = vmatmul.mubr.bf16.gmra.mrb[0].mxu0 %v3260
      %v3617 = vpop.f32.mrb[0].mxu0
      %v3618 = vadd.f32 0.0, %v3617
      %v3619 = vpop.f32.mrb[0].mxu0
      %v3620 = vpop.f32.mrb[0].mxu0
      %v3621 = vadd.f32 0.0, %v3620
      %v3622 = vpop.f32.mrb[0].mxu0
      %3623 = vmatprep.mubr.bf16.mxu0 %v3264
      %3624 = vmatmul.mubr.bf16.gmra.mrb[0].mxu0 %v3263
      %v3625 = vpop.f32.mrb[0].mxu0
      %v3626 = vadd.f32 0.0, %v3625
      %v3627 = vpop.f32.mrb[0].mxu0
      %v3628 = vpop.f32.mrb[0].mxu0
      %v3629 = vadd.f32 0.0, %v3628
      %v3630 = vpop.f32.mrb[0].mxu0
      %3631 = vmatprep.mubr.bf16.mxu0 %v3267
      %3632 = vmatmul.mubr.bf16.gmra.mrb[0].mxu0 %v3266
      %v3633 = vpop.f32.mrb[0].mxu0
      %v3634 = vadd.f32 0.0, %v3633
      %v3635 = vpop.f32.mrb[0].mxu0
      %v3636 = vpop.f32.mrb[0].mxu0
      %v3637 = vadd.f32 0.0, %v3636
      %v3638 = vpop.f32.mrb[0].mxu0
      %3639 = vmatprep.mubr.bf16.mxu0 %v3270
      %3640 = vmatmul.mubr.bf16.gmra.mrb[0].mxu0 %v3269
      %v3641 = vpop.f32.mrb[0].mxu0
      %v3642 = vadd.f32 0.0, %v3641
      %v3643 = vpop.f32.mrb[0].mxu0
      %v3644 = vpop.f32.mrb[0].mxu0
      %v3645 = vadd.f32 0.0, %v3644
      %v3646 = vpop.f32.mrb[0].mxu0
      %3647 = vmatprep.mubr.bf16.mxu0 %v3273
      %3648 = vmatmul.mubr.bf16.gmra.mrb[0].mxu0 %v3272
      %v3649 = vpop.f32.mrb[0].mxu0
      %v3650 = vadd.f32 0.0, %v3649
      %v3651 = vpop.f32.mrb[0].mxu0
      %v3652 = vpop.f32.mrb[0].mxu0
      %v3653 = vadd.f32 0.0, %v3652
      %v3654 = vpop.f32.mrb[0].mxu0
      %3655 = vmatprep.mubr.bf16.mxu0 %v3276
      %3656 = vmatmul.mubr.bf16.gmra.mrb[0].mxu0 %v3275
      %v3657 = vpop.f32.mrb[0].mxu0
      %v3658 = vadd.f32 0.0, %v3657
      %v3659 = vpop.f32.mrb[0].mxu0
      %v3660 = vpop.f32.mrb[0].mxu0
      %v3661 = vadd.f32 0.0, %v3660
      %v3662 = vpop.f32.mrb[0].mxu0
      %3663 = vmatprep.mubr.bf16.mxu0 %v3279
      %3664 = vmatmul.mubr.bf16.gmra.mrb[0].mxu0 %v3278
      %v3665 = vpop.f32.mrb[0].mxu0
      %v3666 = vadd.f32 0.0, %v3665
      %v3667 = vpop.f32.mrb[0].mxu0
      %v3668 = vpop.f32.mrb[0].mxu0
      %v3669 = vadd.f32 0.0, %v3668
      %v3670 = vpop.f32.mrb[0].mxu0
      %3671 = vmatprep.mubr.bf16.mxu0 %v3282
      %3672 = vmatmul.mubr.bf16.gmra.mrb[0].mxu0 %v3281
      %v3673 = vpop.f32.mrb[0].mxu0
      %v3674 = vadd.f32 0.0, %v3673
      %v3675 = vpop.f32.mrb[0].mxu0
      %v3676 = vpop.f32.mrb[0].mxu0
      %v3677 = vadd.f32 0.0, %v3676
      %v3678 = vpop.f32.mrb[0].mxu0
      %3679 = vmatprep.mubr.bf16.mxu0 %v3285
      %3680 = vmatmul.mubr.bf16.gmra.mrb[0].mxu0 %v3284
      %v3681 = vpop.f32.mrb[0].mxu0
      %v3682 = vadd.f32 0.0, %v3681
      %v3683 = vpop.f32.mrb[0].mxu0
      %v3684 = vpop.f32.mrb[0].mxu0
      %v3685 = vadd.f32 0.0, %v3684
      %v3686 = vpop.f32.mrb[0].mxu0
      %3687 = vmatprep.mubr.bf16.mxu0 %v3288
      %3688 = vmatmul.mubr.bf16.gmra.mrb[0].mxu0 %v3287
      %v3689 = vpop.f32.mrb[0].mxu0
      %v3690 = vadd.f32 0.0, %v3689
      %v3691 = vpop.f32.mrb[0].mxu0
      %v3692 = vpop.f32.mrb[0].mxu0
      %v3693 = vadd.f32 0.0, %v3692
      %v3694 = vpop.f32.mrb[0].mxu0
      %3695 = vmatprep.mubr.bf16.mxu0 %v3291
      %3696 = vmatmul.mubr.bf16.gmra.mrb[0].mxu0 %v3290
      %v3697 = vpop.f32.mrb[0].mxu0
      %v3698 = vadd.f32 0.0, %v3697
      %v3699 = vpop.f32.mrb[0].mxu0
      %v3700 = vpop.f32.mrb[0].mxu0
      %v3701 = vadd.f32 0.0, %v3700
      %v3702 = vpop.f32.mrb[0].mxu0
      %3703 = vmatprep.mubr.bf16.mxu0 %v3294
      %3704 = vmatmul.mubr.bf16.gmra.mrb[0].mxu0 %v3293
      %v3705 = vpop.f32.mrb[0].mxu0
      %v3706 = vadd.f32 0.0, %v3705
      %v3707 = vpop.f32.mrb[0].mxu0
      %v3708 = vpop.f32.mrb[0].mxu0
      %v3709 = vadd.f32 0.0, %v3708
      %v3710 = vpop.f32.mrb[0].mxu0
      %3711 = vmatprep.mubr.bf16.mxu0 %v3297
      %3712 = vmatmul.mubr.bf16.gmra.mrb[0].mxu0 %v3296
      %v3713 = vpop.f32.mrb[0].mxu0
      %v3714 = vadd.f32 0.0, %v3713
      %v3715 = vpop.f32.mrb[0].mxu0
      %v3716 = vpop.f32.mrb[0].mxu0
      %v3717 = vadd.f32 0.0, %v3716
      %v3718 = vpop.f32.mrb[0].mxu0
      %3719 = vmatprep.mubr.bf16.mxu0 %v3300
      %3720 = vmatmul.mubr.bf16.gmra.mrb[0].mxu0 %v3299
      %v3721 = vpop.f32.mrb[0].mxu0
      %v3722 = vadd.f32 0.0, %v3721
      %v3723 = vpop.f32.mrb[0].mxu0
      %v3724 = vpop.f32.mrb[0].mxu0
      %v3725 = vadd.f32 0.0, %v3724
      %v3726 = vpop.f32.mrb[0].mxu0
      %3727 = vmatprep.mubr.bf16.mxu0 %v3303
      %3728 = vmatmul.mubr.bf16.gmra.mrb[0].mxu0 %v3302
      %v3729 = vpop.f32.mrb[0].mxu0
      %v3730 = vadd.f32 0.0, %v3729
      %v3731 = vpop.f32.mrb[0].mxu0
      %v3732 = vpop.f32.mrb[0].mxu0
      %v3733 = vadd.f32 0.0, %v3732
      %v3734 = vpop.f32.mrb[0].mxu0
      %3735 = vmatprep.mubr.bf16.mxu0 %v3306
      %3736 = vmatmul.mubr.bf16.gmra.mrb[0].mxu0 %v3305
      %v3737 = vpop.f32.mrb[0].mxu0
      %v3738 = vadd.f32 0.0, %v3737
      %v3739 = vpop.f32.mrb[0].mxu0
      %v3740 = vpop.f32.mrb[0].mxu0
      %v3741 = vadd.f32 0.0, %v3740
      %v3742 = vpop.f32.mrb[0].mxu0
      %3743 = vmatprep.mubr.bf16.mxu0 %v3309
      %3744 = vmatmul.mubr.bf16.gmra.mrb[0].mxu0 %v3308
      %v3745 = vpop.f32.mrb[0].mxu0
      %v3746 = vadd.f32 0.0, %v3745
      %v3747 = vpop.f32.mrb[0].mxu0
      %v3748 = vpop.f32.mrb[0].mxu0
      %v3749 = vadd.f32 0.0, %v3748
      %v3750 = vpop.f32.mrb[0].mxu0
      %3751 = vmatprep.mubr.bf16.mxu0 %v3312
      %3752 = vmatmul.mubr.bf16.gmra.mrb[0].mxu0 %v3311
      %v3753 = vpop.f32.mrb[0].mxu0
      %v3754 = vadd.f32 0.0, %v3753
      %v3755 = vpop.f32.mrb[0].mxu0
      %v3756 = vpop.f32.mrb[0].mxu0
      %v3757 = vadd.f32 0.0, %v3756
      %v3758 = vpop.f32.mrb[0].mxu0
      %3759 = vmatprep.mubr.bf16.mxu0 %v3315
      %3760 = vmatmul.mubr.bf16.gmra.mrb[0].mxu0 %v3314
      %v3761 = vpop.f32.mrb[0].mxu0
      %v3762 = vadd.f32 0.0, %v3761
      %v3763 = vpop.f32.mrb[0].mxu0
      %v3764 = vpop.f32.mrb[0].mxu0
      %v3765 = vadd.f32 0.0, %v3764
      %v3766 = vpop.f32.mrb[0].mxu0
      %3767 = vmatprep.mubr.bf16.mxu0 %v3318
      %3768 = vmatmul.mubr.bf16.gmra.mrb[0].mxu0 %v3317
      %v3769 = vpop.f32.mrb[0].mxu0
      %v3770 = vadd.f32 0.0, %v3769
      %v3771 = vpop.f32.mrb[0].mxu0
      %v3772 = vpop.f32.mrb[0].mxu0
      %v3773 = vadd.f32 0.0, %v3772
      %v3774 = vpop.f32.mrb[0].mxu0
      %3775 = vmatprep.mubr.bf16.mxu0 %v3321
      %3776 = vmatmul.mubr.bf16.gmra.mrb[0].mxu0 %v3320
      %v3777 = vpop.f32.mrb[0].mxu0
      %v3778 = vadd.f32 0.0, %v3777
      %v3779 = vpop.f32.mrb[0].mxu0
      %v3780 = vpop.f32.mrb[0].mxu0
      %v3781 = vadd.f32 0.0, %v3780
      %v3782 = vpop.f32.mrb[0].mxu0
      %3783 = vmatprep.mubr.bf16.mxu0 %v3324
      %3784 = vmatmul.mubr.bf16.gmra.mrb[0].mxu0 %v3323
      %v3785 = vpop.f32.mrb[0].mxu0
      %v3786 = vadd.f32 0.0, %v3785
      %v3787 = vpop.f32.mrb[0].mxu0
      %v3788 = vpop.f32.mrb[0].mxu0
      %v3789 = vadd.f32 0.0, %v3788
      %v3790 = vpop.f32.mrb[0].mxu0
      %3791 = vmatprep.mubr.bf16.mxu0 %v3327
      %3792 = vmatmul.mubr.bf16.gmra.mrb[0].mxu0 %v3326
      %v3793 = vpop.f32.mrb[0].mxu0
      %v3794 = vadd.f32 0.0, %v3793
      %v3795 = vpop.f32.mrb[0].mxu0
      %v3796 = vpop.f32.mrb[0].mxu0
      %v3797 = vadd.f32 0.0, %v3796
      %v3798 = vpop.f32.mrb[0].mxu0
      %3799 = vmatprep.mubr.bf16.mxu0 %v3330
      %3800 = vmatmul.mubr.bf16.gmra.mrb[0].mxu0 %v3329
      %v3801 = vpop.f32.mrb[0].mxu0
      %v3802 = vadd.f32 0.0, %v3801
      %v3803 = vpop.f32.mrb[0].mxu0
      %v3804 = vpop.f32.mrb[0].mxu0
      %v3805 = vadd.f32 0.0, %v3804
      %v3806 = vpop.f32.mrb[0].mxu0
      %3807 = vmatprep.mubr.bf16.mxu0 %v3333
      %3808 = vmatmul.mubr.bf16.gmra.mrb[0].mxu0 %v3332
      %v3809 = vpop.f32.mrb[0].mxu0
      %v3810 = vadd.f32 0.0, %v3809
      %v3811 = vpop.f32.mrb[0].mxu0
      %v3812 = vpop.f32.mrb[0].mxu0
      %v3813 = vadd.f32 0.0, %v3812
      %v3814 = vpop.f32.mrb[0].mxu0
      %3815 = vdwg.mxu0
      %3816 = vmatprep.subr.bf16.mxu0 0
      %3817 = vmatpush1.bf16.msra.mxu0 %v3495
      %3818 = vmatprep.subr.bf16.mxu0 0
      %3819 = vmatpush1.bf16.msra.mxu0 %v3496
      %3820 = vmatprep.subr.bf16.mxu0 0
      %3821 = vmatpush1.bf16.msra.mxu0 %v3497
      %3822 = vmatprep.subr.bf16.mxu0 0
      %3823 = vmatpush1.bf16.msra.mxu0 %v3498
      %3824 = vmatprep.subr.bf16.mxu0 0
      %3825 = vmatpush1.bf16.msra.mxu0 %v3499
      %3826 = vmatprep.subr.bf16.mxu0 0
      %3827 = vmatpush1.bf16.msra.mxu0 %v3500
      %3828 = vmatprep.subr.bf16.mxu0 0
      %3829 = vmatpush1.bf16.msra.mxu0 %v3501
      %3830 = vmatprep.subr.bf16.mxu0 0
      %3831 = vmatpush1.bf16.msra.mxu0 %v3502
      %3832 = vmatprep.subr.bf16.mxu0 0
      %3833 = vmatpush1.bf16.msra.mxu0 0
      %3834 = vmatprep.subr.bf16.mxu0 0
      %3835 = vmatpush1.bf16.msra.mxu0 0
      %3836 = vmatprep.subr.bf16.mxu0 0
      %3837 = vmatpush1.bf16.msra.mxu0 0
      %3838 = vmatprep.subr.bf16.mxu0 0
      %3839 = vmatpush1.bf16.msra.mxu0 0
      %3840 = vmatprep.subr.bf16.mxu0 0
      %3841 = vmatpush1.bf16.msra.mxu0 0
      %3842 = vmatprep.subr.bf16.mxu0 0
      %3843 = vmatpush1.bf16.msra.mxu0 0
      %3844 = vmatprep.subr.bf16.mxu0 0
      %3845 = vmatpush1.bf16.msra.mxu0 0
      %3846 = vmatprep.subr.bf16.mxu0 0
      %3847 = vmatpush1.bf16.msra.mxu0 0
      %3848 = vmatprep.mubr.bf16.mxu0 0
      %3849 = vmatmul.mubr.bf16.gmra.mrb[0].mxu0 %v3241
      %v3850 = vpop.f32.mrb[0].mxu0
      %v3851 = vadd.f32 %v3562, %v3850
      %v3852 = vpop.f32.mrb[0].mxu0
      %v3853 = vpop.f32.mrb[0].mxu0
      %v3854 = vadd.f32 %v3565, %v3853
      %v3855 = vpop.f32.mrb[0].mxu0
      %3856 = vmatprep.mubr.bf16.mxu0 0
      %3857 = vmatmul.mubr.bf16.gmra.mrb[0].mxu0 %v3244
      %v3858 = vpop.f32.mrb[0].mxu0
      %v3859 = vadd.f32 %v3570, %v3858
      %v3860 = vpop.f32.mrb[0].mxu0
      %v3861 = vpop.f32.mrb[0].mxu0
      %v3862 = vadd.f32 %v3573, %v3861
      %v3863 = vpop.f32.mrb[0].mxu0
      %3864 = vmatprep.mubr.bf16.mxu0 0
      %3865 = vmatmul.mubr.bf16.gmra.mrb[0].mxu0 %v3247
      %v3866 = vpop.f32.mrb[0].mxu0
      %v3867 = vadd.f32 %v3578, %v3866
      %v3868 = vpop.f32.mrb[0].mxu0
      %v3869 = vpop.f32.mrb[0].mxu0
      %v3870 = vadd.f32 %v3581, %v3869
      %v3871 = vpop.f32.mrb[0].mxu0
      %3872 = vmatprep.mubr.bf16.mxu0 0
      %3873 = vmatmul.mubr.bf16.gmra.mrb[0].mxu0 %v3250
      %v3874 = vpop.f32.mrb[0].mxu0
      %v3875 = vadd.f32 %v3586, %v3874
      %v3876 = vpop.f32.mrb[0].mxu0
      %v3877 = vpop.f32.mrb[0].mxu0
      %v3878 = vadd.f32 %v3589, %v3877
      %v3879 = vpop.f32.mrb[0].mxu0
      %3880 = vmatprep.mubr.bf16.mxu0 0
      %3881 = vmatmul.mubr.bf16.gmra.mrb[0].mxu0 %v3253
      %v3882 = vpop.f32.mrb[0].mxu0
      %v3883 = vadd.f32 %v3594, %v3882
      %v3884 = vpop.f32.mrb[0].mxu0
      %v3885 = vpop.f32.mrb[0].mxu0
      %v3886 = vadd.f32 %v3597, %v3885
      %v3887 = vpop.f32.mrb[0].mxu0
      %3888 = vmatprep.mubr.bf16.mxu0 0
      %3889 = vmatmul.mubr.bf16.gmra.mrb[0].mxu0 %v3256
      %v3890 = vpop.f32.mrb[0].mxu0
      %v3891 = vadd.f32 %v3602, %v3890
      %v3892 = vpop.f32.mrb[0].mxu0
      %v3893 = vpop.f32.mrb[0].mxu0
      %v3894 = vadd.f32 %v3605, %v3893
      %v3895 = vpop.f32.mrb[0].mxu0
      %3896 = vmatprep.mubr.bf16.mxu0 0
      %3897 = vmatmul.mubr.bf16.gmra.mrb[0].mxu0 %v3259
      %v3898 = vpop.f32.mrb[0].mxu0
      %v3899 = vadd.f32 %v3610, %v3898
      %v3900 = vpop.f32.mrb[0].mxu0
      %v3901 = vpop.f32.mrb[0].mxu0
      %v3902 = vadd.f32 %v3613, %v3901
      %v3903 = vpop.f32.mrb[0].mxu0
      %3904 = vmatprep.mubr.bf16.mxu0 0
      %3905 = vmatmul.mubr.bf16.gmra.mrb[0].mxu0 %v3262
      %v3906 = vpop.f32.mrb[0].mxu0
      %v3907 = vadd.f32 %v3618, %v3906
      %v3908 = vpop.f32.mrb[0].mxu0
      %v3909 = vpop.f32.mrb[0].mxu0
      %v3910 = vadd.f32 %v3621, %v3909
      %v3911 = vpop.f32.mrb[0].mxu0
      %3912 = vmatprep.mubr.bf16.mxu0 0
      %3913 = vmatmul.mubr.bf16.gmra.mrb[0].mxu0 %v3265
      %v3914 = vpop.f32.mrb[0].mxu0
      %v3915 = vadd.f32 %v3626, %v3914
      %v3916 = vpop.f32.mrb[0].mxu0
      %v3917 = vpop.f32.mrb[0].mxu0
      %v3918 = vadd.f32 %v3629, %v3917
      %v3919 = vpop.f32.mrb[0].mxu0
      %3920 = vmatprep.mubr.bf16.mxu0 0
      %3921 = vmatmul.mubr.bf16.gmra.mrb[0].mxu0 %v3268
      %v3922 = vpop.f32.mrb[0].mxu0
      %v3923 = vadd.f32 %v3634, %v3922
      %v3924 = vpop.f32.mrb[0].mxu0
      %v3925 = vpop.f32.mrb[0].mxu0
      %v3926 = vadd.f32 %v3637, %v3925
      %v3927 = vpop.f32.mrb[0].mxu0
      %3928 = vmatprep.mubr.bf16.mxu0 0
      %3929 = vmatmul.mubr.bf16.gmra.mrb[0].mxu0 %v3271
      %v3930 = vpop.f32.mrb[0].mxu0
      %v3931 = vadd.f32 %v3642, %v3930
      %v3932 = vpop.f32.mrb[0].mxu0
      %v3933 = vpop.f32.mrb[0].mxu0
      %v3934 = vadd.f32 %v3645, %v3933
      %v3935 = vpop.f32.mrb[0].mxu0
      %3936 = vmatprep.mubr.bf16.mxu0 0
      %3937 = vmatmul.mubr.bf16.gmra.mrb[0].mxu0 %v3274
      %v3938 = vpop.f32.mrb[0].mxu0
      %v3939 = vadd.f32 %v3650, %v3938
      %v3940 = vpop.f32.mrb[0].mxu0
      %v3941 = vpop.f32.mrb[0].mxu0
      %v3942 = vadd.f32 %v3653, %v3941
      %v3943 = vpop.f32.mrb[0].mxu0
      %3944 = vmatprep.mubr.bf16.mxu0 0
      %3945 = vmatmul.mubr.bf16.gmra.mrb[0].mxu0 %v3277
      %v3946 = vpop.f32.mrb[0].mxu0
      %v3947 = vadd.f32 %v3658, %v3946
      %v3948 = vpop.f32.mrb[0].mxu0
      %v3949 = vpop.f32.mrb[0].mxu0
      %v3950 = vadd.f32 %v3661, %v3949
      %v3951 = vpop.f32.mrb[0].mxu0
      %3952 = vmatprep.mubr.bf16.mxu0 0
      %3953 = vmatmul.mubr.bf16.gmra.mrb[0].mxu0 %v3280
      %v3954 = vpop.f32.mrb[0].mxu0
      %v3955 = vadd.f32 %v3666, %v3954
      %v3956 = vpop.f32.mrb[0].mxu0
      %v3957 = vpop.f32.mrb[0].mxu0
      %v3958 = vadd.f32 %v3669, %v3957
      %v3959 = vpop.f32.mrb[0].mxu0
      %3960 = vmatprep.mubr.bf16.mxu0 0
      %3961 = vmatmul.mubr.bf16.gmra.mrb[0].mxu0 %v3283
      %v3962 = vpop.f32.mrb[0].mxu0
      %v3963 = vadd.f32 %v3674, %v3962
      %v3964 = vpop.f32.mrb[0].mxu0
      %v3965 = vpop.f32.mrb[0].mxu0
      %v3966 = vadd.f32 %v3677, %v3965
      %v3967 = vpop.f32.mrb[0].mxu0
      %3968 = vmatprep.mubr.bf16.mxu0 0
      %3969 = vmatmul.mubr.bf16.gmra.mrb[0].mxu0 %v3286
      %v3970 = vpop.f32.mrb[0].mxu0
      %v3971 = vadd.f32 %v3682, %v3970
      %v3972 = vpop.f32.mrb[0].mxu0
      %v3973 = vpop.f32.mrb[0].mxu0
      %v3974 = vadd.f32 %v3685, %v3973
      %v3975 = vpop.f32.mrb[0].mxu0
      %3976 = vmatprep.mubr.bf16.mxu0 0
      %3977 = vmatmul.mubr.bf16.gmra.mrb[0].mxu0 %v3289
      %v3978 = vpop.f32.mrb[0].mxu0
      %v3979 = vadd.f32 %v3690, %v3978
      %v3980 = vpop.f32.mrb[0].mxu0
      %v3981 = vpop.f32.mrb[0].mxu0
      %v3982 = vadd.f32 %v3693, %v3981
      %v3983 = vpop.f32.mrb[0].mxu0
      %3984 = vmatprep.mubr.bf16.mxu0 0
      %3985 = vmatmul.mubr.bf16.gmra.mrb[0].mxu0 %v3292
      %v3986 = vpop.f32.mrb[0].mxu0
      %v3987 = vadd.f32 %v3698, %v3986
      %v3988 = vpop.f32.mrb[0].mxu0
      %v3989 = vpop.f32.mrb[0].mxu0
      %v3990 = vadd.f32 %v3701, %v3989
      %v3991 = vpop.f32.mrb[0].mxu0
      %3992 = vmatprep.mubr.bf16.mxu0 0
      %3993 = vmatmul.mubr.bf16.gmra.mrb[0].mxu0 %v3295
      %v3994 = vpop.f32.mrb[0].mxu0
      %v3995 = vadd.f32 %v3706, %v3994
      %v3996 = vpop.f32.mrb[0].mxu0
      %v3997 = vpop.f32.mrb[0].mxu0
      %v3998 = vadd.f32 %v3709, %v3997
      %v3999 = vpop.f32.mrb[0].mxu0
      %4000 = vmatprep.mubr.bf16.mxu0 0
      %4001 = vmatmul.mubr.bf16.gmra.mrb[0].mxu0 %v3298
      %v4002 = vpop.f32.mrb[0].mxu0
      %v4003 = vadd.f32 %v3714, %v4002
      %v4004 = vpop.f32.mrb[0].mxu0
      %v4005 = vpop.f32.mrb[0].mxu0
      %v4006 = vadd.f32 %v3717, %v4005
      %v4007 = vpop.f32.mrb[0].mxu0
      %4008 = vmatprep.mubr.bf16.mxu0 0
      %4009 = vmatmul.mubr.bf16.gmra.mrb[0].mxu0 %v3301
      %v4010 = vpop.f32.mrb[0].mxu0
      %v4011 = vadd.f32 %v3722, %v4010
      %v4012 = vpop.f32.mrb[0].mxu0
      %v4013 = vpop.f32.mrb[0].mxu0
      %v4014 = vadd.f32 %v3725, %v4013
      %v4015 = vpop.f32.mrb[0].mxu0
      %4016 = vmatprep.mubr.bf16.mxu0 0
      %4017 = vmatmul.mubr.bf16.gmra.mrb[0].mxu0 %v3304
      %v4018 = vpop.f32.mrb[0].mxu0
      %v4019 = vadd.f32 %v3730, %v4018
      %v4020 = vpop.f32.mrb[0].mxu0
      %v4021 = vpop.f32.mrb[0].mxu0
      %v4022 = vadd.f32 %v3733, %v4021
      %v4023 = vpop.f32.mrb[0].mxu0
      %4024 = vmatprep.mubr.bf16.mxu0 0
      %4025 = vmatmul.mubr.bf16.gmra.mrb[0].mxu0 %v3307
      %v4026 = vpop.f32.mrb[0].mxu0
      %v4027 = vadd.f32 %v3738, %v4026
      %v4028 = vpop.f32.mrb[0].mxu0
      %v4029 = vpop.f32.mrb[0].mxu0
      %v4030 = vadd.f32 %v3741, %v4029
      %v4031 = vpop.f32.mrb[0].mxu0
      %4032 = vmatprep.mubr.bf16.mxu0 0
      %4033 = vmatmul.mubr.bf16.gmra.mrb[0].mxu0 %v3310
      %v4034 = vpop.f32.mrb[0].mxu0
      %v4035 = vadd.f32 %v3746, %v4034
      %v4036 = vpop.f32.mrb[0].mxu0
      %v4037 = vpop.f32.mrb[0].mxu0
      %v4038 = vadd.f32 %v3749, %v4037
      %v4039 = vpop.f32.mrb[0].mxu0
      %4040 = vmatprep.mubr.bf16.mxu0 0
      %4041 = vmatmul.mubr.bf16.gmra.mrb[0].mxu0 %v3313
      %v4042 = vpop.f32.mrb[0].mxu0
      %v4043 = vadd.f32 %v3754, %v4042
      %v4044 = vpop.f32.mrb[0].mxu0
      %v4045 = vpop.f32.mrb[0].mxu0
      %v4046 = vadd.f32 %v3757, %v4045
      %v4047 = vpop.f32.mrb[0].mxu0
      %4048 = vmatprep.mubr.bf16.mxu0 0
      %4049 = vmatmul.mubr.bf16.gmra.mrb[0].mxu0 %v3316
      %v4050 = vpop.f32.mrb[0].mxu0
      %v4051 = vadd.f32 %v3762, %v4050
      %v4052 = vpop.f32.mrb[0].mxu0
      %v4053 = vpop.f32.mrb[0].mxu0
      %v4054 = vadd.f32 %v3765, %v4053
      %v4055 = vpop.f32.mrb[0].mxu0
      %4056 = vmatprep.mubr.bf16.mxu0 0
      %4057 = vmatmul.mubr.bf16.gmra.mrb[0].mxu0 %v3319
      %v4058 = vpop.f32.mrb[0].mxu0
      %v4059 = vadd.f32 %v3770, %v4058
      %v4060 = vpop.f32.mrb[0].mxu0
      %v4061 = vpop.f32.mrb[0].mxu0
      %v4062 = vadd.f32 %v3773, %v4061
      %v4063 = vpop.f32.mrb[0].mxu0
      %4064 = vmatprep.mubr.bf16.mxu0 0
      %4065 = vmatmul.mubr.bf16.gmra.mrb[0].mxu0 %v3322
      %v4066 = vpop.f32.mrb[0].mxu0
      %v4067 = vadd.f32 %v3778, %v4066
      %v4068 = vpop.f32.mrb[0].mxu0
      %v4069 = vpop.f32.mrb[0].mxu0
      %v4070 = vadd.f32 %v3781, %v4069
      %v4071 = vpop.f32.mrb[0].mxu0
      %4072 = vmatprep.mubr.bf16.mxu0 0
      %4073 = vmatmul.mubr.bf16.gmra.mrb[0].mxu0 %v3325
      %v4074 = vpop.f32.mrb[0].mxu0
      %v4075 = vadd.f32 %v3786, %v4074
      %v4076 = vpop.f32.mrb[0].mxu0
      %v4077 = vpop.f32.mrb[0].mxu0
      %v4078 = vadd.f32 %v3789, %v4077
      %v4079 = vpop.f32.mrb[0].mxu0
      %4080 = vmatprep.mubr.bf16.mxu0 0
      %4081 = vmatmul.mubr.bf16.gmra.mrb[0].mxu0 %v3328
      %v4082 = vpop.f32.mrb[0].mxu0
      %v4083 = vadd.f32 %v3794, %v4082
      %v4084 = vpop.f32.mrb[0].mxu0
      %v4085 = vpop.f32.mrb[0].mxu0
      %v4086 = vadd.f32 %v3797, %v4085
      %v4087 = vpop.f32.mrb[0].mxu0
      %4088 = vmatprep.mubr.bf16.mxu0 0
      %4089 = vmatmul.mubr.bf16.gmra.mrb[0].mxu0 %v3331
      %v4090 = vpop.f32.mrb[0].mxu0
      %v4091 = vadd.f32 %v3802, %v4090
      %v4092 = vpop.f32.mrb[0].mxu0
      %v4093 = vpop.f32.mrb[0].mxu0
      %v4094 = vadd.f32 %v3805, %v4093
      %v4095 = vpop.f32.mrb[0].mxu0
      %4096 = vmatprep.mubr.bf16.mxu0 0
      %4097 = vmatmul.mubr.bf16.gmra.mrb[0].mxu0 %v3334
      %v4098 = vpop.f32.mrb[0].mxu0
      %v4099 = vadd.f32 %v3810, %v4098
      %v4100 = vpop.f32.mrb[0].mxu0
      %v4101 = vpop.f32.mrb[0].mxu0
      %v4102 = vadd.f32 %v3813, %v4101
      %v4103 = vpop.f32.mrb[0].mxu0
      %4104 = vdwg.mxu0
      %v4105 = vadd.f32 %v3175, %v3851
      %v4106 = vadd.f32 %v3176, %v3854
      %v4107 = vadd.f32 %v3177, %v3859
      %v4108 = vadd.f32 %v3178, %v3862
      %v4109 = vadd.f32 %v3179, %v3867
      %v4110 = vadd.f32 %v3180, %v3870
      %v4111 = vadd.f32 %v3181, %v3875
      %v4112 = vadd.f32 %v3182, %v3878
      %v4113 = vadd.f32 %v3183, %v3883
      %v4114 = vadd.f32 %v3184, %v3886
      %v4115 = vadd.f32 %v3185, %v3891
      %v4116 = vadd.f32 %v3186, %v3894
      %v4117 = vadd.f32 %v3187, %v3899
      %v4118 = vadd.f32 %v3188, %v3902
      %v4119 = vadd.f32 %v3189, %v3907
      %v4120 = vadd.f32 %v3190, %v3910
      %v4121 = vadd.f32 %v3191, %v3915
      %v4122 = vadd.f32 %v3192, %v3918
      %v4123 = vadd.f32 %v3193, %v3923
      %v4124 = vadd.f32 %v3194, %v3926
      %v4125 = vadd.f32 %v3195, %v3931
      %v4126 = vadd.f32 %v3196, %v3934
      %v4127 = vadd.f32 %v3197, %v3939
      %v4128 = vadd.f32 %v3198, %v3942
      %v4129 = vadd.f32 %v3199, %v3947
      %v4130 = vadd.f32 %v3200, %v3950
      %v4131 = vadd.f32 %v3201, %v3955
      %v4132 = vadd.f32 %v3202, %v3958
      %v4133 = vadd.f32 %v3203, %v3963
      %v4134 = vadd.f32 %v3204, %v3966
      %v4135 = vadd.f32 %v3205, %v3971
      %v4136 = vadd.f32 %v3206, %v3974
      %v4137 = vadd.f32 %v3207, %v3979
      %v4138 = vadd.f32 %v3208, %v3982
      %v4139 = vadd.f32 %v3209, %v3987
      %v4140 = vadd.f32 %v3210, %v3990
      %v4141 = vadd.f32 %v3211, %v3995
      %v4142 = vadd.f32 %v3212, %v3998
      %v4143 = vadd.f32 %v3213, %v4003
      %v4144 = vadd.f32 %v3214, %v4006
      %v4145 = vadd.f32 %v3215, %v4011
      %v4146 = vadd.f32 %v3216, %v4014
      %v4147 = vadd.f32 %v3217, %v4019
      %v4148 = vadd.f32 %v3218, %v4022
      %v4149 = vadd.f32 %v3219, %v4027
      %v4150 = vadd.f32 %v3220, %v4030
      %v4151 = vadd.f32 %v3221, %v4035
      %v4152 = vadd.f32 %v3222, %v4038
      %v4153 = vadd.f32 %v3223, %v4043
      %v4154 = vadd.f32 %v3224, %v4046
      %v4155 = vadd.f32 %v3225, %v4051
      %v4156 = vadd.f32 %v3226, %v4054
      %v4157 = vadd.f32 %v3227, %v4059
      %v4158 = vadd.f32 %v3228, %v4062
      %v4159 = vadd.f32 %v3229, %v4067
      %v4160 = vadd.f32 %v3230, %v4070
      %v4161 = vadd.f32 %v3231, %v4075
      %v4162 = vadd.f32 %v3232, %v4078
      %v4163 = vadd.f32 %v3233, %v4083
      %v4164 = vadd.f32 %v3234, %v4086
      %v4165 = vadd.f32 %v3235, %v4091
      %v4166 = vadd.f32 %v3236, %v4094
      %v4167 = vadd.f32 %v3237, %v4099
      %v4168 = vadd.f32 %v3238, %v4102
      %4169 = vst [vmem:[#allocation2] sm:$0xff] %v4105
      %4170 = vst [vmem:[#allocation2 + $0x8] sm:$0xff] %v4106
      %4171 = vst [vmem:[#allocation2 + $0x10] sm:$0xff] %v4107
      %4172 = vst [vmem:[#allocation2 + $0x18] sm:$0xff] %v4108
      %4173 = vst [vmem:[#allocation2 + $0x20] sm:$0xff] %v4109
      %4174 = vst [vmem:[#allocation2 + $0x28] sm:$0xff] %v4110
      %4175 = vst [vmem:[#allocation2 + $0x30] sm:$0xff] %v4111
      %4176 = vst [vmem:[#allocation2 + $0x38] sm:$0xff] %v4112
      %4177 = vst [vmem:[#allocation2 + $0x40] sm:$0xff] %v4113
      %4178 = vst [vmem:[#allocation2 + $0x48] sm:$0xff] %v4114
      %4179 = vst [vmem:[#allocation2 + $0x50] sm:$0xff] %v4115
      %4180 = vst [vmem:[#allocation2 + $0x58] sm:$0xff] %v4116
      %4181 = vst [vmem:[#allocation2 + $0x60] sm:$0xff] %v4117
      %4182 = vst [vmem:[#allocation2 + $0x68] sm:$0xff] %v4118
      %4183 = vst [vmem:[#allocation2 + $0x70] sm:$0xff] %v4119
      %4184 = vst [vmem:[#allocation2 + $0x78] sm:$0xff] %v4120
      %4185 = vst [vmem:[#allocation2 + $0x80] sm:$0xff] %v4121
      %4186 = vst [vmem:[#allocation2 + $0x88] sm:$0xff] %v4122
      %4187 = vst [vmem:[#allocation2 + $0x90] sm:$0xff] %v4123
      %4188 = vst [vmem:[#allocation2 + $0x98] sm:$0xff] %v4124
      %4189 = vst [vmem:[#allocation2 + $0xa0] sm:$0xff] %v4125
      %4190 = vst [vmem:[#allocation2 + $0xa8] sm:$0xff] %v4126
      %4191 = vst [vmem:[#allocation2 + $0xb0] sm:$0xff] %v4127
      %4192 = vst [vmem:[#allocation2 + $0xb8] sm:$0xff] %v4128
      %4193 = vst [vmem:[#allocation2 + $0xc0] sm:$0xff] %v4129
      %4194 = vst [vmem:[#allocation2 + $0xc8] sm:$0xff] %v4130
      %4195 = vst [vmem:[#allocation2 + $0xd0] sm:$0xff] %v4131
      %4196 = vst [vmem:[#allocation2 + $0xd8] sm:$0xff] %v4132
      %4197 = vst [vmem:[#allocation2 + $0xe0] sm:$0xff] %v4133
      %4198 = vst [vmem:[#allocation2 + $0xe8] sm:$0xff] %v4134
      %4199 = vst [vmem:[#allocation2 + $0xf0] sm:$0xff] %v4135
      %4200 = vst [vmem:[#allocation2 + $0xf8] sm:$0xff] %v4136
      %4201 = vst [vmem:[#allocation2 + $0x100] sm:$0xff] %v4137
      %4202 = vst [vmem:[#allocation2 + $0x108] sm:$0xff] %v4138
      %4203 = vst [vmem:[#allocation2 + $0x110] sm:$0xff] %v4139
      %4204 = vst [vmem:[#allocation2 + $0x118] sm:$0xff] %v4140
      %4205 = vst [vmem:[#allocation2 + $0x120] sm:$0xff] %v4141
      %4206 = vst [vmem:[#allocation2 + $0x128] sm:$0xff] %v4142
      %4207 = vst [vmem:[#allocation2 + $0x130] sm:$0xff] %v4143
      %4208 = vst [vmem:[#allocation2 + $0x138] sm:$0xff] %v4144
      %4209 = vst [vmem:[#allocation2 + $0x140] sm:$0xff] %v4145
      %4210 = vst [vmem:[#allocation2 + $0x148] sm:$0xff] %v4146
      %4211 = vst [vmem:[#allocation2 + $0x150] sm:$0xff] %v4147
      %4212 = vst [vmem:[#allocation2 + $0x158] sm:$0xff] %v4148
      %4213 = vst [vmem:[#allocation2 + $0x160] sm:$0xff] %v4149
      %4214 = vst [vmem:[#allocation2 + $0x168] sm:$0xff] %v4150
      %4215 = vst [vmem:[#allocation2 + $0x170] sm:$0xff] %v4151
      %4216 = vst [vmem:[#allocation2 + $0x178] sm:$0xff] %v4152
      %4217 = vst [vmem:[#allocation2 + $0x180] sm:$0xff] %v4153
      %4218 = vst [vmem:[#allocation2 + $0x188] sm:$0xff] %v4154
      %4219 = vst [vmem:[#allocation2 + $0x190] sm:$0xff] %v4155
      %4220 = vst [vmem:[#allocation2 + $0x198] sm:$0xff] %v4156
      %4221 = vst [vmem:[#allocation2 + $0x1a0] sm:$0xff] %v4157
      %4222 = vst [vmem:[#allocation2 + $0x1a8] sm:$0xff] %v4158
      %4223 = vst [vmem:[#allocation2 + $0x1b0] sm:$0xff] %v4159
      %4224 = vst [vmem:[#allocation2 + $0x1b8] sm:$0xff] %v4160
      %4225 = vst [vmem:[#allocation2 + $0x1c0] sm:$0xff] %v4161
      %4226 = vst [vmem:[#allocation2 + $0x1c8] sm:$0xff] %v4162
      %4227 = vst [vmem:[#allocation2 + $0x1d0] sm:$0xff] %v4163
      %4228 = vst [vmem:[#allocation2 + $0x1d8] sm:$0xff] %v4164
      %4229 = vst [vmem:[#allocation2 + $0x1e0] sm:$0xff] %v4165
      %4230 = vst [vmem:[#allocation2 + $0x1e8] sm:$0xff] %v4166
      %4231 = vst [vmem:[#allocation2 + $0x1f0] sm:$0xff] %v4167
      %4232 = vst [vmem:[#allocation2 + $0x1f8] sm:$0xff] %v4168
      // Predicated region
      $region45: #{mlp_forward.1} parent=39 // pred_check
        %p4233 = pneg %p304
      $region46: #{mlp_forward.1} parent=39 // pred_check_branch
        %4235 = sbr.rel (%p4233) target = $region48
      $region47: #{mlp_forward.1} parent=39 // pred_region
        %v4236 = vld [vmem:[#allocation2] sm:$0xff]
        %v4237 = vld [vmem:[#allocation2 + $0x8] sm:$0xff]
        %v4238 = vld [vmem:[#allocation2 + $0x10] sm:$0xff]
        %v4239 = vld [vmem:[#allocation2 + $0x18] sm:$0xff]
        %v4240 = vld [vmem:[#allocation2 + $0x20] sm:$0xff]
        %v4241 = vld [vmem:[#allocation2 + $0x28] sm:$0xff]
        %v4242 = vld [vmem:[#allocation2 + $0x30] sm:$0xff]
        %v4243 = vld [vmem:[#allocation2 + $0x38] sm:$0xff]
        %v4244 = vld [vmem:[#allocation2 + $0x40] sm:$0xff]
        %v4245 = vld [vmem:[#allocation2 + $0x48] sm:$0xff]
        %v4246 = vld [vmem:[#allocation2 + $0x50] sm:$0xff]
        %v4247 = vld [vmem:[#allocation2 + $0x58] sm:$0xff]
        %v4248 = vld [vmem:[#allocation2 + $0x60] sm:$0xff]
        %v4249 = vld [vmem:[#allocation2 + $0x68] sm:$0xff]
        %v4250 = vld [vmem:[#allocation2 + $0x70] sm:$0xff]
        %v4251 = vld [vmem:[#allocation2 + $0x78] sm:$0xff]
        %v4252 = vld [vmem:[#allocation2 + $0x80] sm:$0xff]
        %v4253 = vld [vmem:[#allocation2 + $0x88] sm:$0xff]
        %v4254 = vld [vmem:[#allocation2 + $0x90] sm:$0xff]
        %v4255 = vld [vmem:[#allocation2 + $0x98] sm:$0xff]
        %v4256 = vld [vmem:[#allocation2 + $0xa0] sm:$0xff]
        %v4257 = vld [vmem:[#allocation2 + $0xa8] sm:$0xff]
        %v4258 = vld [vmem:[#allocation2 + $0xb0] sm:$0xff]
        %v4259 = vld [vmem:[#allocation2 + $0xb8] sm:$0xff]
        %v4260 = vld [vmem:[#allocation2 + $0xc0] sm:$0xff]
        %v4261 = vld [vmem:[#allocation2 + $0xc8] sm:$0xff]
        %v4262 = vld [vmem:[#allocation2 + $0xd0] sm:$0xff]
        %v4263 = vld [vmem:[#allocation2 + $0xd8] sm:$0xff]
        %v4264 = vld [vmem:[#allocation2 + $0xe0] sm:$0xff]
        %v4265 = vld [vmem:[#allocation2 + $0xe8] sm:$0xff]
        %v4266 = vld [vmem:[#allocation2 + $0xf0] sm:$0xff]
        %v4267 = vld [vmem:[#allocation2 + $0xf8] sm:$0xff]
        %v4268 = vld [vmem:[#allocation2 + $0x100] sm:$0xff]
        %v4269 = vld [vmem:[#allocation2 + $0x108] sm:$0xff]
        %v4270 = vld [vmem:[#allocation2 + $0x110] sm:$0xff]
        %v4271 = vld [vmem:[#allocation2 + $0x118] sm:$0xff]
        %v4272 = vld [vmem:[#allocation2 + $0x120] sm:$0xff]
        %v4273 = vld [vmem:[#allocation2 + $0x128] sm:$0xff]
        %v4274 = vld [vmem:[#allocation2 + $0x130] sm:$0xff]
        %v4275 = vld [vmem:[#allocation2 + $0x138] sm:$0xff]
        %v4276 = vld [vmem:[#allocation2 + $0x140] sm:$0xff]
        %v4277 = vld [vmem:[#allocation2 + $0x148] sm:$0xff]
        %v4278 = vld [vmem:[#allocation2 + $0x150] sm:$0xff]
        %v4279 = vld [vmem:[#allocation2 + $0x158] sm:$0xff]
        %v4280 = vld [vmem:[#allocation2 + $0x160] sm:$0xff]
        %v4281 = vld [vmem:[#allocation2 + $0x168] sm:$0xff]
        %v4282 = vld [vmem:[#allocation2 + $0x170] sm:$0xff]
        %v4283 = vld [vmem:[#allocation2 + $0x178] sm:$0xff]
        %v4284 = vld [vmem:[#allocation2 + $0x180] sm:$0xff]
        %v4285 = vld [vmem:[#allocation2 + $0x188] sm:$0xff]
        %v4286 = vld [vmem:[#allocation2 + $0x190] sm:$0xff]
        %v4287 = vld [vmem:[#allocation2 + $0x198] sm:$0xff]
        %v4288 = vld [vmem:[#allocation2 + $0x1a0] sm:$0xff]
        %v4289 = vld [vmem:[#allocation2 + $0x1a8] sm:$0xff]
        %v4290 = vld [vmem:[#allocation2 + $0x1b0] sm:$0xff]
        %v4291 = vld [vmem:[#allocation2 + $0x1b8] sm:$0xff]
        %v4292 = vld [vmem:[#allocation2 + $0x1c0] sm:$0xff]
        %v4293 = vld [vmem:[#allocation2 + $0x1c8] sm:$0xff]
        %v4294 = vld [vmem:[#allocation2 + $0x1d0] sm:$0xff]
        %v4295 = vld [vmem:[#allocation2 + $0x1d8] sm:$0xff]
        %v4296 = vld [vmem:[#allocation2 + $0x1e0] sm:$0xff]
        %v4297 = vld [vmem:[#allocation2 + $0x1e8] sm:$0xff]
        %v4298 = vld [vmem:[#allocation2 + $0x1f0] sm:$0xff]
        %v4299 = vld [vmem:[#allocation2 + $0x1f8] sm:$0xff]
        %v4300 = vld [vmem:[%s4] sm:$0x1]
        %v4302 = vlaneseq
        %v4303 = vshrl.u32 %v4302, 7
        %v4304 = vsub.s32 0, %v4303
        %v4305 = vrot.slane %v4300, %v4304
        %v4307 = vadd.f32 %v4236, %v4305
        %v4308 = vadd.f32 %v4237, %v4305
        %v4309 = vadd.f32 %v4238, %v4305
        %v4310 = vadd.f32 %v4239, %v4305
        %v4311 = vadd.f32 %v4240, %v4305
        %v4312 = vadd.f32 %v4241, %v4305
        %v4313 = vadd.f32 %v4242, %v4305
        %v4314 = vadd.f32 %v4243, %v4305
        %v4315 = vadd.f32 %v4244, %v4305
        %v4316 = vadd.f32 %v4245, %v4305
        %v4317 = vadd.f32 %v4246, %v4305
        %v4318 = vadd.f32 %v4247, %v4305
        %v4319 = vadd.f32 %v4248, %v4305
        %v4320 = vadd.f32 %v4249, %v4305
        %v4321 = vadd.f32 %v4250, %v4305
        %v4322 = vadd.f32 %v4251, %v4305
        %v4323 = vadd.f32 %v4252, %v4305
        %v4324 = vadd.f32 %v4253, %v4305
        %v4325 = vadd.f32 %v4254, %v4305
        %v4326 = vadd.f32 %v4255, %v4305
        %v4327 = vadd.f32 %v4256, %v4305
        %v4328 = vadd.f32 %v4257, %v4305
        %v4329 = vadd.f32 %v4258, %v4305
        %v4330 = vadd.f32 %v4259, %v4305
        %v4331 = vadd.f32 %v4260, %v4305
        %v4332 = vadd.f32 %v4261, %v4305
        %v4333 = vadd.f32 %v4262, %v4305
        %v4334 = vadd.f32 %v4263, %v4305
        %v4335 = vadd.f32 %v4264, %v4305
        %v4336 = vadd.f32 %v4265, %v4305
        %v4337 = vadd.f32 %v4266, %v4305
        %v4338 = vadd.f32 %v4267, %v4305
        %v4339 = vadd.f32 %v4268, %v4305
        %v4340 = vadd.f32 %v4269, %v4305
        %v4341 = vadd.f32 %v4270, %v4305
        %v4342 = vadd.f32 %v4271, %v4305
        %v4343 = vadd.f32 %v4272, %v4305
        %v4344 = vadd.f32 %v4273, %v4305
        %v4345 = vadd.f32 %v4274, %v4305
        %v4346 = vadd.f32 %v4275, %v4305
        %v4347 = vadd.f32 %v4276, %v4305
        %v4348 = vadd.f32 %v4277, %v4305
        %v4349 = vadd.f32 %v4278, %v4305
        %v4350 = vadd.f32 %v4279, %v4305
        %v4351 = vadd.f32 %v4280, %v4305
        %v4352 = vadd.f32 %v4281, %v4305
        %v4353 = vadd.f32 %v4282, %v4305
        %v4354 = vadd.f32 %v4283, %v4305
        %v4355 = vadd.f32 %v4284, %v4305
        %v4356 = vadd.f32 %v4285, %v4305
        %v4357 = vadd.f32 %v4286, %v4305
        %v4358 = vadd.f32 %v4287, %v4305
        %v4359 = vadd.f32 %v4288, %v4305
        %v4360 = vadd.f32 %v4289, %v4305
        %v4361 = vadd.f32 %v4290, %v4305
        %v4362 = vadd.f32 %v4291, %v4305
        %v4363 = vadd.f32 %v4292, %v4305
        %v4364 = vadd.f32 %v4293, %v4305
        %v4365 = vadd.f32 %v4294, %v4305
        %v4366 = vadd.f32 %v4295, %v4305
        %v4367 = vadd.f32 %v4296, %v4305
        %v4368 = vadd.f32 %v4297, %v4305
        %v4369 = vadd.f32 %v4298, %v4305
        %v4370 = vadd.f32 %v4299, %v4305
        %4371 = vst [vmem:[%s301] sm:$0xff] %v4307
        %4372 = vst [vmem:[%s301 + $0x8] sm:$0xff] %v4308
        %4373 = vst [vmem:[%s301 + $0x10] sm:$0xff] %v4309
        %4374 = vst [vmem:[%s301 + $0x18] sm:$0xff] %v4310
        %4375 = vst [vmem:[%s301 + $0x20] sm:$0xff] %v4311
        %4376 = vst [vmem:[%s301 + $0x28] sm:$0xff] %v4312
        %4377 = vst [vmem:[%s301 + $0x30] sm:$0xff] %v4313
        %4378 = vst [vmem:[%s301 + $0x38] sm:$0xff] %v4314
        %4379 = vst [vmem:[%s301 + $0x40] sm:$0xff] %v4315
        %4380 = vst [vmem:[%s301 + $0x48] sm:$0xff] %v4316
        %4381 = vst [vmem:[%s301 + $0x50] sm:$0xff] %v4317
        %4382 = vst [vmem:[%s301 + $0x58] sm:$0xff] %v4318
        %4383 = vst [vmem:[%s301 + $0x60] sm:$0xff] %v4319
        %4384 = vst [vmem:[%s301 + $0x68] sm:$0xff] %v4320
        %4385 = vst [vmem:[%s301 + $0x70] sm:$0xff] %v4321
        %4386 = vst [vmem:[%s301 + $0x78] sm:$0xff] %v4322
        %4387 = vst [vmem:[%s301 + $0x80] sm:$0xff] %v4323
        %4388 = vst [vmem:[%s301 + $0x88] sm:$0xff] %v4324
        %4389 = vst [vmem:[%s301 + $0x90] sm:$0xff] %v4325
        %4390 = vst [vmem:[%s301 + $0x98] sm:$0xff] %v4326
        %4391 = vst [vmem:[%s301 + $0xa0] sm:$0xff] %v4327
        %4392 = vst [vmem:[%s301 + $0xa8] sm:$0xff] %v4328
        %4393 = vst [vmem:[%s301 + $0xb0] sm:$0xff] %v4329
        %4394 = vst [vmem:[%s301 + $0xb8] sm:$0xff] %v4330
        %4395 = vst [vmem:[%s301 + $0xc0] sm:$0xff] %v4331
        %4396 = vst [vmem:[%s301 + $0xc8] sm:$0xff] %v4332
        %4397 = vst [vmem:[%s301 + $0xd0] sm:$0xff] %v4333
        %4398 = vst [vmem:[%s301 + $0xd8] sm:$0xff] %v4334
        %4399 = vst [vmem:[%s301 + $0xe0] sm:$0xff] %v4335
        %4400 = vst [vmem:[%s301 + $0xe8] sm:$0xff] %v4336
        %4401 = vst [vmem:[%s301 + $0xf0] sm:$0xff] %v4337
        %4402 = vst [vmem:[%s301 + $0xf8] sm:$0xff] %v4338
        %4403 = vst [vmem:[%s301 + $0x100] sm:$0xff] %v4339
        %4404 = vst [vmem:[%s301 + $0x108] sm:$0xff] %v4340
        %4405 = vst [vmem:[%s301 + $0x110] sm:$0xff] %v4341
        %4406 = vst [vmem:[%s301 + $0x118] sm:$0xff] %v4342
        %4407 = vst [vmem:[%s301 + $0x120] sm:$0xff] %v4343
        %4408 = vst [vmem:[%s301 + $0x128] sm:$0xff] %v4344
        %4409 = vst [vmem:[%s301 + $0x130] sm:$0xff] %v4345
        %4410 = vst [vmem:[%s301 + $0x138] sm:$0xff] %v4346
        %4411 = vst [vmem:[%s301 + $0x140] sm:$0xff] %v4347
        %4412 = vst [vmem:[%s301 + $0x148] sm:$0xff] %v4348
        %4413 = vst [vmem:[%s301 + $0x150] sm:$0xff] %v4349
        %4414 = vst [vmem:[%s301 + $0x158] sm:$0xff] %v4350
        %4415 = vst [vmem:[%s301 + $0x160] sm:$0xff] %v4351
        %4416 = vst [vmem:[%s301 + $0x168] sm:$0xff] %v4352
        %4417 = vst [vmem:[%s301 + $0x170] sm:$0xff] %v4353
        %4418 = vst [vmem:[%s301 + $0x178] sm:$0xff] %v4354
        %4419 = vst [vmem:[%s301 + $0x180] sm:$0xff] %v4355
        %4420 = vst [vmem:[%s301 + $0x188] sm:$0xff] %v4356
        %4421 = vst [vmem:[%s301 + $0x190] sm:$0xff] %v4357
        %4422 = vst [vmem:[%s301 + $0x198] sm:$0xff] %v4358
        %4423 = vst [vmem:[%s301 + $0x1a0] sm:$0xff] %v4359
        %4424 = vst [vmem:[%s301 + $0x1a8] sm:$0xff] %v4360
        %4425 = vst [vmem:[%s301 + $0x1b0] sm:$0xff] %v4361
        %4426 = vst [vmem:[%s301 + $0x1b8] sm:$0xff] %v4362
        %4427 = vst [vmem:[%s301 + $0x1c0] sm:$0xff] %v4363
        %4428 = vst [vmem:[%s301 + $0x1c8] sm:$0xff] %v4364
        %4429 = vst [vmem:[%s301 + $0x1d0] sm:$0xff] %v4365
        %4430 = vst [vmem:[%s301 + $0x1d8] sm:$0xff] %v4366
        %4431 = vst [vmem:[%s301 + $0x1e0] sm:$0xff] %v4367
        %4432 = vst [vmem:[%s301 + $0x1e8] sm:$0xff] %v4368
        %4433 = vst [vmem:[%s301 + $0x1f0] sm:$0xff] %v4369
        %4434 = vst [vmem:[%s301 + $0x1f8] sm:$0xff] %v4370
      $region48: #{mlp_forward.1} parent=39 // pred_fallthru
        _
      %s4435 = smul.u32 64, %s20
      %p4436 = scmp.lt.s32.totalorder %s4435, 255
      %s4437 = scalar_select %p4436, %s4435, 255
      %s4438 = smul.addr %s4437, 8
      %s4439 = scalar_lea.vmem %s5, %s4438
      // Predicated region
      $region49: #{mlp_forward.1} parent=39 // pred_check
        %p4440 = pneg %p171
      $region50: #{mlp_forward.1} parent=39 // pred_check_branch
        %4442 = sbr.rel (%p4440) target = $region52
      $region51: #{mlp_forward.1} parent=39 // pred_region
        %s4443 = smul.u32 64, %s20
      $region52: #{mlp_forward.1} parent=39 // pred_fallthru
        _
    $region40: #{mlp_forward.1} parent=5 // pred_fallthru
      _
    %p4444 = scmp.le.s32.totalorder 2, %s11
    // Predicated region
    $region53: #{mlp_forward.1} parent=5 // pred_check
      %p4445 = pneg %p4444
    $region54: #{mlp_forward.1} parent=5 // pred_check_branch
      %4447 = sbr.rel (%p4445) target = $region56
    $region55: #{mlp_forward.1} parent=5 // pred_region
      %s4448 = ssub.s32 %s11, 2
      // Predicated region
      $region57: #{mlp_forward.1} parent=55 // pred_check
        %p4449 = pneg %p177
      $region58: #{mlp_forward.1} parent=55 // pred_check_branch
        %4451 = sbr.rel (%p4449) target = $region60
      $region59: #{mlp_forward.1} parent=55 // pred_region
        %s4452 = smul.u32 64, %s22
        %p4453 = scmp.lt.s32.totalorder %s4452, 255
        %s4454 = scalar_select %p4453, %s4452, 255
        %s4455 = smul.addr %s4454, 8
        %s4456 = scalar_lea.vmem %s5, %s4455
      $region60: #{mlp_forward.1} parent=55 // pred_fallthru
        _
    $region56: #{mlp_forward.1} parent=5 // pred_fallthru
      _
  $region6: #{mlp_forward.1} parent=0 // loop_footer
    %s15 = sadd.s32 1, %s11
  $region7: #{mlp_forward.1} parent=0 // loop_footer_branch
    %10 = sbr.rel target = $region3
  $region8: #{mlp_forward.1} parent=0 // loop_exit
    _

</llo_original>
